<compile_context>
chip_gen: v6e
topology: v6e:2x2x1
jax: 0.10.0
libtpu: 0.0.40
codegen_flags: <defaults>
</compile_context>

<pallas_src>
import functools

import jax
import jax.numpy as jnp
from jax import lax
from jax.experimental import pallas as pl
from jax.experimental.pallas import tpu as pltpu


def _round_up(x, m):
    return (x + m - 1) // m * m


# ----------------------------------------------------------------------------
# MXU precision selection: HIGH (3-pass bf16x3) is bit-exact for a 0/1 selector
# against an f32 table.  Probe once that the Mosaic dot lowering accepts HIGH
# *and* that it preserves f32 bits; otherwise fall back to HIGHEST (6-pass),
# which is also exact, just slower.  (DEFAULT would be a lossy single bf16 pass
# and would break the gather exactness — never used here.)
# ----------------------------------------------------------------------------
_DOT_PRECISION = None


def _pick_dot_precision():
    global _DOT_PRECISION
    if _DOT_PRECISION is not None:
        return _DOT_PRECISION

    def probe_kernel(a_ref, b_ref, o_ref):
        o_ref[...] = jnp.dot(a_ref[...], b_ref[...],
                             preferred_element_type=jnp.float32,
                             precision=lax.Precision.HIGH)

    try:
        sel = jnp.eye(128, dtype=jnp.float32)[:8]                 # one-hot rows
        tab = jnp.full((128, 128), 1.0 + 2.0 ** -20, jnp.float32)  # not bf16-exact
        res = pl.pallas_call(
            probe_kernel,
            out_shape=jax.ShapeDtypeStruct((8, 128), jnp.float32),
        )(sel, tab)
        exact = bool(jnp.all(res == tab[:8]))
        _DOT_PRECISION = lax.Precision.HIGH if exact else lax.Precision.HIGHEST
    except Exception:
        _DOT_PRECISION = lax.Precision.HIGHEST
    return _DOT_PRECISION


# ----------------------------------------------------------------------------
# Kernel: six accumulated one-hot matmuls (gathers) + sum, written lane-dense.
# ----------------------------------------------------------------------------
def _spatial_kernel(idx_ref, tlx_ref, tly_ref, brx_ref, bry_ref, w_ref, h_ref,
                    out_ref, *, precision):
    # idx_ref : (T, 6) int32, columns = [tlx, tly, brx, bry, w, h] (pre-clamped)
    # corner tables: (V, D/2) f32 ; width/height tables: (V, D) f32
    # out_ref : (T, D) f32
    idx = idx_ref[...]
    T = idx.shape[0]
    V = w_ref.shape[0]

    iota = lax.broadcasted_iota(jnp.int32, (T, V), 1)   # one iota, reused 6x

    def onehot(k):
        # Exact 0/1 selector (f32: the table is f32, so a bf16 selector would
        # just be re-promoted before the dot).
        return (idx[:, k:k + 1] == iota).astype(jnp.float32)

    def gdot(sel, tab_ref):
        return jnp.dot(sel, tab_ref[...],
                       preferred_element_type=jnp.float32,
                       precision=precision)

    # Accumulated per-table dots: live selector stays at (T, V); corner tables
    # are contracted at their natural D/2 width (no zero-padded columns).
    lo = gdot(onehot(0), tlx_ref) + gdot(onehot(1), tly_ref)   # (T, D/2)
    hi = gdot(onehot(2), brx_ref) + gdot(onehot(3), bry_ref)   # (T, D/2)
    wh = gdot(onehot(4), w_ref) + gdot(onehot(5), h_ref)       # (T, D)

    out_ref[...] = (jnp.concatenate([lo, hi], axis=-1) + wh).astype(out_ref.dtype)


# ----------------------------------------------------------------------------
# Plain-XLA reference / small-problem fallback (identical math).
# ----------------------------------------------------------------------------
def _reference(coords, tlx, brx, tly, bry, w_emb, h_emb):
    c = coords.astype(jnp.int32)
    tlx_f = jnp.take(tlx, c[:, :, 0], axis=0)
    tly_f = jnp.take(tly, c[:, :, 1], axis=0)
    brx_f = jnp.take(brx, c[:, :, 2], axis=0)
    bry_f = jnp.take(bry, c[:, :, 3], axis=0)
    w_f = jnp.take(w_emb, c[:, :, 2] - c[:, :, 0], axis=0)
    h_f = jnp.take(h_emb, c[:, :, 3] - c[:, :, 1], axis=0)
    return (jnp.concatenate([tlx_f, brx_f], axis=-1)
            + jnp.concatenate([tly_f, bry_f], axis=-1) + w_f + h_f)


# ----------------------------------------------------------------------------
# Wrapper
# ----------------------------------------------------------------------------
def spatial_module(coords, tlx, brx, tly, bry, w_emb, h_emb, *,
                   force_pallas=False, token_tile=512):
    """coords: (B, S, 4) int — (x0, y0, x1, y1).  Corner tables (V, D/2),
    width/height tables (V, D).  Returns (B, S, D) f32 layout features with the
    same semantics as the PyTorch SpatialModule.forward."""
    B, S, _ = coords.shape
    V, D = w_emb.shape
    Dh = tlx.shape[1]
    assert D == 2 * Dh and h_emb.shape == (V, D)
    N = B * S

    # Tiny problems: the kernel is pure fixed overhead — use the XLA gather.
    if not force_pallas and N * D * 4 < (256 << 10):
        return _reference(coords, tlx, brx, tly, bry, w_emb, h_emb).astype(jnp.float32)

    # --- index streams (incl. width/height) computed & clamped in the wrapper
    c = coords.reshape(N, 4).astype(jnp.int32)
    idx = jnp.stack([c[:, 0], c[:, 1], c[:, 2], c[:, 3],
                     c[:, 2] - c[:, 0], c[:, 3] - c[:, 1]], axis=1)   # (N, 6)
    idx = jnp.clip(idx, 0, V - 1)           # jnp.take-style clamping (no zero rows)

    # --- token tiling: big tiles (<=512), but >=2 grid steps whenever possible
    #     so both v7x TensorCores get work.
    tile = int(min(token_tile, _round_up(max(pl.cdiv(N, 2), 8), 8)))
    N_pad = _round_up(N, tile)
    if N_pad != N:
        idx = jnp.pad(idx, ((0, N_pad - N), (0, 0)))

    # Tables are passed as-is (no per-call packing / HBM rebuild) and live whole
    # in VMEM as grid-invariant, single-buffered operands.
    tables = [jnp.asarray(t, jnp.float32)
              for t in (tlx, tly, brx, bry, w_emb, h_emb)]
    table_bytes = sum(int(t.size) * 4 for t in tables)

    # --- VMEM budget: resident tables (one copy) + streamed blocks + temporaries
    working = 2 * tile * 6 * 4 + 2 * tile * D * 4 + 10 * tile * V * 4
    try:
        cap = int(pltpu.get_tpu_info().vmem_capacity_bytes)
    except Exception:
        cap = 64 << 20                                  # v7x per-TC floor
    vmem_limit = int(min(cap - (4 << 20),
                         max(32 << 20, table_bytes + working + (4 << 20))))

    # Real cost: six gathers + adds and the bytes actually touched (not the
    # inflated one-hot-matmul FLOPs).
    cost = pl.CostEstimate(
        flops=6 * N * D,
        transcendentals=0,
        bytes_accessed=int(idx.size) * 4 + table_bytes + N_pad * D * 4,
    )

    table_spec = pl.BlockSpec(memory_space=pltpu.MemorySpace.VMEM)

    out = pl.pallas_call(
        functools.partial(_spatial_kernel, precision=_pick_dot_precision()),
        out_shape=jax.ShapeDtypeStruct((N_pad, D), jnp.float32),
        grid=(N_pad // tile,),
        in_specs=[pl.BlockSpec((tile, 6), lambda i: (i, 0))] + [table_spec] * 6,
        out_specs=pl.BlockSpec((tile, D), lambda i: (i, 0)),
        compiler_params=pltpu.CompilerParams(
            dimension_semantics=("parallel",),
            vmem_limit_bytes=vmem_limit,
        ),
        cost_estimate=cost,
    )(idx, *tables)

    return out[:N].reshape(B, S, D)


if __name__ == "__main__":
    # config: d_model=32, max_2d_position_embeddings=128
    B, S, D, V = 2, 8, 32, 128
    Dh = D // 2

    key = jax.random.PRNGKey(0)
    k = jax.random.split(key, 8)

    tlx = jax.random.normal(k[0], (V, Dh), jnp.float32) * 0.02
    brx = jax.random.normal(k[1], (V, Dh), jnp.float32) * 0.02
    tly = jax.random.normal(k[2], (V, Dh), jnp.float32) * 0.02
    bry = jax.random.normal(k[3], (V, Dh), jnp.float32) * 0.02
    w_emb = jax.random.normal(k[4], (V, D), jnp.float32) * 0.02
    h_emb = jax.random.normal(k[5], (V, D), jnp.float32) * 0.02

    # coordinates: (x0, y0, x1, y1) with x1 >= x0, y1 >= y0, all within [0, V)
    tl = jax.random.randint(k[6], (B, S, 2), 0, V // 2, dtype=jnp.int32)
    wh = jax.random.randint(k[7], (B, S, 2), 0, V // 2, dtype=jnp.int32)
    coords = jnp.concatenate([tl, tl + wh], axis=-1)          # (B, S, 4)

    # force_pallas=True so the demo exercises the kernel (the auto path would
    # route this tiny problem to the XLA gather fallback).
    out = spatial_module(coords, tlx, brx, tly, bry, w_emb, h_emb,
                         force_pallas=True)
    out = jax.block_until_ready(out)

    ref = _reference(coords, tlx, brx, tly, bry, w_emb, h_emb)
    assert out.shape == (B, S, D)
    assert jnp.allclose(out, ref, atol=1e-5, rtol=1e-5), "mismatch vs reference"

    print("KERNEL_OK")
</pallas_src>

<mosaic_0001>
module attributes {stable_mosaic.version = 11 : i64} {
  func.func @_spatial_kernel(%arg0: i32, %arg1: memref<8x6xi32, #tpu.memory_space<vmem>>, %arg2: memref<128x16xf32, #tpu.memory_space<vmem>>, %arg3: memref<128x16xf32, #tpu.memory_space<vmem>>, %arg4: memref<128x16xf32, #tpu.memory_space<vmem>>, %arg5: memref<128x16xf32, #tpu.memory_space<vmem>>, %arg6: memref<128x32xf32, #tpu.memory_space<vmem>>, %arg7: memref<128x32xf32, #tpu.memory_space<vmem>>, %arg8: memref<8x32xf32, #tpu.memory_space<vmem>>) attributes {dimension_semantics = [#tpu.dimension_semantics<parallel>], iteration_bounds = array<i64: 2>, scalar_prefetch = 0 : i64, scratch_operands = 0 : i64, tpu.core_type = #tpu.core_type<tc>, window_params = [{transform_indices = @transform_0, window_bounds = array<i64: 8, 6>}, {pipeline_mode = #tpu.pipeline_mode<synchronous>, transform_indices = @transform_1, window_bounds = array<i64: 128, 16>}, {pipeline_mode = #tpu.pipeline_mode<synchronous>, transform_indices = @transform_2, window_bounds = array<i64: 128, 16>}, {pipeline_mode = #tpu.pipeline_mode<synchronous>, transform_indices = @transform_3, window_bounds = array<i64: 128, 16>}, {pipeline_mode = #tpu.pipeline_mode<synchronous>, transform_indices = @transform_4, window_bounds = array<i64: 128, 16>}, {pipeline_mode = #tpu.pipeline_mode<synchronous>, transform_indices = @transform_5, window_bounds = array<i64: 128, 32>}, {pipeline_mode = #tpu.pipeline_mode<synchronous>, transform_indices = @transform_6, window_bounds = array<i64: 128, 32>}, {transform_indices = @transform_7, window_bounds = array<i64: 8, 32>}]} {
    %c0 = arith.constant 0 : index
    %c0_0 = arith.constant 0 : index
    %0 = vector.load %arg1[%c0, %c0_0] : memref<8x6xi32, #tpu.memory_space<vmem>>, vector<8x6xi32>
    %1 = tpu.iota {dimensions = array<i32: 1>} : vector<8x128xi32>
    %2 = vector.extract_strided_slice %0 {offsets = [0, 0], sizes = [8, 1], strides = [1, 1]} : vector<8x6xi32> to vector<8x1xi32>
    %3 = vector.broadcast %2 : vector<8x1xi32> to vector<8x128xi32>
    %4 = arith.cmpi eq, %3, %1 : vector<8x128xi32>
    %5 = arith.extui %4 : vector<8x128xi1> to vector<8x128xi32>
    %6 = arith.sitofp %5 : vector<8x128xi32> to vector<8x128xf32>
    %c0_1 = arith.constant 0 : index
    %c0_2 = arith.constant 0 : index
    %7 = vector.load %arg2[%c0_1, %c0_2] : memref<128x16xf32, #tpu.memory_space<vmem>>, vector<128x16xf32>
    %cst = arith.constant dense<0.000000e+00> : vector<8x16xf32>
    %8 = tpu.matmul %6, %7, %cst {dimension_numbers = #tpu.dot_dimension_numbers<[1], [0], [0], [1], [0, 0, 1, 1], [], []>, precision = #tpu.contract_precision<fp32>} : vector<8x128xf32>, vector<128x16xf32>, vector<8x16xf32> -> vector<8x16xf32>
    %9 = vector.extract_strided_slice %0 {offsets = [0, 1], sizes = [8, 1], strides = [1, 1]} : vector<8x6xi32> to vector<8x1xi32>
    %10 = vector.broadcast %9 : vector<8x1xi32> to vector<8x128xi32>
    %11 = arith.cmpi eq, %10, %1 : vector<8x128xi32>
    %12 = arith.extui %11 : vector<8x128xi1> to vector<8x128xi32>
    %13 = arith.sitofp %12 : vector<8x128xi32> to vector<8x128xf32>
    %c0_3 = arith.constant 0 : index
    %c0_4 = arith.constant 0 : index
    %14 = vector.load %arg3[%c0_3, %c0_4] : memref<128x16xf32, #tpu.memory_space<vmem>>, vector<128x16xf32>
    %cst_5 = arith.constant dense<0.000000e+00> : vector<8x16xf32>
    %15 = tpu.matmul %13, %14, %cst_5 {dimension_numbers = #tpu.dot_dimension_numbers<[1], [0], [0], [1], [0, 0, 1, 1], [], []>, precision = #tpu.contract_precision<fp32>} : vector<8x128xf32>, vector<128x16xf32>, vector<8x16xf32> -> vector<8x16xf32>
    %16 = arith.addf %8, %15 : vector<8x16xf32>
    %17 = vector.extract_strided_slice %0 {offsets = [0, 2], sizes = [8, 1], strides = [1, 1]} : vector<8x6xi32> to vector<8x1xi32>
    %18 = vector.broadcast %17 : vector<8x1xi32> to vector<8x128xi32>
    %19 = arith.cmpi eq, %18, %1 : vector<8x128xi32>
    %20 = arith.extui %19 : vector<8x128xi1> to vector<8x128xi32>
    %21 = arith.sitofp %20 : vector<8x128xi32> to vector<8x128xf32>
    %c0_6 = arith.constant 0 : index
    %c0_7 = arith.constant 0 : index
    %22 = vector.load %arg4[%c0_6, %c0_7] : memref<128x16xf32, #tpu.memory_space<vmem>>, vector<128x16xf32>
    %cst_8 = arith.constant dense<0.000000e+00> : vector<8x16xf32>
    %23 = tpu.matmul %21, %22, %cst_8 {dimension_numbers = #tpu.dot_dimension_numbers<[1], [0], [0], [1], [0, 0, 1, 1], [], []>, precision = #tpu.contract_precision<fp32>} : vector<8x128xf32>, vector<128x16xf32>, vector<8x16xf32> -> vector<8x16xf32>
    %24 = vector.extract_strided_slice %0 {offsets = [0, 3], sizes = [8, 1], strides = [1, 1]} : vector<8x6xi32> to vector<8x1xi32>
    %25 = vector.broadcast %24 : vector<8x1xi32> to vector<8x128xi32>
    %26 = arith.cmpi eq, %25, %1 : vector<8x128xi32>
    %27 = arith.extui %26 : vector<8x128xi1> to vector<8x128xi32>
    %28 = arith.sitofp %27 : vector<8x128xi32> to vector<8x128xf32>
    %c0_9 = arith.constant 0 : index
    %c0_10 = arith.constant 0 : index
    %29 = vector.load %arg5[%c0_9, %c0_10] : memref<128x16xf32, #tpu.memory_space<vmem>>, vector<128x16xf32>
    %cst_11 = arith.constant dense<0.000000e+00> : vector<8x16xf32>
    %30 = tpu.matmul %28, %29, %cst_11 {dimension_numbers = #tpu.dot_dimension_numbers<[1], [0], [0], [1], [0, 0, 1, 1], [], []>, precision = #tpu.contract_precision<fp32>} : vector<8x128xf32>, vector<128x16xf32>, vector<8x16xf32> -> vector<8x16xf32>
    %31 = arith.addf %23, %30 : vector<8x16xf32>
    %32 = vector.extract_strided_slice %0 {offsets = [0, 4], sizes = [8, 1], strides = [1, 1]} : vector<8x6xi32> to vector<8x1xi32>
    %33 = vector.broadcast %32 : vector<8x1xi32> to vector<8x128xi32>
    %34 = arith.cmpi eq, %33, %1 : vector<8x128xi32>
    %35 = arith.extui %34 : vector<8x128xi1> to vector<8x128xi32>
    %36 = arith.sitofp %35 : vector<8x128xi32> to vector<8x128xf32>
    %c0_12 = arith.constant 0 : index
    %c0_13 = arith.constant 0 : index
    %37 = vector.load %arg6[%c0_12, %c0_13] : memref<128x32xf32, #tpu.memory_space<vmem>>, vector<128x32xf32>
    %cst_14 = arith.constant dense<0.000000e+00> : vector<8x32xf32>
    %38 = tpu.matmul %36, %37, %cst_14 {dimension_numbers = #tpu.dot_dimension_numbers<[1], [0], [0], [1], [0, 0, 1, 1], [], []>, precision = #tpu.contract_precision<fp32>} : vector<8x128xf32>, vector<128x32xf32>, vector<8x32xf32> -> vector<8x32xf32>
    %39 = vector.extract_strided_slice %0 {offsets = [0, 5], sizes = [8, 1], strides = [1, 1]} : vector<8x6xi32> to vector<8x1xi32>
    %40 = vector.broadcast %39 : vector<8x1xi32> to vector<8x128xi32>
    %41 = arith.cmpi eq, %40, %1 : vector<8x128xi32>
    %42 = arith.extui %41 : vector<8x128xi1> to vector<8x128xi32>
    %43 = arith.sitofp %42 : vector<8x128xi32> to vector<8x128xf32>
    %c0_15 = arith.constant 0 : index
    %c0_16 = arith.constant 0 : index
    %44 = vector.load %arg7[%c0_15, %c0_16] : memref<128x32xf32, #tpu.memory_space<vmem>>, vector<128x32xf32>
    %cst_17 = arith.constant dense<0.000000e+00> : vector<8x32xf32>
    %45 = tpu.matmul %43, %44, %cst_17 {dimension_numbers = #tpu.dot_dimension_numbers<[1], [0], [0], [1], [0, 0, 1, 1], [], []>, precision = #tpu.contract_precision<fp32>} : vector<8x128xf32>, vector<128x32xf32>, vector<8x32xf32> -> vector<8x32xf32>
    %46 = arith.addf %38, %45 : vector<8x32xf32>
    %47 = tpu.concatenate %16, %31 in 1 : vector<8x16xf32>, vector<8x16xf32> -> vector<8x32xf32>
    %48 = arith.addf %47, %46 : vector<8x32xf32>
    %c0_18 = arith.constant 0 : index
    %c0_19 = arith.constant 0 : index
    %49 = vector.load %arg8[%c0_18, %c0_19] : memref<8x32xf32, #tpu.memory_space<vmem>>, vector<8x32xf32>
    tpu.vector_store %arg8[%c0_18, %c0_19], %48 {strides = array<i32>} : memref<8x32xf32, #tpu.memory_space<vmem>>, vector<8x32xf32>,
    return
  }
  func.func @transform_0(%arg0: i32) -> (i32, i32) {
    %c0_i32 = arith.constant 0 : i32
    %c0_i32_0 = arith.constant 0 : i32
    return %arg0, %c0_i32 : i32, i32
  }
  func.func @transform_1(%arg0: i32) -> (i32, i32) {
    %c0_i32 = arith.constant 0 : i32
    %c0_i32_0 = arith.constant 0 : i32
    %c0_i32_1 = arith.constant 0 : i32
    return %c0_i32, %c0_i32_0 : i32, i32
  }
  func.func @transform_2(%arg0: i32) -> (i32, i32) {
    %c0_i32 = arith.constant 0 : i32
    %c0_i32_0 = arith.constant 0 : i32
    %c0_i32_1 = arith.constant 0 : i32
    return %c0_i32, %c0_i32_0 : i32, i32
  }
  func.func @transform_3(%arg0: i32) -> (i32, i32) {
    %c0_i32 = arith.constant 0 : i32
    %c0_i32_0 = arith.constant 0 : i32
    %c0_i32_1 = arith.constant 0 : i32
    return %c0_i32, %c0_i32_0 : i32, i32
  }
  func.func @transform_4(%arg0: i32) -> (i32, i32) {
    %c0_i32 = arith.constant 0 : i32
    %c0_i32_0 = arith.constant 0 : i32
    %c0_i32_1 = arith.constant 0 : i32
    return %c0_i32, %c0_i32_0 : i32, i32
  }
  func.func @transform_5(%arg0: i32) -> (i32, i32) {
    %c0_i32 = arith.constant 0 : i32
    %c0_i32_0 = arith.constant 0 : i32
    %c0_i32_1 = arith.constant 0 : i32
    return %c0_i32, %c0_i32_0 : i32, i32
  }
  func.func @transform_6(%arg0: i32) -> (i32, i32) {
    %c0_i32 = arith.constant 0 : i32
    %c0_i32_0 = arith.constant 0 : i32
    %c0_i32_1 = arith.constant 0 : i32
    return %c0_i32, %c0_i32_0 : i32, i32
  }
  func.func @transform_7(%arg0: i32) -> (i32, i32) {
    %c0_i32 = arith.constant 0 : i32
    %c0_i32_0 = arith.constant 0 : i32
    return %arg0, %c0_i32 : i32, i32
  }
}

</mosaic_0001>

<llo_original>
// kernel: tpu_custom_call.1
$region0: #{tpu_custom_call.1}
  #allocation0 [shape = 'u32[]', space=smem, size = 0x4, offset = 0x4, fixed_abs, tag = 'smem constant byte address 0x4 - core index']
  #allocation1 [shape = 'u32[144,128]{1,0:T(1,128)}', space=vmem, size = 0x12000, scoped, tag = 'internal scratch']
  %s0 = inlined_call_operand.vmem [shape: s32[16,6], index: 0, kind: input, shape index: {}]
  %s1 = inlined_call_operand.vmem [shape: f32[128,16], index: 1, kind: input, shape index: {}]
  %s2 = inlined_call_operand.vmem [shape: f32[128,16], index: 2, kind: input, shape index: {}]
  %s3 = inlined_call_operand.vmem [shape: f32[128,16], index: 3, kind: input, shape index: {}]
  %s4 = inlined_call_operand.vmem [shape: f32[128,16], index: 4, kind: input, shape index: {}]
  %s5 = inlined_call_operand.vmem [shape: f32[128,32], index: 5, kind: input, shape index: {}]
  %s6 = inlined_call_operand.vmem [shape: f32[128,32], index: 6, kind: input, shape index: {}]
  %s7 = inlined_call_operand.hbm [shape: f32[16,32], index: 7, kind: output, shape index: {}]
  %s8 = sld [smem:[#allocation0]]
  $region61: #{tpu_custom_call.1} parent=0
    _
  %s10 = ssub.s32 1, %s8
  %s11 = scalar_select 0, %s10, %s8
  $region1: #{tpu_custom_call.1} parent=0
    #allocation2 [shape = 'u8[8192]{0}', space=vmem, size = 0x2000, scoped, tag = 'output window, operand 0']
    #allocation3 [shape = 's32[2]{0}', space=sflag, size = 0x8, scoped, tag = 'scoped memory for tpu_custom_call.1']
    %12 = vsyncpa [#allocation3], 0
    %s13 = scalar_lea.sflag [#allocation3], 1
    %14 = vsyncpa %s13, 0
    loop: start=0, step=1, limit=4
    $region2: #{tpu_custom_call.1} parent=1 // loop_pre_header
      _
    $region3: #{tpu_custom_call.1} parent=1 // loop_header
      %s16 = sphi 0, %s20
      %p17 = scmp.ge.s32.totalorder %s16, 4
      %s26 = sphi 0, %s28
      %s29 = sphi 0, %s26
      %s30 = sphi 0, %s29
      %s46 = sphi 0, %s30
      %s50 = sphi 0, %s50
      %s52 = sphi 0, %s50
      %s53 = sphi 0, %s52
      %s67 = sphi 0, %s53
      %s71 = sphi 0, %s71
      %s73 = sphi 0, %s71
      %s74 = sphi 0, %s73
      %s88 = sphi 0, %s74
      %s92 = sphi 0, %s92
      %s94 = sphi 0, %s92
      %s95 = sphi 0, %s94
      %s109 = sphi 0, %s95
      %s113 = sphi 0, %s113
      %s115 = sphi 0, %s113
      %s116 = sphi 0, %s115
      %s130 = sphi 0, %s116
      %s134 = sphi 0, %s134
      %s136 = sphi 0, %s134
      %s137 = sphi 0, %s136
      %s151 = sphi 0, %s137
      %s155 = sphi 0, %s155
      %s157 = sphi 0, %s155
      %s158 = sphi 0, %s157
      %s172 = sphi 0, %s158
      %s178 = sphi 0, %s180
      %s181 = sphi 0, %s178
      %s182 = sphi 0, %s181
      %s198 = sphi 0, %s182
    $region4: #{tpu_custom_call.1} parent=1 // loop_header_branch
      %19 = sbr.rel (%p17) target = $region8
    $region5: #{tpu_custom_call.1} parent=1 // loop_body
      %s21 = ssub.s32 %s16, 1
      %s22 = ssub.s32 %s16, 2
      %s23 = sadd.s32 %s16, 1
      %s24 = ssub.s32 %s16, %s23
      %p25 = scmp.eq.s32.totalorder %s24, 0
      %s27 = sadd.s32 %s26, 1
      %s28 = scalar_select %p25, %s26, %s27
      %p31 = pneg %p25
      %p32 = scmp.eq.s32.totalorder %s16, 1
      %p33 = por %p31, %p32
      %p34 = scmp.ne.s32.totalorder %s26, %s29
      %p35 = scmp.eq.s32.totalorder %s16, 0
      %p36 = por %p34, %p35
      %p37 = scmp.ne.s32.totalorder %s26, %s29
      %p38 = scmp.eq.s32.totalorder %s21, 1
      %p39 = por %p37, %p38
      %p40 = scmp.ne.s32.totalorder %s29, %s30
      %p41 = scmp.eq.s32.totalorder %s21, 0
      %p42 = por %p40, %p41
      %p43 = scmp.ne.s32.totalorder %s29, %s30
      %p44 = scmp.eq.s32.totalorder %s22, 1
      %p45 = por %p43, %p44
      %p47 = scmp.ne.s32.totalorder %s30, %s46
      %p48 = scmp.eq.s32.totalorder %s22, 0
      %p49 = por %p47, %p48
      %s51 = sadd.s32 %s50, 1
      %p54 = scmp.eq.s32.totalorder %s16, 1
      %p55 = scmp.ne.s32.totalorder %s50, %s52
      %p56 = scmp.eq.s32.totalorder %s16, 0
      %p57 = por %p55, %p56
      %p58 = scmp.ne.s32.totalorder %s50, %s52
      %p59 = scmp.eq.s32.totalorder %s21, 1
      %p60 = por %p58, %p59
      %p61 = scmp.ne.s32.totalorder %s52, %s53
      %p62 = scmp.eq.s32.totalorder %s21, 0
      %p63 = por %p61, %p62
      %p64 = scmp.ne.s32.totalorder %s52, %s53
      %p65 = scmp.eq.s32.totalorder %s22, 1
      %p66 = por %p64, %p65
      %p68 = scmp.ne.s32.totalorder %s53, %s67
      %p69 = scmp.eq.s32.totalorder %s22, 0
      %p70 = por %p68, %p69
      %s72 = sadd.s32 %s71, 1
      %p75 = scmp.eq.s32.totalorder %s16, 1
      %p76 = scmp.ne.s32.totalorder %s71, %s73
      %p77 = scmp.eq.s32.totalorder %s16, 0
      %p78 = por %p76, %p77
      %p79 = scmp.ne.s32.totalorder %s71, %s73
      %p80 = scmp.eq.s32.totalorder %s21, 1
      %p81 = por %p79, %p80
      %p82 = scmp.ne.s32.totalorder %s73, %s74
      %p83 = scmp.eq.s32.totalorder %s21, 0
      %p84 = por %p82, %p83
      %p85 = scmp.ne.s32.totalorder %s73, %s74
      %p86 = scmp.eq.s32.totalorder %s22, 1
      %p87 = por %p85, %p86
      %p89 = scmp.ne.s32.totalorder %s74, %s88
      %p90 = scmp.eq.s32.totalorder %s22, 0
      %p91 = por %p89, %p90
      %s93 = sadd.s32 %s92, 1
      %p96 = scmp.eq.s32.totalorder %s16, 1
      %p97 = scmp.ne.s32.totalorder %s92, %s94
      %p98 = scmp.eq.s32.totalorder %s16, 0
      %p99 = por %p97, %p98
      %p100 = scmp.ne.s32.totalorder %s92, %s94
      %p101 = scmp.eq.s32.totalorder %s21, 1
      %p102 = por %p100, %p101
      %p103 = scmp.ne.s32.totalorder %s94, %s95
      %p104 = scmp.eq.s32.totalorder %s21, 0
      %p105 = por %p103, %p104
      %p106 = scmp.ne.s32.totalorder %s94, %s95
      %p107 = scmp.eq.s32.totalorder %s22, 1
      %p108 = por %p106, %p107
      %p110 = scmp.ne.s32.totalorder %s95, %s109
      %p111 = scmp.eq.s32.totalorder %s22, 0
      %p112 = por %p110, %p111
      %s114 = sadd.s32 %s113, 1
      %p117 = scmp.eq.s32.totalorder %s16, 1
      %p118 = scmp.ne.s32.totalorder %s113, %s115
      %p119 = scmp.eq.s32.totalorder %s16, 0
      %p120 = por %p118, %p119
      %p121 = scmp.ne.s32.totalorder %s113, %s115
      %p122 = scmp.eq.s32.totalorder %s21, 1
      %p123 = por %p121, %p122
      %p124 = scmp.ne.s32.totalorder %s115, %s116
      %p125 = scmp.eq.s32.totalorder %s21, 0
      %p126 = por %p124, %p125
      %p127 = scmp.ne.s32.totalorder %s115, %s116
      %p128 = scmp.eq.s32.totalorder %s22, 1
      %p129 = por %p127, %p128
      %p131 = scmp.ne.s32.totalorder %s116, %s130
      %p132 = scmp.eq.s32.totalorder %s22, 0
      %p133 = por %p131, %p132
      %s135 = sadd.s32 %s134, 1
      %p138 = scmp.eq.s32.totalorder %s16, 1
      %p139 = scmp.ne.s32.totalorder %s134, %s136
      %p140 = scmp.eq.s32.totalorder %s16, 0
      %p141 = por %p139, %p140
      %p142 = scmp.ne.s32.totalorder %s134, %s136
      %p143 = scmp.eq.s32.totalorder %s21, 1
      %p144 = por %p142, %p143
      %p145 = scmp.ne.s32.totalorder %s136, %s137
      %p146 = scmp.eq.s32.totalorder %s21, 0
      %p147 = por %p145, %p146
      %p148 = scmp.ne.s32.totalorder %s136, %s137
      %p149 = scmp.eq.s32.totalorder %s22, 1
      %p150 = por %p148, %p149
      %p152 = scmp.ne.s32.totalorder %s137, %s151
      %p153 = scmp.eq.s32.totalorder %s22, 0
      %p154 = por %p152, %p153
      %s156 = sadd.s32 %s155, 1
      %p159 = scmp.eq.s32.totalorder %s16, 1
      %p160 = scmp.ne.s32.totalorder %s155, %s157
      %p161 = scmp.eq.s32.totalorder %s16, 0
      %p162 = por %p160, %p161
      %p163 = scmp.ne.s32.totalorder %s155, %s157
      %p164 = scmp.eq.s32.totalorder %s21, 1
      %p165 = por %p163, %p164
      %p166 = scmp.ne.s32.totalorder %s157, %s158
      %p167 = scmp.eq.s32.totalorder %s21, 0
      %p168 = por %p166, %p167
      %p169 = scmp.ne.s32.totalorder %s157, %s158
      %p170 = scmp.eq.s32.totalorder %s22, 1
      %p171 = por %p169, %p170
      %p173 = scmp.ne.s32.totalorder %s158, %s172
      %p174 = scmp.eq.s32.totalorder %s22, 0
      %p175 = por %p173, %p174
      %s176 = ssub.s32 %s16, %s23
      %p177 = scmp.eq.s32.totalorder %s176, 0
      %s179 = sadd.s32 %s178, 1
      %s180 = scalar_select %p177, %s178, %s179
      %p183 = pneg %p177
      %p184 = scmp.eq.s32.totalorder %s16, 1
      %p185 = por %p183, %p184
      %p186 = scmp.ne.s32.totalorder %s178, %s181
      %p187 = scmp.eq.s32.totalorder %s16, 0
      %p188 = por %p186, %p187
      %p189 = scmp.ne.s32.totalorder %s178, %s181
      %p190 = scmp.eq.s32.totalorder %s21, 1
      %p191 = por %p189, %p190
      %p192 = scmp.ne.s32.totalorder %s181, %s182
      %p193 = scmp.eq.s32.totalorder %s21, 0
      %p194 = por %p192, %p193
      %p195 = scmp.ne.s32.totalorder %s181, %s182
      %p196 = scmp.eq.s32.totalorder %s22, 1
      %p197 = por %p195, %p196
      %p199 = scmp.ne.s32.totalorder %s182, %s198
      %p200 = scmp.eq.s32.totalorder %s22, 0
      %p201 = por %p199, %p200
      %p202 = scmp.le.s32.totalorder 1, %s16
      %p203 = scmp.lt.s32.totalorder %s16, 3
      %p204 = pnand %p202, %p203
      %p205 = pneg %p204
      // Predicated region
      $region9: #{tpu_custom_call.1} parent=5 // pred_check
        _
      $region10: #{tpu_custom_call.1} parent=5 // pred_check_branch
        %207 = sbr.rel (%p204) target = $region12
      $region11: #{tpu_custom_call.1} parent=5 // pred_region
        %s208 = ssub.s32 %s16, 1
        // Predicated region
        $region13: #{tpu_custom_call.1} parent=11 // pred_check
          %p209 = pneg %p63
        $region14: #{tpu_custom_call.1} parent=11 // pred_check_branch
          %211 = sbr.rel (%p209) target = $region16
        $region15: #{tpu_custom_call.1} parent=11 // pred_region
          _
        $region16: #{tpu_custom_call.1} parent=11 // pred_fallthru
          _
        // Predicated region
        $region17: #{tpu_custom_call.1} parent=11 // pred_check
          %p212 = pneg %p84
        $region18: #{tpu_custom_call.1} parent=11 // pred_check_branch
          %214 = sbr.rel (%p212) target = $region20
        $region19: #{tpu_custom_call.1} parent=11 // pred_region
          _
        $region20: #{tpu_custom_call.1} parent=11 // pred_fallthru
          _
        // Predicated region
        $region21: #{tpu_custom_call.1} parent=11 // pred_check
          %p215 = pneg %p105
        $region22: #{tpu_custom_call.1} parent=11 // pred_check_branch
          %217 = sbr.rel (%p215) target = $region24
        $region23: #{tpu_custom_call.1} parent=11 // pred_region
          _
        $region24: #{tpu_custom_call.1} parent=11 // pred_fallthru
          _
        // Predicated region
        $region25: #{tpu_custom_call.1} parent=11 // pred_check
          %p218 = pneg %p126
        $region26: #{tpu_custom_call.1} parent=11 // pred_check_branch
          %220 = sbr.rel (%p218) target = $region28
        $region27: #{tpu_custom_call.1} parent=11 // pred_region
          _
        $region28: #{tpu_custom_call.1} parent=11 // pred_fallthru
          _
        // Predicated region
        $region29: #{tpu_custom_call.1} parent=11 // pred_check
          %p221 = pneg %p147
        $region30: #{tpu_custom_call.1} parent=11 // pred_check_branch
          %223 = sbr.rel (%p221) target = $region32
        $region31: #{tpu_custom_call.1} parent=11 // pred_region
          _
        $region32: #{tpu_custom_call.1} parent=11 // pred_fallthru
          _
        // Predicated region
        $region33: #{tpu_custom_call.1} parent=11 // pred_check
          %p224 = pneg %p168
        $region34: #{tpu_custom_call.1} parent=11 // pred_check_branch
          %226 = sbr.rel (%p224) target = $region36
        $region35: #{tpu_custom_call.1} parent=11 // pred_region
          _
        $region36: #{tpu_custom_call.1} parent=11 // pred_fallthru
          _
      $region12: #{tpu_custom_call.1} parent=5 // pred_fallthru
        _
      %p227 = scmp.lt.s32.totalorder %s16, 2
      // Predicated region
      $region37: #{tpu_custom_call.1} parent=5 // pred_check
        %p228 = pneg %p227
      $region38: #{tpu_custom_call.1} parent=5 // pred_check_branch
        %230 = sbr.rel (%p228) target = $region40
      $region39: #{tpu_custom_call.1} parent=5 // pred_region
        // Predicated region
        $region41: #{tpu_custom_call.1} parent=39 // pred_check
          %p231 = pneg %p36
        $region42: #{tpu_custom_call.1} parent=39 // pred_check_branch
          %233 = sbr.rel (%p231) target = $region44
        $region43: #{tpu_custom_call.1} parent=39 // pred_region
          %p234 = scmp.lt.s32.totalorder %s16, 1
          %s235 = scalar_select %p234, %s16, 1
          %s236 = smul.addr %s235, 8
          %s237 = scalar_lea.vmem %s0, %s236
        $region44: #{tpu_custom_call.1} parent=39 // pred_fallthru
          _
      $region40: #{tpu_custom_call.1} parent=5 // pred_fallthru
        _
      %p238 = scmp.le.s32.totalorder 1, %s16
      %p239 = scmp.lt.s32.totalorder %s16, 3
      %p240 = pnand %p238, %p239
      %p241 = pneg %p240
      // Predicated region
      $region45: #{tpu_custom_call.1} parent=5 // pred_check
        _
      $region46: #{tpu_custom_call.1} parent=5 // pred_check_branch
        %243 = sbr.rel (%p240) target = $region48
      $region47: #{tpu_custom_call.1} parent=5 // pred_region
        %s244 = ssub.s32 %s16, 1
        %p245 = scmp.lt.s32.totalorder %s21, 1
        %s246 = scalar_select %p245, %s21, 1
        %s247 = smul.addr %s246, 8
        %s248 = scalar_lea.vmem %s0, %s247
        %p249 = pneg %p42
        %p250 = pneg %p39
        %p251 = pneg %p63
        %p252 = pneg %p60
        %p253 = pneg %p84
        %p254 = pneg %p81
        %p255 = pneg %p105
        %p256 = pneg %p102
        %p257 = pneg %p126
        %p258 = pneg %p123
        %p259 = pneg %p147
        %p260 = pneg %p144
        %p261 = pneg %p168
        %p262 = pneg %p165
        %p263 = pneg %p194
        %p264 = pneg %p191
        %s265 = sand.u32 %s181, 1
        %s266 = scalar_lea.sflag [#allocation3], %s265
        %s267 = sand.u32 %s181, 1
        %s268 = smul.addr %s267, 8
        %s269 = scalar_lea.vmem [#allocation2], %s268
        %p270 = scmp.lt.s32.totalorder %s21, 1
        %s271 = scalar_select %p270, %s21, 1
        %s272 = smul.addr %s271, 8
        %s273 = scalar_lea.vmem %s0, %s272
        %v274 = vld [vmem:[%s273] sm:$0xff]
        %v275 = vlaneseq
        %v276 = vand.u32 %v275, 127
        %277 = vset.pattern.permute.xlu0 0
        %278 = vperm.xlu0 %277, %v274
        %v279 = vpop.permute.xlu0 %278
        %vm280 = vcmp.eq.s32.totalorder %v279, %v276
        %v281 = vsel %vm280, 1, 0
        %v282 = vcvt.s32.f32 %v281
        %v283 = vld [vmem:[%s1] sm:$0xff]
        %v284 = vld [vmem:[%s1 + $0x8] sm:$0xff]
        %v285 = vld [vmem:[%s1 + $0x10] sm:$0xff]
        %v286 = vld [vmem:[%s1 + $0x18] sm:$0xff]
        %v287 = vld [vmem:[%s1 + $0x20] sm:$0xff]
        %v288 = vld [vmem:[%s1 + $0x28] sm:$0xff]
        %v289 = vld [vmem:[%s1 + $0x30] sm:$0xff]
        %v290 = vld [vmem:[%s1 + $0x38] sm:$0xff]
        %v291 = vld [vmem:[%s1 + $0x40] sm:$0xff]
        %v292 = vld [vmem:[%s1 + $0x48] sm:$0xff]
        %v293 = vld [vmem:[%s1 + $0x50] sm:$0xff]
        %v294 = vld [vmem:[%s1 + $0x58] sm:$0xff]
        %v295 = vld [vmem:[%s1 + $0x60] sm:$0xff]
        %v296 = vld [vmem:[%s1 + $0x68] sm:$0xff]
        %v297 = vld [vmem:[%s1 + $0x70] sm:$0xff]
        %v298 = vld [vmem:[%s1 + $0x78] sm:$0xff]
        %299 = vset.pattern.permute.xlu0 1
        %300 = vperm.xlu0 %299, %v274
        %v301 = vpop.permute.xlu0 %300
        %vm302 = vcmp.eq.s32.totalorder %v301, %v276
        %v303 = vsel %vm302, 1, 0
        %v304 = vcvt.s32.f32 %v303
        %v305 = vld [vmem:[%s2] sm:$0xff]
        %v306 = vld [vmem:[%s2 + $0x8] sm:$0xff]
        %v307 = vld [vmem:[%s2 + $0x10] sm:$0xff]
        %v308 = vld [vmem:[%s2 + $0x18] sm:$0xff]
        %v309 = vld [vmem:[%s2 + $0x20] sm:$0xff]
        %v310 = vld [vmem:[%s2 + $0x28] sm:$0xff]
        %v311 = vld [vmem:[%s2 + $0x30] sm:$0xff]
        %v312 = vld [vmem:[%s2 + $0x38] sm:$0xff]
        %v313 = vld [vmem:[%s2 + $0x40] sm:$0xff]
        %v314 = vld [vmem:[%s2 + $0x48] sm:$0xff]
        %v315 = vld [vmem:[%s2 + $0x50] sm:$0xff]
        %v316 = vld [vmem:[%s2 + $0x58] sm:$0xff]
        %v317 = vld [vmem:[%s2 + $0x60] sm:$0xff]
        %v318 = vld [vmem:[%s2 + $0x68] sm:$0xff]
        %v319 = vld [vmem:[%s2 + $0x70] sm:$0xff]
        %v320 = vld [vmem:[%s2 + $0x78] sm:$0xff]
        %321 = vmatprep.subr.mxu0 0.0
        %v322 = vand.u32 %v320, 4294901760
        %323 = vmatpush1.msra.mxu0 %v322
        %324 = vmatprep.subr.mxu0 0.0
        %v325 = vand.u32 %v319, 4294901760
        %326 = vmatpush1.msra.mxu0 %v325
        %327 = vmatprep.subr.mxu0 0.0
        %v328 = vand.u32 %v318, 4294901760
        %329 = vmatpush1.msra.mxu0 %v328
        %330 = vmatprep.subr.mxu0 0.0
        %v331 = vand.u32 %v317, 4294901760
        %332 = vmatpush1.msra.mxu0 %v331
        %333 = vmatprep.subr.mxu0 0.0
        %v334 = vand.u32 %v316, 4294901760
        %335 = vmatpush1.msra.mxu0 %v334
        %336 = vmatprep.subr.mxu0 0.0
        %v337 = vand.u32 %v315, 4294901760
        %338 = vmatpush1.msra.mxu0 %v337
        %339 = vmatprep.subr.mxu0 0.0
        %v340 = vand.u32 %v314, 4294901760
        %341 = vmatpush1.msra.mxu0 %v340
        %342 = vmatprep.subr.mxu0 0.0
        %v343 = vand.u32 %v313, 4294901760
        %344 = vmatpush1.msra.mxu0 %v343
        %345 = vmatprep.subr.mxu0 0.0
        %v346 = vand.u32 %v312, 4294901760
        %347 = vmatpush1.msra.mxu0 %v346
        %348 = vmatprep.subr.mxu0 0.0
        %v349 = vand.u32 %v311, 4294901760
        %350 = vmatpush1.msra.mxu0 %v349
        %351 = vmatprep.subr.mxu0 0.0
        %v352 = vand.u32 %v310, 4294901760
        %353 = vmatpush1.msra.mxu0 %v352
        %354 = vmatprep.subr.mxu0 0.0
        %v355 = vand.u32 %v309, 4294901760
        %356 = vmatpush1.msra.mxu0 %v355
        %357 = vmatprep.subr.mxu0 0.0
        %v358 = vand.u32 %v308, 4294901760
        %359 = vmatpush1.msra.mxu0 %v358
        %360 = vmatprep.subr.mxu0 0.0
        %v361 = vand.u32 %v307, 4294901760
        %362 = vmatpush1.msra.mxu0 %v361
        %363 = vmatprep.subr.mxu0 0.0
        %v364 = vand.u32 %v306, 4294901760
        %365 = vmatpush1.msra.mxu0 %v364
        %366 = vmatprep.subr.mxu0 0.0
        %v367 = vand.u32 %v305, 4294901760
        %368 = vmatpush1.msra.mxu0 %v367
        %369 = vmatprep.subr.mxu0 0.0
        %370 = vmatpush2.msra.mxu0 0.0
        %371 = vmatprep.subr.mxu0 0.0
        %372 = vmatpush2.msra.mxu0 0.0
        %373 = vmatprep.subr.mxu0 0.0
        %374 = vmatpush2.msra.mxu0 0.0
        %375 = vmatprep.subr.mxu0 0.0
        %376 = vmatpush2.msra.mxu0 0.0
        %377 = vmatprep.subr.mxu0 0.0
        %378 = vmatpush2.msra.mxu0 0.0
        %379 = vmatprep.subr.mxu0 0.0
        %380 = vmatpush2.msra.mxu0 0.0
        %381 = vmatprep.subr.mxu0 0.0
        %382 = vmatpush2.msra.mxu0 0.0
        %383 = vmatprep.subr.mxu0 0.0
        %384 = vmatpush2.msra.mxu0 0.0
        %385 = vmatprep.subr.mxu0 0.0
        %386 = vmatpush2.msra.mxu0 0.0
        %387 = vmatprep.subr.mxu0 0.0
        %388 = vmatpush2.msra.mxu0 0.0
        %389 = vmatprep.subr.mxu0 0.0
        %390 = vmatpush2.msra.mxu0 0.0
        %391 = vmatprep.subr.mxu0 0.0
        %392 = vmatpush2.msra.mxu0 0.0
        %393 = vmatprep.subr.mxu0 0.0
        %394 = vmatpush2.msra.mxu0 0.0
        %395 = vmatprep.subr.mxu0 0.0
        %396 = vmatpush2.msra.mxu0 0.0
        %397 = vmatprep.subr.mxu0 0.0
        %398 = vmatpush2.msra.mxu0 0.0
        %399 = vmatprep.subr.mxu0 0.0
        %400 = vmatpush2.msra.mxu0 0.0
        %401 = vmatprep.mubr.f32.mxu0 0.0
        %v402 = vand.u32 %v304, 4294901760
        %v403 = vsub.f32 %v304, %v402
        %v404 = vand.u32 %v403, 4294901760
        %v405 = vsub.f32 %v403, %v404
        %v406 = vand.u32 %v405, 4294901760
        %407 = vmatmul.mubr.f32.gmra.mxu0 %v406
        %v408 = vpop.f32.mrf.mxu0
        %v409 = vadd.f32 0.0, %v408
        %v410 = vpop.f32.mrf.mxu0
        %411 = vdwg.mxu0
        %412 = vmatprep.subr.mxu0 0.0
        %v413 = vand.u32 %v320, 4294901760
        %v414 = vsub.f32 %v320, %v413
        %v415 = vand.u32 %v414, 4294901760
        %v416 = vsub.f32 %v414, %v415
        %v417 = vand.u32 %v416, 4294901760
        %418 = vmatpush1.msra.mxu0 %v417
        %419 = vmatprep.subr.mxu0 0.0
        %v420 = vand.u32 %v319, 4294901760
        %v421 = vsub.f32 %v319, %v420
        %v422 = vand.u32 %v421, 4294901760
        %v423 = vsub.f32 %v421, %v422
        %v424 = vand.u32 %v423, 4294901760
        %425 = vmatpush1.msra.mxu0 %v424
        %426 = vmatprep.subr.mxu0 0.0
        %v427 = vand.u32 %v318, 4294901760
        %v428 = vsub.f32 %v318, %v427
        %v429 = vand.u32 %v428, 4294901760
        %v430 = vsub.f32 %v428, %v429
        %v431 = vand.u32 %v430, 4294901760
        %432 = vmatpush1.msra.mxu0 %v431
        %433 = vmatprep.subr.mxu0 0.0
        %v434 = vand.u32 %v317, 4294901760
        %v435 = vsub.f32 %v317, %v434
        %v436 = vand.u32 %v435, 4294901760
        %v437 = vsub.f32 %v435, %v436
        %v438 = vand.u32 %v437, 4294901760
        %439 = vmatpush1.msra.mxu0 %v438
        %440 = vmatprep.subr.mxu0 0.0
        %v441 = vand.u32 %v316, 4294901760
        %v442 = vsub.f32 %v316, %v441
        %v443 = vand.u32 %v442, 4294901760
        %v444 = vsub.f32 %v442, %v443
        %v445 = vand.u32 %v444, 4294901760
        %446 = vmatpush1.msra.mxu0 %v445
        %447 = vmatprep.subr.mxu0 0.0
        %v448 = vand.u32 %v315, 4294901760
        %v449 = vsub.f32 %v315, %v448
        %v450 = vand.u32 %v449, 4294901760
        %v451 = vsub.f32 %v449, %v450
        %v452 = vand.u32 %v451, 4294901760
        %453 = vmatpush1.msra.mxu0 %v452
        %454 = vmatprep.subr.mxu0 0.0
        %v455 = vand.u32 %v314, 4294901760
        %v456 = vsub.f32 %v314, %v455
        %v457 = vand.u32 %v456, 4294901760
        %v458 = vsub.f32 %v456, %v457
        %v459 = vand.u32 %v458, 4294901760
        %460 = vmatpush1.msra.mxu0 %v459
        %461 = vmatprep.subr.mxu0 0.0
        %v462 = vand.u32 %v313, 4294901760
        %v463 = vsub.f32 %v313, %v462
        %v464 = vand.u32 %v463, 4294901760
        %v465 = vsub.f32 %v463, %v464
        %v466 = vand.u32 %v465, 4294901760
        %467 = vmatpush1.msra.mxu0 %v466
        %468 = vmatprep.subr.mxu0 0.0
        %v469 = vand.u32 %v312, 4294901760
        %v470 = vsub.f32 %v312, %v469
        %v471 = vand.u32 %v470, 4294901760
        %v472 = vsub.f32 %v470, %v471
        %v473 = vand.u32 %v472, 4294901760
        %474 = vmatpush1.msra.mxu0 %v473
        %475 = vmatprep.subr.mxu0 0.0
        %v476 = vand.u32 %v311, 4294901760
        %v477 = vsub.f32 %v311, %v476
        %v478 = vand.u32 %v477, 4294901760
        %v479 = vsub.f32 %v477, %v478
        %v480 = vand.u32 %v479, 4294901760
        %481 = vmatpush1.msra.mxu0 %v480
        %482 = vmatprep.subr.mxu0 0.0
        %v483 = vand.u32 %v310, 4294901760
        %v484 = vsub.f32 %v310, %v483
        %v485 = vand.u32 %v484, 4294901760
        %v486 = vsub.f32 %v484, %v485
        %v487 = vand.u32 %v486, 4294901760
        %488 = vmatpush1.msra.mxu0 %v487
        %489 = vmatprep.subr.mxu0 0.0
        %v490 = vand.u32 %v309, 4294901760
        %v491 = vsub.f32 %v309, %v490
        %v492 = vand.u32 %v491, 4294901760
        %v493 = vsub.f32 %v491, %v492
        %v494 = vand.u32 %v493, 4294901760
        %495 = vmatpush1.msra.mxu0 %v494
        %496 = vmatprep.subr.mxu0 0.0
        %v497 = vand.u32 %v308, 4294901760
        %v498 = vsub.f32 %v308, %v497
        %v499 = vand.u32 %v498, 4294901760
        %v500 = vsub.f32 %v498, %v499
        %v501 = vand.u32 %v500, 4294901760
        %502 = vmatpush1.msra.mxu0 %v501
        %503 = vmatprep.subr.mxu0 0.0
        %v504 = vand.u32 %v307, 4294901760
        %v505 = vsub.f32 %v307, %v504
        %v506 = vand.u32 %v505, 4294901760
        %v507 = vsub.f32 %v505, %v506
        %v508 = vand.u32 %v507, 4294901760
        %509 = vmatpush1.msra.mxu0 %v508
        %510 = vmatprep.subr.mxu0 0.0
        %v511 = vand.u32 %v306, 4294901760
        %v512 = vsub.f32 %v306, %v511
        %v513 = vand.u32 %v512, 4294901760
        %v514 = vsub.f32 %v512, %v513
        %v515 = vand.u32 %v514, 4294901760
        %516 = vmatpush1.msra.mxu0 %v515
        %517 = vmatprep.subr.mxu0 0.0
        %v518 = vand.u32 %v305, 4294901760
        %v519 = vsub.f32 %v305, %v518
        %v520 = vand.u32 %v519, 4294901760
        %v521 = vsub.f32 %v519, %v520
        %v522 = vand.u32 %v521, 4294901760
        %523 = vmatpush1.msra.mxu0 %v522
        %524 = vmatprep.subr.mxu0 0.0
        %525 = vmatpush2.msra.mxu0 0.0
        %526 = vmatprep.subr.mxu0 0.0
        %527 = vmatpush2.msra.mxu0 0.0
        %528 = vmatprep.subr.mxu0 0.0
        %529 = vmatpush2.msra.mxu0 0.0
        %530 = vmatprep.subr.mxu0 0.0
        %531 = vmatpush2.msra.mxu0 0.0
        %532 = vmatprep.subr.mxu0 0.0
        %533 = vmatpush2.msra.mxu0 0.0
        %534 = vmatprep.subr.mxu0 0.0
        %535 = vmatpush2.msra.mxu0 0.0
        %536 = vmatprep.subr.mxu0 0.0
        %537 = vmatpush2.msra.mxu0 0.0
        %538 = vmatprep.subr.mxu0 0.0
        %539 = vmatpush2.msra.mxu0 0.0
        %540 = vmatprep.subr.mxu0 0.0
        %541 = vmatpush2.msra.mxu0 0.0
        %542 = vmatprep.subr.mxu0 0.0
        %543 = vmatpush2.msra.mxu0 0.0
        %544 = vmatprep.subr.mxu0 0.0
        %545 = vmatpush2.msra.mxu0 0.0
        %546 = vmatprep.subr.mxu0 0.0
        %547 = vmatpush2.msra.mxu0 0.0
        %548 = vmatprep.subr.mxu0 0.0
        %549 = vmatpush2.msra.mxu0 0.0
        %550 = vmatprep.subr.mxu0 0.0
        %551 = vmatpush2.msra.mxu0 0.0
        %552 = vmatprep.subr.mxu0 0.0
        %553 = vmatpush2.msra.mxu0 0.0
        %554 = vmatprep.subr.mxu0 0.0
        %555 = vmatpush2.msra.mxu0 0.0
        %556 = vmatprep.mubr.f32.mxu0 0.0
        %v557 = vand.u32 %v304, 4294901760
        %558 = vmatmul.mubr.f32.gmra.mxu0 %v557
        %v559 = vpop.f32.mrf.mxu0
        %v560 = vadd.f32 %v409, %v559
        %v561 = vpop.f32.mrf.mxu0
        %562 = vdwg.mxu0
        %563 = vmatprep.subr.mxu0 0.0
        %v564 = vand.u32 %v320, 4294901760
        %v565 = vsub.f32 %v320, %v564
        %566 = vmatpush1.msra.mxu0 %v565
        %567 = vmatprep.subr.mxu0 0.0
        %v568 = vand.u32 %v319, 4294901760
        %v569 = vsub.f32 %v319, %v568
        %570 = vmatpush1.msra.mxu0 %v569
        %571 = vmatprep.subr.mxu0 0.0
        %v572 = vand.u32 %v318, 4294901760
        %v573 = vsub.f32 %v318, %v572
        %574 = vmatpush1.msra.mxu0 %v573
        %575 = vmatprep.subr.mxu0 0.0
        %v576 = vand.u32 %v317, 4294901760
        %v577 = vsub.f32 %v317, %v576
        %578 = vmatpush1.msra.mxu0 %v577
        %579 = vmatprep.subr.mxu0 0.0
        %v580 = vand.u32 %v316, 4294901760
        %v581 = vsub.f32 %v316, %v580
        %582 = vmatpush1.msra.mxu0 %v581
        %583 = vmatprep.subr.mxu0 0.0
        %v584 = vand.u32 %v315, 4294901760
        %v585 = vsub.f32 %v315, %v584
        %586 = vmatpush1.msra.mxu0 %v585
        %587 = vmatprep.subr.mxu0 0.0
        %v588 = vand.u32 %v314, 4294901760
        %v589 = vsub.f32 %v314, %v588
        %590 = vmatpush1.msra.mxu0 %v589
        %591 = vmatprep.subr.mxu0 0.0
        %v592 = vand.u32 %v313, 4294901760
        %v593 = vsub.f32 %v313, %v592
        %594 = vmatpush1.msra.mxu0 %v593
        %595 = vmatprep.subr.mxu0 0.0
        %v596 = vand.u32 %v312, 4294901760
        %v597 = vsub.f32 %v312, %v596
        %598 = vmatpush1.msra.mxu0 %v597
        %599 = vmatprep.subr.mxu0 0.0
        %v600 = vand.u32 %v311, 4294901760
        %v601 = vsub.f32 %v311, %v600
        %602 = vmatpush1.msra.mxu0 %v601
        %603 = vmatprep.subr.mxu0 0.0
        %v604 = vand.u32 %v310, 4294901760
        %v605 = vsub.f32 %v310, %v604
        %606 = vmatpush1.msra.mxu0 %v605
        %607 = vmatprep.subr.mxu0 0.0
        %v608 = vand.u32 %v309, 4294901760
        %v609 = vsub.f32 %v309, %v608
        %610 = vmatpush1.msra.mxu0 %v609
        %611 = vmatprep.subr.mxu0 0.0
        %v612 = vand.u32 %v308, 4294901760
        %v613 = vsub.f32 %v308, %v612
        %614 = vmatpush1.msra.mxu0 %v613
        %615 = vmatprep.subr.mxu0 0.0
        %v616 = vand.u32 %v307, 4294901760
        %v617 = vsub.f32 %v307, %v616
        %618 = vmatpush1.msra.mxu0 %v617
        %619 = vmatprep.subr.mxu0 0.0
        %v620 = vand.u32 %v306, 4294901760
        %v621 = vsub.f32 %v306, %v620
        %622 = vmatpush1.msra.mxu0 %v621
        %623 = vmatprep.subr.mxu0 0.0
        %v624 = vand.u32 %v305, 4294901760
        %v625 = vsub.f32 %v305, %v624
        %626 = vmatpush1.msra.mxu0 %v625
        %627 = vmatprep.subr.mxu0 0.0
        %628 = vmatpush2.msra.mxu0 0.0
        %629 = vmatprep.subr.mxu0 0.0
        %630 = vmatpush2.msra.mxu0 0.0
        %631 = vmatprep.subr.mxu0 0.0
        %632 = vmatpush2.msra.mxu0 0.0
        %633 = vmatprep.subr.mxu0 0.0
        %634 = vmatpush2.msra.mxu0 0.0
        %635 = vmatprep.subr.mxu0 0.0
        %636 = vmatpush2.msra.mxu0 0.0
        %637 = vmatprep.subr.mxu0 0.0
        %638 = vmatpush2.msra.mxu0 0.0
        %639 = vmatprep.subr.mxu0 0.0
        %640 = vmatpush2.msra.mxu0 0.0
        %641 = vmatprep.subr.mxu0 0.0
        %642 = vmatpush2.msra.mxu0 0.0
        %643 = vmatprep.subr.mxu0 0.0
        %644 = vmatpush2.msra.mxu0 0.0
        %645 = vmatprep.subr.mxu0 0.0
        %646 = vmatpush2.msra.mxu0 0.0
        %647 = vmatprep.subr.mxu0 0.0
        %648 = vmatpush2.msra.mxu0 0.0
        %649 = vmatprep.subr.mxu0 0.0
        %650 = vmatpush2.msra.mxu0 0.0
        %651 = vmatprep.subr.mxu0 0.0
        %652 = vmatpush2.msra.mxu0 0.0
        %653 = vmatprep.subr.mxu0 0.0
        %654 = vmatpush2.msra.mxu0 0.0
        %655 = vmatprep.subr.mxu0 0.0
        %656 = vmatpush2.msra.mxu0 0.0
        %657 = vmatprep.subr.mxu0 0.0
        %658 = vmatpush2.msra.mxu0 0.0
        %659 = vmatprep.mubr.f32.mxu0 0.0
        %v660 = vand.u32 %v304, 4294901760
        %v661 = vsub.f32 %v304, %v660
        %662 = vmatmul.mubr.f32.gmra.mxu0 %v661
        %v663 = vpop.f32.mrf.mxu0
        %v664 = vadd.f32 %v560, %v663
        %v665 = vpop.f32.mrf.mxu0
        %666 = vdwg.mxu0
        %667 = vmatprep.subr.mxu0 0.0
        %v668 = vand.u32 %v320, 4294901760
        %669 = vmatpush1.msra.mxu0 %v668
        %670 = vmatprep.subr.mxu0 0.0
        %v671 = vand.u32 %v319, 4294901760
        %672 = vmatpush1.msra.mxu0 %v671
        %673 = vmatprep.subr.mxu0 0.0
        %v674 = vand.u32 %v318, 4294901760
        %675 = vmatpush1.msra.mxu0 %v674
        %676 = vmatprep.subr.mxu0 0.0
        %v677 = vand.u32 %v317, 4294901760
        %678 = vmatpush1.msra.mxu0 %v677
        %679 = vmatprep.subr.mxu0 0.0
        %v680 = vand.u32 %v316, 4294901760
        %681 = vmatpush1.msra.mxu0 %v680
        %682 = vmatprep.subr.mxu0 0.0
        %v683 = vand.u32 %v315, 4294901760
        %684 = vmatpush1.msra.mxu0 %v683
        %685 = vmatprep.subr.mxu0 0.0
        %v686 = vand.u32 %v314, 4294901760
        %687 = vmatpush1.msra.mxu0 %v686
        %688 = vmatprep.subr.mxu0 0.0
        %v689 = vand.u32 %v313, 4294901760
        %690 = vmatpush1.msra.mxu0 %v689
        %691 = vmatprep.subr.mxu0 0.0
        %v692 = vand.u32 %v312, 4294901760
        %693 = vmatpush1.msra.mxu0 %v692
        %694 = vmatprep.subr.mxu0 0.0
        %v695 = vand.u32 %v311, 4294901760
        %696 = vmatpush1.msra.mxu0 %v695
        %697 = vmatprep.subr.mxu0 0.0
        %v698 = vand.u32 %v310, 4294901760
        %699 = vmatpush1.msra.mxu0 %v698
        %700 = vmatprep.subr.mxu0 0.0
        %v701 = vand.u32 %v309, 4294901760
        %702 = vmatpush1.msra.mxu0 %v701
        %703 = vmatprep.subr.mxu0 0.0
        %v704 = vand.u32 %v308, 4294901760
        %705 = vmatpush1.msra.mxu0 %v704
        %706 = vmatprep.subr.mxu0 0.0
        %v707 = vand.u32 %v307, 4294901760
        %708 = vmatpush1.msra.mxu0 %v707
        %709 = vmatprep.subr.mxu0 0.0
        %v710 = vand.u32 %v306, 4294901760
        %711 = vmatpush1.msra.mxu0 %v710
        %712 = vmatprep.subr.mxu0 0.0
        %v713 = vand.u32 %v305, 4294901760
        %714 = vmatpush1.msra.mxu0 %v713
        %715 = vmatprep.subr.mxu0 0.0
        %716 = vmatpush2.msra.mxu0 0.0
        %717 = vmatprep.subr.mxu0 0.0
        %718 = vmatpush2.msra.mxu0 0.0
        %719 = vmatprep.subr.mxu0 0.0
        %720 = vmatpush2.msra.mxu0 0.0
        %721 = vmatprep.subr.mxu0 0.0
        %722 = vmatpush2.msra.mxu0 0.0
        %723 = vmatprep.subr.mxu0 0.0
        %724 = vmatpush2.msra.mxu0 0.0
        %725 = vmatprep.subr.mxu0 0.0
        %726 = vmatpush2.msra.mxu0 0.0
        %727 = vmatprep.subr.mxu0 0.0
        %728 = vmatpush2.msra.mxu0 0.0
        %729 = vmatprep.subr.mxu0 0.0
        %730 = vmatpush2.msra.mxu0 0.0
        %731 = vmatprep.subr.mxu0 0.0
        %732 = vmatpush2.msra.mxu0 0.0
        %733 = vmatprep.subr.mxu0 0.0
        %734 = vmatpush2.msra.mxu0 0.0
        %735 = vmatprep.subr.mxu0 0.0
        %736 = vmatpush2.msra.mxu0 0.0
        %737 = vmatprep.subr.mxu0 0.0
        %738 = vmatpush2.msra.mxu0 0.0
        %739 = vmatprep.subr.mxu0 0.0
        %740 = vmatpush2.msra.mxu0 0.0
        %741 = vmatprep.subr.mxu0 0.0
        %742 = vmatpush2.msra.mxu0 0.0
        %743 = vmatprep.subr.mxu0 0.0
        %744 = vmatpush2.msra.mxu0 0.0
        %745 = vmatprep.subr.mxu0 0.0
        %746 = vmatpush2.msra.mxu0 0.0
        %747 = vmatprep.mubr.f32.mxu0 0.0
        %v748 = vand.u32 %v304, 4294901760
        %v749 = vsub.f32 %v304, %v748
        %v750 = vand.u32 %v749, 4294901760
        %751 = vmatmul.mubr.f32.gmra.mxu0 %v750
        %v752 = vpop.f32.mrf.mxu0
        %v753 = vadd.f32 %v664, %v752
        %v754 = vpop.f32.mrf.mxu0
        %755 = vdwg.mxu0
        %756 = vmatprep.subr.mxu0 0.0
        %v757 = vand.u32 %v320, 4294901760
        %v758 = vsub.f32 %v320, %v757
        %v759 = vand.u32 %v758, 4294901760
        %760 = vmatpush1.msra.mxu0 %v759
        %761 = vmatprep.subr.mxu0 0.0
        %v762 = vand.u32 %v319, 4294901760
        %v763 = vsub.f32 %v319, %v762
        %v764 = vand.u32 %v763, 4294901760
        %765 = vmatpush1.msra.mxu0 %v764
        %766 = vmatprep.subr.mxu0 0.0
        %v767 = vand.u32 %v318, 4294901760
        %v768 = vsub.f32 %v318, %v767
        %v769 = vand.u32 %v768, 4294901760
        %770 = vmatpush1.msra.mxu0 %v769
        %771 = vmatprep.subr.mxu0 0.0
        %v772 = vand.u32 %v317, 4294901760
        %v773 = vsub.f32 %v317, %v772
        %v774 = vand.u32 %v773, 4294901760
        %775 = vmatpush1.msra.mxu0 %v774
        %776 = vmatprep.subr.mxu0 0.0
        %v777 = vand.u32 %v316, 4294901760
        %v778 = vsub.f32 %v316, %v777
        %v779 = vand.u32 %v778, 4294901760
        %780 = vmatpush1.msra.mxu0 %v779
        %781 = vmatprep.subr.mxu0 0.0
        %v782 = vand.u32 %v315, 4294901760
        %v783 = vsub.f32 %v315, %v782
        %v784 = vand.u32 %v783, 4294901760
        %785 = vmatpush1.msra.mxu0 %v784
        %786 = vmatprep.subr.mxu0 0.0
        %v787 = vand.u32 %v314, 4294901760
        %v788 = vsub.f32 %v314, %v787
        %v789 = vand.u32 %v788, 4294901760
        %790 = vmatpush1.msra.mxu0 %v789
        %791 = vmatprep.subr.mxu0 0.0
        %v792 = vand.u32 %v313, 4294901760
        %v793 = vsub.f32 %v313, %v792
        %v794 = vand.u32 %v793, 4294901760
        %795 = vmatpush1.msra.mxu0 %v794
        %796 = vmatprep.subr.mxu0 0.0
        %v797 = vand.u32 %v312, 4294901760
        %v798 = vsub.f32 %v312, %v797
        %v799 = vand.u32 %v798, 4294901760
        %800 = vmatpush1.msra.mxu0 %v799
        %801 = vmatprep.subr.mxu0 0.0
        %v802 = vand.u32 %v311, 4294901760
        %v803 = vsub.f32 %v311, %v802
        %v804 = vand.u32 %v803, 4294901760
        %805 = vmatpush1.msra.mxu0 %v804
        %806 = vmatprep.subr.mxu0 0.0
        %v807 = vand.u32 %v310, 4294901760
        %v808 = vsub.f32 %v310, %v807
        %v809 = vand.u32 %v808, 4294901760
        %810 = vmatpush1.msra.mxu0 %v809
        %811 = vmatprep.subr.mxu0 0.0
        %v812 = vand.u32 %v309, 4294901760
        %v813 = vsub.f32 %v309, %v812
        %v814 = vand.u32 %v813, 4294901760
        %815 = vmatpush1.msra.mxu0 %v814
        %816 = vmatprep.subr.mxu0 0.0
        %v817 = vand.u32 %v308, 4294901760
        %v818 = vsub.f32 %v308, %v817
        %v819 = vand.u32 %v818, 4294901760
        %820 = vmatpush1.msra.mxu0 %v819
        %821 = vmatprep.subr.mxu0 0.0
        %v822 = vand.u32 %v307, 4294901760
        %v823 = vsub.f32 %v307, %v822
        %v824 = vand.u32 %v823, 4294901760
        %825 = vmatpush1.msra.mxu0 %v824
        %826 = vmatprep.subr.mxu0 0.0
        %v827 = vand.u32 %v306, 4294901760
        %v828 = vsub.f32 %v306, %v827
        %v829 = vand.u32 %v828, 4294901760
        %830 = vmatpush1.msra.mxu0 %v829
        %831 = vmatprep.subr.mxu0 0.0
        %v832 = vand.u32 %v305, 4294901760
        %v833 = vsub.f32 %v305, %v832
        %v834 = vand.u32 %v833, 4294901760
        %835 = vmatpush1.msra.mxu0 %v834
        %836 = vmatprep.subr.mxu0 0.0
        %837 = vmatpush2.msra.mxu0 0.0
        %838 = vmatprep.subr.mxu0 0.0
        %839 = vmatpush2.msra.mxu0 0.0
        %840 = vmatprep.subr.mxu0 0.0
        %841 = vmatpush2.msra.mxu0 0.0
        %842 = vmatprep.subr.mxu0 0.0
        %843 = vmatpush2.msra.mxu0 0.0
        %844 = vmatprep.subr.mxu0 0.0
        %845 = vmatpush2.msra.mxu0 0.0
        %846 = vmatprep.subr.mxu0 0.0
        %847 = vmatpush2.msra.mxu0 0.0
        %848 = vmatprep.subr.mxu0 0.0
        %849 = vmatpush2.msra.mxu0 0.0
        %850 = vmatprep.subr.mxu0 0.0
        %851 = vmatpush2.msra.mxu0 0.0
        %852 = vmatprep.subr.mxu0 0.0
        %853 = vmatpush2.msra.mxu0 0.0
        %854 = vmatprep.subr.mxu0 0.0
        %855 = vmatpush2.msra.mxu0 0.0
        %856 = vmatprep.subr.mxu0 0.0
        %857 = vmatpush2.msra.mxu0 0.0
        %858 = vmatprep.subr.mxu0 0.0
        %859 = vmatpush2.msra.mxu0 0.0
        %860 = vmatprep.subr.mxu0 0.0
        %861 = vmatpush2.msra.mxu0 0.0
        %862 = vmatprep.subr.mxu0 0.0
        %863 = vmatpush2.msra.mxu0 0.0
        %864 = vmatprep.subr.mxu0 0.0
        %865 = vmatpush2.msra.mxu0 0.0
        %866 = vmatprep.subr.mxu0 0.0
        %867 = vmatpush2.msra.mxu0 0.0
        %868 = vmatprep.mubr.f32.mxu0 0.0
        %v869 = vand.u32 %v304, 4294901760
        %870 = vmatmul.mubr.f32.gmra.mxu0 %v869
        %v871 = vpop.f32.mrf.mxu0
        %v872 = vadd.f32 %v753, %v871
        %v873 = vpop.f32.mrf.mxu0
        %874 = vdwg.mxu0
        %875 = vmatprep.subr.mxu0 0.0
        %v876 = vand.u32 %v320, 4294901760
        %877 = vmatpush1.msra.mxu0 %v876
        %878 = vmatprep.subr.mxu0 0.0
        %v879 = vand.u32 %v319, 4294901760
        %880 = vmatpush1.msra.mxu0 %v879
        %881 = vmatprep.subr.mxu0 0.0
        %v882 = vand.u32 %v318, 4294901760
        %883 = vmatpush1.msra.mxu0 %v882
        %884 = vmatprep.subr.mxu0 0.0
        %v885 = vand.u32 %v317, 4294901760
        %886 = vmatpush1.msra.mxu0 %v885
        %887 = vmatprep.subr.mxu0 0.0
        %v888 = vand.u32 %v316, 4294901760
        %889 = vmatpush1.msra.mxu0 %v888
        %890 = vmatprep.subr.mxu0 0.0
        %v891 = vand.u32 %v315, 4294901760
        %892 = vmatpush1.msra.mxu0 %v891
        %893 = vmatprep.subr.mxu0 0.0
        %v894 = vand.u32 %v314, 4294901760
        %895 = vmatpush1.msra.mxu0 %v894
        %896 = vmatprep.subr.mxu0 0.0
        %v897 = vand.u32 %v313, 4294901760
        %898 = vmatpush1.msra.mxu0 %v897
        %899 = vmatprep.subr.mxu0 0.0
        %v900 = vand.u32 %v312, 4294901760
        %901 = vmatpush1.msra.mxu0 %v900
        %902 = vmatprep.subr.mxu0 0.0
        %v903 = vand.u32 %v311, 4294901760
        %904 = vmatpush1.msra.mxu0 %v903
        %905 = vmatprep.subr.mxu0 0.0
        %v906 = vand.u32 %v310, 4294901760
        %907 = vmatpush1.msra.mxu0 %v906
        %908 = vmatprep.subr.mxu0 0.0
        %v909 = vand.u32 %v309, 4294901760
        %910 = vmatpush1.msra.mxu0 %v909
        %911 = vmatprep.subr.mxu0 0.0
        %v912 = vand.u32 %v308, 4294901760
        %913 = vmatpush1.msra.mxu0 %v912
        %914 = vmatprep.subr.mxu0 0.0
        %v915 = vand.u32 %v307, 4294901760
        %916 = vmatpush1.msra.mxu0 %v915
        %917 = vmatprep.subr.mxu0 0.0
        %v918 = vand.u32 %v306, 4294901760
        %919 = vmatpush1.msra.mxu0 %v918
        %920 = vmatprep.subr.mxu0 0.0
        %v921 = vand.u32 %v305, 4294901760
        %922 = vmatpush1.msra.mxu0 %v921
        %923 = vmatprep.subr.mxu0 0.0
        %924 = vmatpush2.msra.mxu0 0.0
        %925 = vmatprep.subr.mxu0 0.0
        %926 = vmatpush2.msra.mxu0 0.0
        %927 = vmatprep.subr.mxu0 0.0
        %928 = vmatpush2.msra.mxu0 0.0
        %929 = vmatprep.subr.mxu0 0.0
        %930 = vmatpush2.msra.mxu0 0.0
        %931 = vmatprep.subr.mxu0 0.0
        %932 = vmatpush2.msra.mxu0 0.0
        %933 = vmatprep.subr.mxu0 0.0
        %934 = vmatpush2.msra.mxu0 0.0
        %935 = vmatprep.subr.mxu0 0.0
        %936 = vmatpush2.msra.mxu0 0.0
        %937 = vmatprep.subr.mxu0 0.0
        %938 = vmatpush2.msra.mxu0 0.0
        %939 = vmatprep.subr.mxu0 0.0
        %940 = vmatpush2.msra.mxu0 0.0
        %941 = vmatprep.subr.mxu0 0.0
        %942 = vmatpush2.msra.mxu0 0.0
        %943 = vmatprep.subr.mxu0 0.0
        %944 = vmatpush2.msra.mxu0 0.0
        %945 = vmatprep.subr.mxu0 0.0
        %946 = vmatpush2.msra.mxu0 0.0
        %947 = vmatprep.subr.mxu0 0.0
        %948 = vmatpush2.msra.mxu0 0.0
        %949 = vmatprep.subr.mxu0 0.0
        %950 = vmatpush2.msra.mxu0 0.0
        %951 = vmatprep.subr.mxu0 0.0
        %952 = vmatpush2.msra.mxu0 0.0
        %953 = vmatprep.subr.mxu0 0.0
        %954 = vmatpush2.msra.mxu0 0.0
        %955 = vmatprep.mubr.f32.mxu0 0.0
        %v956 = vand.u32 %v304, 4294901760
        %957 = vmatmul.mubr.f32.gmra.mxu0 %v956
        %v958 = vpop.f32.mrf.mxu0
        %v959 = vadd.f32 %v872, %v958
        %v960 = vpop.f32.mrf.mxu0
        %961 = vdwg.mxu0
        %962 = vmatprep.subr.mxu0 0.0
        %v963 = vand.u32 %v298, 4294901760
        %964 = vmatpush1.msra.mxu0 %v963
        %965 = vmatprep.subr.mxu0 0.0
        %v966 = vand.u32 %v297, 4294901760
        %967 = vmatpush1.msra.mxu0 %v966
        %968 = vmatprep.subr.mxu0 0.0
        %v969 = vand.u32 %v296, 4294901760
        %970 = vmatpush1.msra.mxu0 %v969
        %971 = vmatprep.subr.mxu0 0.0
        %v972 = vand.u32 %v295, 4294901760
        %973 = vmatpush1.msra.mxu0 %v972
        %974 = vmatprep.subr.mxu0 0.0
        %v975 = vand.u32 %v294, 4294901760
        %976 = vmatpush1.msra.mxu0 %v975
        %977 = vmatprep.subr.mxu0 0.0
        %v978 = vand.u32 %v293, 4294901760
        %979 = vmatpush1.msra.mxu0 %v978
        %980 = vmatprep.subr.mxu0 0.0
        %v981 = vand.u32 %v292, 4294901760
        %982 = vmatpush1.msra.mxu0 %v981
        %983 = vmatprep.subr.mxu0 0.0
        %v984 = vand.u32 %v291, 4294901760
        %985 = vmatpush1.msra.mxu0 %v984
        %986 = vmatprep.subr.mxu0 0.0
        %v987 = vand.u32 %v290, 4294901760
        %988 = vmatpush1.msra.mxu0 %v987
        %989 = vmatprep.subr.mxu0 0.0
        %v990 = vand.u32 %v289, 4294901760
        %991 = vmatpush1.msra.mxu0 %v990
        %992 = vmatprep.subr.mxu0 0.0
        %v993 = vand.u32 %v288, 4294901760
        %994 = vmatpush1.msra.mxu0 %v993
        %995 = vmatprep.subr.mxu0 0.0
        %v996 = vand.u32 %v287, 4294901760
        %997 = vmatpush1.msra.mxu0 %v996
        %998 = vmatprep.subr.mxu0 0.0
        %v999 = vand.u32 %v286, 4294901760
        %1000 = vmatpush1.msra.mxu0 %v999
        %1001 = vmatprep.subr.mxu0 0.0
        %v1002 = vand.u32 %v285, 4294901760
        %1003 = vmatpush1.msra.mxu0 %v1002
        %1004 = vmatprep.subr.mxu0 0.0
        %v1005 = vand.u32 %v284, 4294901760
        %1006 = vmatpush1.msra.mxu0 %v1005
        %1007 = vmatprep.subr.mxu0 0.0
        %v1008 = vand.u32 %v283, 4294901760
        %1009 = vmatpush1.msra.mxu0 %v1008
        %1010 = vmatprep.subr.mxu0 0.0
        %1011 = vmatpush2.msra.mxu0 0.0
        %1012 = vmatprep.subr.mxu0 0.0
        %1013 = vmatpush2.msra.mxu0 0.0
        %1014 = vmatprep.subr.mxu0 0.0
        %1015 = vmatpush2.msra.mxu0 0.0
        %1016 = vmatprep.subr.mxu0 0.0
        %1017 = vmatpush2.msra.mxu0 0.0
        %1018 = vmatprep.subr.mxu0 0.0
        %1019 = vmatpush2.msra.mxu0 0.0
        %1020 = vmatprep.subr.mxu0 0.0
        %1021 = vmatpush2.msra.mxu0 0.0
        %1022 = vmatprep.subr.mxu0 0.0
        %1023 = vmatpush2.msra.mxu0 0.0
        %1024 = vmatprep.subr.mxu0 0.0
        %1025 = vmatpush2.msra.mxu0 0.0
        %1026 = vmatprep.subr.mxu0 0.0
        %1027 = vmatpush2.msra.mxu0 0.0
        %1028 = vmatprep.subr.mxu0 0.0
        %1029 = vmatpush2.msra.mxu0 0.0
        %1030 = vmatprep.subr.mxu0 0.0
        %1031 = vmatpush2.msra.mxu0 0.0
        %1032 = vmatprep.subr.mxu0 0.0
        %1033 = vmatpush2.msra.mxu0 0.0
        %1034 = vmatprep.subr.mxu0 0.0
        %1035 = vmatpush2.msra.mxu0 0.0
        %1036 = vmatprep.subr.mxu0 0.0
        %1037 = vmatpush2.msra.mxu0 0.0
        %1038 = vmatprep.subr.mxu0 0.0
        %1039 = vmatpush2.msra.mxu0 0.0
        %1040 = vmatprep.subr.mxu0 0.0
        %1041 = vmatpush2.msra.mxu0 0.0
        %1042 = vmatprep.mubr.f32.mxu0 0.0
        %v1043 = vand.u32 %v282, 4294901760
        %v1044 = vsub.f32 %v282, %v1043
        %v1045 = vand.u32 %v1044, 4294901760
        %v1046 = vsub.f32 %v1044, %v1045
        %v1047 = vand.u32 %v1046, 4294901760
        %1048 = vmatmul.mubr.f32.gmra.mxu0 %v1047
        %v1049 = vpop.f32.mrf.mxu0
        %v1050 = vadd.f32 %v959, %v1049
        %v1051 = vpop.f32.mrf.mxu0
        %1052 = vdwg.mxu0
        %1053 = vmatprep.subr.mxu0 0.0
        %v1054 = vand.u32 %v298, 4294901760
        %v1055 = vsub.f32 %v298, %v1054
        %v1056 = vand.u32 %v1055, 4294901760
        %v1057 = vsub.f32 %v1055, %v1056
        %v1058 = vand.u32 %v1057, 4294901760
        %1059 = vmatpush1.msra.mxu0 %v1058
        %1060 = vmatprep.subr.mxu0 0.0
        %v1061 = vand.u32 %v297, 4294901760
        %v1062 = vsub.f32 %v297, %v1061
        %v1063 = vand.u32 %v1062, 4294901760
        %v1064 = vsub.f32 %v1062, %v1063
        %v1065 = vand.u32 %v1064, 4294901760
        %1066 = vmatpush1.msra.mxu0 %v1065
        %1067 = vmatprep.subr.mxu0 0.0
        %v1068 = vand.u32 %v296, 4294901760
        %v1069 = vsub.f32 %v296, %v1068
        %v1070 = vand.u32 %v1069, 4294901760
        %v1071 = vsub.f32 %v1069, %v1070
        %v1072 = vand.u32 %v1071, 4294901760
        %1073 = vmatpush1.msra.mxu0 %v1072
        %1074 = vmatprep.subr.mxu0 0.0
        %v1075 = vand.u32 %v295, 4294901760
        %v1076 = vsub.f32 %v295, %v1075
        %v1077 = vand.u32 %v1076, 4294901760
        %v1078 = vsub.f32 %v1076, %v1077
        %v1079 = vand.u32 %v1078, 4294901760
        %1080 = vmatpush1.msra.mxu0 %v1079
        %1081 = vmatprep.subr.mxu0 0.0
        %v1082 = vand.u32 %v294, 4294901760
        %v1083 = vsub.f32 %v294, %v1082
        %v1084 = vand.u32 %v1083, 4294901760
        %v1085 = vsub.f32 %v1083, %v1084
        %v1086 = vand.u32 %v1085, 4294901760
        %1087 = vmatpush1.msra.mxu0 %v1086
        %1088 = vmatprep.subr.mxu0 0.0
        %v1089 = vand.u32 %v293, 4294901760
        %v1090 = vsub.f32 %v293, %v1089
        %v1091 = vand.u32 %v1090, 4294901760
        %v1092 = vsub.f32 %v1090, %v1091
        %v1093 = vand.u32 %v1092, 4294901760
        %1094 = vmatpush1.msra.mxu0 %v1093
        %1095 = vmatprep.subr.mxu0 0.0
        %v1096 = vand.u32 %v292, 4294901760
        %v1097 = vsub.f32 %v292, %v1096
        %v1098 = vand.u32 %v1097, 4294901760
        %v1099 = vsub.f32 %v1097, %v1098
        %v1100 = vand.u32 %v1099, 4294901760
        %1101 = vmatpush1.msra.mxu0 %v1100
        %1102 = vmatprep.subr.mxu0 0.0
        %v1103 = vand.u32 %v291, 4294901760
        %v1104 = vsub.f32 %v291, %v1103
        %v1105 = vand.u32 %v1104, 4294901760
        %v1106 = vsub.f32 %v1104, %v1105
        %v1107 = vand.u32 %v1106, 4294901760
        %1108 = vmatpush1.msra.mxu0 %v1107
        %1109 = vmatprep.subr.mxu0 0.0
        %v1110 = vand.u32 %v290, 4294901760
        %v1111 = vsub.f32 %v290, %v1110
        %v1112 = vand.u32 %v1111, 4294901760
        %v1113 = vsub.f32 %v1111, %v1112
        %v1114 = vand.u32 %v1113, 4294901760
        %1115 = vmatpush1.msra.mxu0 %v1114
        %1116 = vmatprep.subr.mxu0 0.0
        %v1117 = vand.u32 %v289, 4294901760
        %v1118 = vsub.f32 %v289, %v1117
        %v1119 = vand.u32 %v1118, 4294901760
        %v1120 = vsub.f32 %v1118, %v1119
        %v1121 = vand.u32 %v1120, 4294901760
        %1122 = vmatpush1.msra.mxu0 %v1121
        %1123 = vmatprep.subr.mxu0 0.0
        %v1124 = vand.u32 %v288, 4294901760
        %v1125 = vsub.f32 %v288, %v1124
        %v1126 = vand.u32 %v1125, 4294901760
        %v1127 = vsub.f32 %v1125, %v1126
        %v1128 = vand.u32 %v1127, 4294901760
        %1129 = vmatpush1.msra.mxu0 %v1128
        %1130 = vmatprep.subr.mxu0 0.0
        %v1131 = vand.u32 %v287, 4294901760
        %v1132 = vsub.f32 %v287, %v1131
        %v1133 = vand.u32 %v1132, 4294901760
        %v1134 = vsub.f32 %v1132, %v1133
        %v1135 = vand.u32 %v1134, 4294901760
        %1136 = vmatpush1.msra.mxu0 %v1135
        %1137 = vmatprep.subr.mxu0 0.0
        %v1138 = vand.u32 %v286, 4294901760
        %v1139 = vsub.f32 %v286, %v1138
        %v1140 = vand.u32 %v1139, 4294901760
        %v1141 = vsub.f32 %v1139, %v1140
        %v1142 = vand.u32 %v1141, 4294901760
        %1143 = vmatpush1.msra.mxu0 %v1142
        %1144 = vmatprep.subr.mxu0 0.0
        %v1145 = vand.u32 %v285, 4294901760
        %v1146 = vsub.f32 %v285, %v1145
        %v1147 = vand.u32 %v1146, 4294901760
        %v1148 = vsub.f32 %v1146, %v1147
        %v1149 = vand.u32 %v1148, 4294901760
        %1150 = vmatpush1.msra.mxu0 %v1149
        %1151 = vmatprep.subr.mxu0 0.0
        %v1152 = vand.u32 %v284, 4294901760
        %v1153 = vsub.f32 %v284, %v1152
        %v1154 = vand.u32 %v1153, 4294901760
        %v1155 = vsub.f32 %v1153, %v1154
        %v1156 = vand.u32 %v1155, 4294901760
        %1157 = vmatpush1.msra.mxu0 %v1156
        %1158 = vmatprep.subr.mxu0 0.0
        %v1159 = vand.u32 %v283, 4294901760
        %v1160 = vsub.f32 %v283, %v1159
        %v1161 = vand.u32 %v1160, 4294901760
        %v1162 = vsub.f32 %v1160, %v1161
        %v1163 = vand.u32 %v1162, 4294901760
        %1164 = vmatpush1.msra.mxu0 %v1163
        %1165 = vmatprep.subr.mxu0 0.0
        %1166 = vmatpush2.msra.mxu0 0.0
        %1167 = vmatprep.subr.mxu0 0.0
        %1168 = vmatpush2.msra.mxu0 0.0
        %1169 = vmatprep.subr.mxu0 0.0
        %1170 = vmatpush2.msra.mxu0 0.0
        %1171 = vmatprep.subr.mxu0 0.0
        %1172 = vmatpush2.msra.mxu0 0.0
        %1173 = vmatprep.subr.mxu0 0.0
        %1174 = vmatpush2.msra.mxu0 0.0
        %1175 = vmatprep.subr.mxu0 0.0
        %1176 = vmatpush2.msra.mxu0 0.0
        %1177 = vmatprep.subr.mxu0 0.0
        %1178 = vmatpush2.msra.mxu0 0.0
        %1179 = vmatprep.subr.mxu0 0.0
        %1180 = vmatpush2.msra.mxu0 0.0
        %1181 = vmatprep.subr.mxu0 0.0
        %1182 = vmatpush2.msra.mxu0 0.0
        %1183 = vmatprep.subr.mxu0 0.0
        %1184 = vmatpush2.msra.mxu0 0.0
        %1185 = vmatprep.subr.mxu0 0.0
        %1186 = vmatpush2.msra.mxu0 0.0
        %1187 = vmatprep.subr.mxu0 0.0
        %1188 = vmatpush2.msra.mxu0 0.0
        %1189 = vmatprep.subr.mxu0 0.0
        %1190 = vmatpush2.msra.mxu0 0.0
        %1191 = vmatprep.subr.mxu0 0.0
        %1192 = vmatpush2.msra.mxu0 0.0
        %1193 = vmatprep.subr.mxu0 0.0
        %1194 = vmatpush2.msra.mxu0 0.0
        %1195 = vmatprep.subr.mxu0 0.0
        %1196 = vmatpush2.msra.mxu0 0.0
        %1197 = vmatprep.mubr.f32.mxu0 0.0
        %v1198 = vand.u32 %v282, 4294901760
        %1199 = vmatmul.mubr.f32.gmra.mxu0 %v1198
        %v1200 = vpop.f32.mrf.mxu0
        %v1201 = vadd.f32 %v1050, %v1200
        %v1202 = vpop.f32.mrf.mxu0
        %1203 = vdwg.mxu0
        %1204 = vmatprep.subr.mxu0 0.0
        %v1205 = vand.u32 %v298, 4294901760
        %v1206 = vsub.f32 %v298, %v1205
        %1207 = vmatpush1.msra.mxu0 %v1206
        %1208 = vmatprep.subr.mxu0 0.0
        %v1209 = vand.u32 %v297, 4294901760
        %v1210 = vsub.f32 %v297, %v1209
        %1211 = vmatpush1.msra.mxu0 %v1210
        %1212 = vmatprep.subr.mxu0 0.0
        %v1213 = vand.u32 %v296, 4294901760
        %v1214 = vsub.f32 %v296, %v1213
        %1215 = vmatpush1.msra.mxu0 %v1214
        %1216 = vmatprep.subr.mxu0 0.0
        %v1217 = vand.u32 %v295, 4294901760
        %v1218 = vsub.f32 %v295, %v1217
        %1219 = vmatpush1.msra.mxu0 %v1218
        %1220 = vmatprep.subr.mxu0 0.0
        %v1221 = vand.u32 %v294, 4294901760
        %v1222 = vsub.f32 %v294, %v1221
        %1223 = vmatpush1.msra.mxu0 %v1222
        %1224 = vmatprep.subr.mxu0 0.0
        %v1225 = vand.u32 %v293, 4294901760
        %v1226 = vsub.f32 %v293, %v1225
        %1227 = vmatpush1.msra.mxu0 %v1226
        %1228 = vmatprep.subr.mxu0 0.0
        %v1229 = vand.u32 %v292, 4294901760
        %v1230 = vsub.f32 %v292, %v1229
        %1231 = vmatpush1.msra.mxu0 %v1230
        %1232 = vmatprep.subr.mxu0 0.0
        %v1233 = vand.u32 %v291, 4294901760
        %v1234 = vsub.f32 %v291, %v1233
        %1235 = vmatpush1.msra.mxu0 %v1234
        %1236 = vmatprep.subr.mxu0 0.0
        %v1237 = vand.u32 %v290, 4294901760
        %v1238 = vsub.f32 %v290, %v1237
        %1239 = vmatpush1.msra.mxu0 %v1238
        %1240 = vmatprep.subr.mxu0 0.0
        %v1241 = vand.u32 %v289, 4294901760
        %v1242 = vsub.f32 %v289, %v1241
        %1243 = vmatpush1.msra.mxu0 %v1242
        %1244 = vmatprep.subr.mxu0 0.0
        %v1245 = vand.u32 %v288, 4294901760
        %v1246 = vsub.f32 %v288, %v1245
        %1247 = vmatpush1.msra.mxu0 %v1246
        %1248 = vmatprep.subr.mxu0 0.0
        %v1249 = vand.u32 %v287, 4294901760
        %v1250 = vsub.f32 %v287, %v1249
        %1251 = vmatpush1.msra.mxu0 %v1250
        %1252 = vmatprep.subr.mxu0 0.0
        %v1253 = vand.u32 %v286, 4294901760
        %v1254 = vsub.f32 %v286, %v1253
        %1255 = vmatpush1.msra.mxu0 %v1254
        %1256 = vmatprep.subr.mxu0 0.0
        %v1257 = vand.u32 %v285, 4294901760
        %v1258 = vsub.f32 %v285, %v1257
        %1259 = vmatpush1.msra.mxu0 %v1258
        %1260 = vmatprep.subr.mxu0 0.0
        %v1261 = vand.u32 %v284, 4294901760
        %v1262 = vsub.f32 %v284, %v1261
        %1263 = vmatpush1.msra.mxu0 %v1262
        %1264 = vmatprep.subr.mxu0 0.0
        %v1265 = vand.u32 %v283, 4294901760
        %v1266 = vsub.f32 %v283, %v1265
        %1267 = vmatpush1.msra.mxu0 %v1266
        %1268 = vmatprep.subr.mxu0 0.0
        %1269 = vmatpush2.msra.mxu0 0.0
        %1270 = vmatprep.subr.mxu0 0.0
        %1271 = vmatpush2.msra.mxu0 0.0
        %1272 = vmatprep.subr.mxu0 0.0
        %1273 = vmatpush2.msra.mxu0 0.0
        %1274 = vmatprep.subr.mxu0 0.0
        %1275 = vmatpush2.msra.mxu0 0.0
        %1276 = vmatprep.subr.mxu0 0.0
        %1277 = vmatpush2.msra.mxu0 0.0
        %1278 = vmatprep.subr.mxu0 0.0
        %1279 = vmatpush2.msra.mxu0 0.0
        %1280 = vmatprep.subr.mxu0 0.0
        %1281 = vmatpush2.msra.mxu0 0.0
        %1282 = vmatprep.subr.mxu0 0.0
        %1283 = vmatpush2.msra.mxu0 0.0
        %1284 = vmatprep.subr.mxu0 0.0
        %1285 = vmatpush2.msra.mxu0 0.0
        %1286 = vmatprep.subr.mxu0 0.0
        %1287 = vmatpush2.msra.mxu0 0.0
        %1288 = vmatprep.subr.mxu0 0.0
        %1289 = vmatpush2.msra.mxu0 0.0
        %1290 = vmatprep.subr.mxu0 0.0
        %1291 = vmatpush2.msra.mxu0 0.0
        %1292 = vmatprep.subr.mxu0 0.0
        %1293 = vmatpush2.msra.mxu0 0.0
        %1294 = vmatprep.subr.mxu0 0.0
        %1295 = vmatpush2.msra.mxu0 0.0
        %1296 = vmatprep.subr.mxu0 0.0
        %1297 = vmatpush2.msra.mxu0 0.0
        %1298 = vmatprep.subr.mxu0 0.0
        %1299 = vmatpush2.msra.mxu0 0.0
        %1300 = vmatprep.mubr.f32.mxu0 0.0
        %v1301 = vand.u32 %v282, 4294901760
        %v1302 = vsub.f32 %v282, %v1301
        %1303 = vmatmul.mubr.f32.gmra.mxu0 %v1302
        %v1304 = vpop.f32.mrf.mxu0
        %v1305 = vadd.f32 %v1201, %v1304
        %v1306 = vpop.f32.mrf.mxu0
        %1307 = vdwg.mxu0
        %1308 = vmatprep.subr.mxu0 0.0
        %v1309 = vand.u32 %v298, 4294901760
        %1310 = vmatpush1.msra.mxu0 %v1309
        %1311 = vmatprep.subr.mxu0 0.0
        %v1312 = vand.u32 %v297, 4294901760
        %1313 = vmatpush1.msra.mxu0 %v1312
        %1314 = vmatprep.subr.mxu0 0.0
        %v1315 = vand.u32 %v296, 4294901760
        %1316 = vmatpush1.msra.mxu0 %v1315
        %1317 = vmatprep.subr.mxu0 0.0
        %v1318 = vand.u32 %v295, 4294901760
        %1319 = vmatpush1.msra.mxu0 %v1318
        %1320 = vmatprep.subr.mxu0 0.0
        %v1321 = vand.u32 %v294, 4294901760
        %1322 = vmatpush1.msra.mxu0 %v1321
        %1323 = vmatprep.subr.mxu0 0.0
        %v1324 = vand.u32 %v293, 4294901760
        %1325 = vmatpush1.msra.mxu0 %v1324
        %1326 = vmatprep.subr.mxu0 0.0
        %v1327 = vand.u32 %v292, 4294901760
        %1328 = vmatpush1.msra.mxu0 %v1327
        %1329 = vmatprep.subr.mxu0 0.0
        %v1330 = vand.u32 %v291, 4294901760
        %1331 = vmatpush1.msra.mxu0 %v1330
        %1332 = vmatprep.subr.mxu0 0.0
        %v1333 = vand.u32 %v290, 4294901760
        %1334 = vmatpush1.msra.mxu0 %v1333
        %1335 = vmatprep.subr.mxu0 0.0
        %v1336 = vand.u32 %v289, 4294901760
        %1337 = vmatpush1.msra.mxu0 %v1336
        %1338 = vmatprep.subr.mxu0 0.0
        %v1339 = vand.u32 %v288, 4294901760
        %1340 = vmatpush1.msra.mxu0 %v1339
        %1341 = vmatprep.subr.mxu0 0.0
        %v1342 = vand.u32 %v287, 4294901760
        %1343 = vmatpush1.msra.mxu0 %v1342
        %1344 = vmatprep.subr.mxu0 0.0
        %v1345 = vand.u32 %v286, 4294901760
        %1346 = vmatpush1.msra.mxu0 %v1345
        %1347 = vmatprep.subr.mxu0 0.0
        %v1348 = vand.u32 %v285, 4294901760
        %1349 = vmatpush1.msra.mxu0 %v1348
        %1350 = vmatprep.subr.mxu0 0.0
        %v1351 = vand.u32 %v284, 4294901760
        %1352 = vmatpush1.msra.mxu0 %v1351
        %1353 = vmatprep.subr.mxu0 0.0
        %v1354 = vand.u32 %v283, 4294901760
        %1355 = vmatpush1.msra.mxu0 %v1354
        %1356 = vmatprep.subr.mxu0 0.0
        %1357 = vmatpush2.msra.mxu0 0.0
        %1358 = vmatprep.subr.mxu0 0.0
        %1359 = vmatpush2.msra.mxu0 0.0
        %1360 = vmatprep.subr.mxu0 0.0
        %1361 = vmatpush2.msra.mxu0 0.0
        %1362 = vmatprep.subr.mxu0 0.0
        %1363 = vmatpush2.msra.mxu0 0.0
        %1364 = vmatprep.subr.mxu0 0.0
        %1365 = vmatpush2.msra.mxu0 0.0
        %1366 = vmatprep.subr.mxu0 0.0
        %1367 = vmatpush2.msra.mxu0 0.0
        %1368 = vmatprep.subr.mxu0 0.0
        %1369 = vmatpush2.msra.mxu0 0.0
        %1370 = vmatprep.subr.mxu0 0.0
        %1371 = vmatpush2.msra.mxu0 0.0
        %1372 = vmatprep.subr.mxu0 0.0
        %1373 = vmatpush2.msra.mxu0 0.0
        %1374 = vmatprep.subr.mxu0 0.0
        %1375 = vmatpush2.msra.mxu0 0.0
        %1376 = vmatprep.subr.mxu0 0.0
        %1377 = vmatpush2.msra.mxu0 0.0
        %1378 = vmatprep.subr.mxu0 0.0
        %1379 = vmatpush2.msra.mxu0 0.0
        %1380 = vmatprep.subr.mxu0 0.0
        %1381 = vmatpush2.msra.mxu0 0.0
        %1382 = vmatprep.subr.mxu0 0.0
        %1383 = vmatpush2.msra.mxu0 0.0
        %1384 = vmatprep.subr.mxu0 0.0
        %1385 = vmatpush2.msra.mxu0 0.0
        %1386 = vmatprep.subr.mxu0 0.0
        %1387 = vmatpush2.msra.mxu0 0.0
        %1388 = vmatprep.mubr.f32.mxu0 0.0
        %v1389 = vand.u32 %v282, 4294901760
        %v1390 = vsub.f32 %v282, %v1389
        %v1391 = vand.u32 %v1390, 4294901760
        %1392 = vmatmul.mubr.f32.gmra.mxu0 %v1391
        %v1393 = vpop.f32.mrf.mxu0
        %v1394 = vadd.f32 %v1305, %v1393
        %v1395 = vpop.f32.mrf.mxu0
        %1396 = vdwg.mxu0
        %1397 = vmatprep.subr.mxu0 0.0
        %v1398 = vand.u32 %v298, 4294901760
        %v1399 = vsub.f32 %v298, %v1398
        %v1400 = vand.u32 %v1399, 4294901760
        %1401 = vmatpush1.msra.mxu0 %v1400
        %1402 = vmatprep.subr.mxu0 0.0
        %v1403 = vand.u32 %v297, 4294901760
        %v1404 = vsub.f32 %v297, %v1403
        %v1405 = vand.u32 %v1404, 4294901760
        %1406 = vmatpush1.msra.mxu0 %v1405
        %1407 = vmatprep.subr.mxu0 0.0
        %v1408 = vand.u32 %v296, 4294901760
        %v1409 = vsub.f32 %v296, %v1408
        %v1410 = vand.u32 %v1409, 4294901760
        %1411 = vmatpush1.msra.mxu0 %v1410
        %1412 = vmatprep.subr.mxu0 0.0
        %v1413 = vand.u32 %v295, 4294901760
        %v1414 = vsub.f32 %v295, %v1413
        %v1415 = vand.u32 %v1414, 4294901760
        %1416 = vmatpush1.msra.mxu0 %v1415
        %1417 = vmatprep.subr.mxu0 0.0
        %v1418 = vand.u32 %v294, 4294901760
        %v1419 = vsub.f32 %v294, %v1418
        %v1420 = vand.u32 %v1419, 4294901760
        %1421 = vmatpush1.msra.mxu0 %v1420
        %1422 = vmatprep.subr.mxu0 0.0
        %v1423 = vand.u32 %v293, 4294901760
        %v1424 = vsub.f32 %v293, %v1423
        %v1425 = vand.u32 %v1424, 4294901760
        %1426 = vmatpush1.msra.mxu0 %v1425
        %1427 = vmatprep.subr.mxu0 0.0
        %v1428 = vand.u32 %v292, 4294901760
        %v1429 = vsub.f32 %v292, %v1428
        %v1430 = vand.u32 %v1429, 4294901760
        %1431 = vmatpush1.msra.mxu0 %v1430
        %1432 = vmatprep.subr.mxu0 0.0
        %v1433 = vand.u32 %v291, 4294901760
        %v1434 = vsub.f32 %v291, %v1433
        %v1435 = vand.u32 %v1434, 4294901760
        %1436 = vmatpush1.msra.mxu0 %v1435
        %1437 = vmatprep.subr.mxu0 0.0
        %v1438 = vand.u32 %v290, 4294901760
        %v1439 = vsub.f32 %v290, %v1438
        %v1440 = vand.u32 %v1439, 4294901760
        %1441 = vmatpush1.msra.mxu0 %v1440
        %1442 = vmatprep.subr.mxu0 0.0
        %v1443 = vand.u32 %v289, 4294901760
        %v1444 = vsub.f32 %v289, %v1443
        %v1445 = vand.u32 %v1444, 4294901760
        %1446 = vmatpush1.msra.mxu0 %v1445
        %1447 = vmatprep.subr.mxu0 0.0
        %v1448 = vand.u32 %v288, 4294901760
        %v1449 = vsub.f32 %v288, %v1448
        %v1450 = vand.u32 %v1449, 4294901760
        %1451 = vmatpush1.msra.mxu0 %v1450
        %1452 = vmatprep.subr.mxu0 0.0
        %v1453 = vand.u32 %v287, 4294901760
        %v1454 = vsub.f32 %v287, %v1453
        %v1455 = vand.u32 %v1454, 4294901760
        %1456 = vmatpush1.msra.mxu0 %v1455
        %1457 = vmatprep.subr.mxu0 0.0
        %v1458 = vand.u32 %v286, 4294901760
        %v1459 = vsub.f32 %v286, %v1458
        %v1460 = vand.u32 %v1459, 4294901760
        %1461 = vmatpush1.msra.mxu0 %v1460
        %1462 = vmatprep.subr.mxu0 0.0
        %v1463 = vand.u32 %v285, 4294901760
        %v1464 = vsub.f32 %v285, %v1463
        %v1465 = vand.u32 %v1464, 4294901760
        %1466 = vmatpush1.msra.mxu0 %v1465
        %1467 = vmatprep.subr.mxu0 0.0
        %v1468 = vand.u32 %v284, 4294901760
        %v1469 = vsub.f32 %v284, %v1468
        %v1470 = vand.u32 %v1469, 4294901760
        %1471 = vmatpush1.msra.mxu0 %v1470
        %1472 = vmatprep.subr.mxu0 0.0
        %v1473 = vand.u32 %v283, 4294901760
        %v1474 = vsub.f32 %v283, %v1473
        %v1475 = vand.u32 %v1474, 4294901760
        %1476 = vmatpush1.msra.mxu0 %v1475
        %1477 = vmatprep.subr.mxu0 0.0
        %1478 = vmatpush2.msra.mxu0 0.0
        %1479 = vmatprep.subr.mxu0 0.0
        %1480 = vmatpush2.msra.mxu0 0.0
        %1481 = vmatprep.subr.mxu0 0.0
        %1482 = vmatpush2.msra.mxu0 0.0
        %1483 = vmatprep.subr.mxu0 0.0
        %1484 = vmatpush2.msra.mxu0 0.0
        %1485 = vmatprep.subr.mxu0 0.0
        %1486 = vmatpush2.msra.mxu0 0.0
        %1487 = vmatprep.subr.mxu0 0.0
        %1488 = vmatpush2.msra.mxu0 0.0
        %1489 = vmatprep.subr.mxu0 0.0
        %1490 = vmatpush2.msra.mxu0 0.0
        %1491 = vmatprep.subr.mxu0 0.0
        %1492 = vmatpush2.msra.mxu0 0.0
        %1493 = vmatprep.subr.mxu0 0.0
        %1494 = vmatpush2.msra.mxu0 0.0
        %1495 = vmatprep.subr.mxu0 0.0
        %1496 = vmatpush2.msra.mxu0 0.0
        %1497 = vmatprep.subr.mxu0 0.0
        %1498 = vmatpush2.msra.mxu0 0.0
        %1499 = vmatprep.subr.mxu0 0.0
        %1500 = vmatpush2.msra.mxu0 0.0
        %1501 = vmatprep.subr.mxu0 0.0
        %1502 = vmatpush2.msra.mxu0 0.0
        %1503 = vmatprep.subr.mxu0 0.0
        %1504 = vmatpush2.msra.mxu0 0.0
        %1505 = vmatprep.subr.mxu0 0.0
        %1506 = vmatpush2.msra.mxu0 0.0
        %1507 = vmatprep.subr.mxu0 0.0
        %1508 = vmatpush2.msra.mxu0 0.0
        %1509 = vmatprep.mubr.f32.mxu0 0.0
        %v1510 = vand.u32 %v282, 4294901760
        %1511 = vmatmul.mubr.f32.gmra.mxu0 %v1510
        %v1512 = vpop.f32.mrf.mxu0
        %v1513 = vadd.f32 %v1394, %v1512
        %v1514 = vpop.f32.mrf.mxu0
        %1515 = vdwg.mxu0
        %1516 = vmatprep.subr.mxu0 0.0
        %v1517 = vand.u32 %v298, 4294901760
        %1518 = vmatpush1.msra.mxu0 %v1517
        %1519 = vmatprep.subr.mxu0 0.0
        %v1520 = vand.u32 %v297, 4294901760
        %1521 = vmatpush1.msra.mxu0 %v1520
        %1522 = vmatprep.subr.mxu0 0.0
        %v1523 = vand.u32 %v296, 4294901760
        %1524 = vmatpush1.msra.mxu0 %v1523
        %1525 = vmatprep.subr.mxu0 0.0
        %v1526 = vand.u32 %v295, 4294901760
        %1527 = vmatpush1.msra.mxu0 %v1526
        %1528 = vmatprep.subr.mxu0 0.0
        %v1529 = vand.u32 %v294, 4294901760
        %1530 = vmatpush1.msra.mxu0 %v1529
        %1531 = vmatprep.subr.mxu0 0.0
        %v1532 = vand.u32 %v293, 4294901760
        %1533 = vmatpush1.msra.mxu0 %v1532
        %1534 = vmatprep.subr.mxu0 0.0
        %v1535 = vand.u32 %v292, 4294901760
        %1536 = vmatpush1.msra.mxu0 %v1535
        %1537 = vmatprep.subr.mxu0 0.0
        %v1538 = vand.u32 %v291, 4294901760
        %1539 = vmatpush1.msra.mxu0 %v1538
        %1540 = vmatprep.subr.mxu0 0.0
        %v1541 = vand.u32 %v290, 4294901760
        %1542 = vmatpush1.msra.mxu0 %v1541
        %1543 = vmatprep.subr.mxu0 0.0
        %v1544 = vand.u32 %v289, 4294901760
        %1545 = vmatpush1.msra.mxu0 %v1544
        %1546 = vmatprep.subr.mxu0 0.0
        %v1547 = vand.u32 %v288, 4294901760
        %1548 = vmatpush1.msra.mxu0 %v1547
        %1549 = vmatprep.subr.mxu0 0.0
        %v1550 = vand.u32 %v287, 4294901760
        %1551 = vmatpush1.msra.mxu0 %v1550
        %1552 = vmatprep.subr.mxu0 0.0
        %v1553 = vand.u32 %v286, 4294901760
        %1554 = vmatpush1.msra.mxu0 %v1553
        %1555 = vmatprep.subr.mxu0 0.0
        %v1556 = vand.u32 %v285, 4294901760
        %1557 = vmatpush1.msra.mxu0 %v1556
        %1558 = vmatprep.subr.mxu0 0.0
        %v1559 = vand.u32 %v284, 4294901760
        %1560 = vmatpush1.msra.mxu0 %v1559
        %1561 = vmatprep.subr.mxu0 0.0
        %v1562 = vand.u32 %v283, 4294901760
        %1563 = vmatpush1.msra.mxu0 %v1562
        %1564 = vmatprep.subr.mxu0 0.0
        %1565 = vmatpush2.msra.mxu0 0.0
        %1566 = vmatprep.subr.mxu0 0.0
        %1567 = vmatpush2.msra.mxu0 0.0
        %1568 = vmatprep.subr.mxu0 0.0
        %1569 = vmatpush2.msra.mxu0 0.0
        %1570 = vmatprep.subr.mxu0 0.0
        %1571 = vmatpush2.msra.mxu0 0.0
        %1572 = vmatprep.subr.mxu0 0.0
        %1573 = vmatpush2.msra.mxu0 0.0
        %1574 = vmatprep.subr.mxu0 0.0
        %1575 = vmatpush2.msra.mxu0 0.0
        %1576 = vmatprep.subr.mxu0 0.0
        %1577 = vmatpush2.msra.mxu0 0.0
        %1578 = vmatprep.subr.mxu0 0.0
        %1579 = vmatpush2.msra.mxu0 0.0
        %1580 = vmatprep.subr.mxu0 0.0
        %1581 = vmatpush2.msra.mxu0 0.0
        %1582 = vmatprep.subr.mxu0 0.0
        %1583 = vmatpush2.msra.mxu0 0.0
        %1584 = vmatprep.subr.mxu0 0.0
        %1585 = vmatpush2.msra.mxu0 0.0
        %1586 = vmatprep.subr.mxu0 0.0
        %1587 = vmatpush2.msra.mxu0 0.0
        %1588 = vmatprep.subr.mxu0 0.0
        %1589 = vmatpush2.msra.mxu0 0.0
        %1590 = vmatprep.subr.mxu0 0.0
        %1591 = vmatpush2.msra.mxu0 0.0
        %1592 = vmatprep.subr.mxu0 0.0
        %1593 = vmatpush2.msra.mxu0 0.0
        %1594 = vmatprep.subr.mxu0 0.0
        %1595 = vmatpush2.msra.mxu0 0.0
        %1596 = vmatprep.mubr.f32.mxu0 0.0
        %v1597 = vand.u32 %v282, 4294901760
        %1598 = vmatmul.mubr.f32.gmra.mxu0 %v1597
        %v1599 = vpop.f32.mrf.mxu0
        %v1600 = vadd.f32 %v1513, %v1599
        %v1601 = vpop.f32.mrf.mxu0
        %1602 = vdwg.mxu0
        %1603 = vset.pattern.permute.xlu0 2
        %1604 = vperm.xlu0 %1603, %v274
        %v1605 = vpop.permute.xlu0 %1604
        %vm1606 = vcmp.eq.s32.totalorder %v1605, %v276
        %v1607 = vsel %vm1606, 1, 0
        %v1608 = vcvt.s32.f32 %v1607
        %v1609 = vld [vmem:[%s3] sm:$0xff]
        %v1610 = vld [vmem:[%s3 + $0x8] sm:$0xff]
        %v1611 = vld [vmem:[%s3 + $0x10] sm:$0xff]
        %v1612 = vld [vmem:[%s3 + $0x18] sm:$0xff]
        %v1613 = vld [vmem:[%s3 + $0x20] sm:$0xff]
        %v1614 = vld [vmem:[%s3 + $0x28] sm:$0xff]
        %v1615 = vld [vmem:[%s3 + $0x30] sm:$0xff]
        %v1616 = vld [vmem:[%s3 + $0x38] sm:$0xff]
        %v1617 = vld [vmem:[%s3 + $0x40] sm:$0xff]
        %v1618 = vld [vmem:[%s3 + $0x48] sm:$0xff]
        %v1619 = vld [vmem:[%s3 + $0x50] sm:$0xff]
        %v1620 = vld [vmem:[%s3 + $0x58] sm:$0xff]
        %v1621 = vld [vmem:[%s3 + $0x60] sm:$0xff]
        %v1622 = vld [vmem:[%s3 + $0x68] sm:$0xff]
        %v1623 = vld [vmem:[%s3 + $0x70] sm:$0xff]
        %v1624 = vld [vmem:[%s3 + $0x78] sm:$0xff]
        %1625 = vset.pattern.permute.xlu0 3
        %1626 = vperm.xlu0 %1625, %v274
        %v1627 = vpop.permute.xlu0 %1626
        %vm1628 = vcmp.eq.s32.totalorder %v1627, %v276
        %v1629 = vsel %vm1628, 1, 0
        %v1630 = vcvt.s32.f32 %v1629
        %v1631 = vld [vmem:[%s4] sm:$0xff]
        %v1632 = vld [vmem:[%s4 + $0x8] sm:$0xff]
        %v1633 = vld [vmem:[%s4 + $0x10] sm:$0xff]
        %v1634 = vld [vmem:[%s4 + $0x18] sm:$0xff]
        %v1635 = vld [vmem:[%s4 + $0x20] sm:$0xff]
        %v1636 = vld [vmem:[%s4 + $0x28] sm:$0xff]
        %v1637 = vld [vmem:[%s4 + $0x30] sm:$0xff]
        %v1638 = vld [vmem:[%s4 + $0x38] sm:$0xff]
        %v1639 = vld [vmem:[%s4 + $0x40] sm:$0xff]
        %v1640 = vld [vmem:[%s4 + $0x48] sm:$0xff]
        %v1641 = vld [vmem:[%s4 + $0x50] sm:$0xff]
        %v1642 = vld [vmem:[%s4 + $0x58] sm:$0xff]
        %v1643 = vld [vmem:[%s4 + $0x60] sm:$0xff]
        %v1644 = vld [vmem:[%s4 + $0x68] sm:$0xff]
        %v1645 = vld [vmem:[%s4 + $0x70] sm:$0xff]
        %v1646 = vld [vmem:[%s4 + $0x78] sm:$0xff]
        %1647 = vmatprep.subr.mxu0 0.0
        %v1648 = vand.u32 %v1646, 4294901760
        %1649 = vmatpush1.msra.mxu0 %v1648
        %1650 = vmatprep.subr.mxu0 0.0
        %v1651 = vand.u32 %v1645, 4294901760
        %1652 = vmatpush1.msra.mxu0 %v1651
        %1653 = vmatprep.subr.mxu0 0.0
        %v1654 = vand.u32 %v1644, 4294901760
        %1655 = vmatpush1.msra.mxu0 %v1654
        %1656 = vmatprep.subr.mxu0 0.0
        %v1657 = vand.u32 %v1643, 4294901760
        %1658 = vmatpush1.msra.mxu0 %v1657
        %1659 = vmatprep.subr.mxu0 0.0
        %v1660 = vand.u32 %v1642, 4294901760
        %1661 = vmatpush1.msra.mxu0 %v1660
        %1662 = vmatprep.subr.mxu0 0.0
        %v1663 = vand.u32 %v1641, 4294901760
        %1664 = vmatpush1.msra.mxu0 %v1663
        %1665 = vmatprep.subr.mxu0 0.0
        %v1666 = vand.u32 %v1640, 4294901760
        %1667 = vmatpush1.msra.mxu0 %v1666
        %1668 = vmatprep.subr.mxu0 0.0
        %v1669 = vand.u32 %v1639, 4294901760
        %1670 = vmatpush1.msra.mxu0 %v1669
        %1671 = vmatprep.subr.mxu0 0.0
        %v1672 = vand.u32 %v1638, 4294901760
        %1673 = vmatpush1.msra.mxu0 %v1672
        %1674 = vmatprep.subr.mxu0 0.0
        %v1675 = vand.u32 %v1637, 4294901760
        %1676 = vmatpush1.msra.mxu0 %v1675
        %1677 = vmatprep.subr.mxu0 0.0
        %v1678 = vand.u32 %v1636, 4294901760
        %1679 = vmatpush1.msra.mxu0 %v1678
        %1680 = vmatprep.subr.mxu0 0.0
        %v1681 = vand.u32 %v1635, 4294901760
        %1682 = vmatpush1.msra.mxu0 %v1681
        %1683 = vmatprep.subr.mxu0 0.0
        %v1684 = vand.u32 %v1634, 4294901760
        %1685 = vmatpush1.msra.mxu0 %v1684
        %1686 = vmatprep.subr.mxu0 0.0
        %v1687 = vand.u32 %v1633, 4294901760
        %1688 = vmatpush1.msra.mxu0 %v1687
        %1689 = vmatprep.subr.mxu0 0.0
        %v1690 = vand.u32 %v1632, 4294901760
        %1691 = vmatpush1.msra.mxu0 %v1690
        %1692 = vmatprep.subr.mxu0 0.0
        %v1693 = vand.u32 %v1631, 4294901760
        %1694 = vmatpush1.msra.mxu0 %v1693
        %1695 = vmatprep.subr.mxu0 0.0
        %1696 = vmatpush2.msra.mxu0 0.0
        %1697 = vmatprep.subr.mxu0 0.0
        %1698 = vmatpush2.msra.mxu0 0.0
        %1699 = vmatprep.subr.mxu0 0.0
        %1700 = vmatpush2.msra.mxu0 0.0
        %1701 = vmatprep.subr.mxu0 0.0
        %1702 = vmatpush2.msra.mxu0 0.0
        %1703 = vmatprep.subr.mxu0 0.0
        %1704 = vmatpush2.msra.mxu0 0.0
        %1705 = vmatprep.subr.mxu0 0.0
        %1706 = vmatpush2.msra.mxu0 0.0
        %1707 = vmatprep.subr.mxu0 0.0
        %1708 = vmatpush2.msra.mxu0 0.0
        %1709 = vmatprep.subr.mxu0 0.0
        %1710 = vmatpush2.msra.mxu0 0.0
        %1711 = vmatprep.subr.mxu0 0.0
        %1712 = vmatpush2.msra.mxu0 0.0
        %1713 = vmatprep.subr.mxu0 0.0
        %1714 = vmatpush2.msra.mxu0 0.0
        %1715 = vmatprep.subr.mxu0 0.0
        %1716 = vmatpush2.msra.mxu0 0.0
        %1717 = vmatprep.subr.mxu0 0.0
        %1718 = vmatpush2.msra.mxu0 0.0
        %1719 = vmatprep.subr.mxu0 0.0
        %1720 = vmatpush2.msra.mxu0 0.0
        %1721 = vmatprep.subr.mxu0 0.0
        %1722 = vmatpush2.msra.mxu0 0.0
        %1723 = vmatprep.subr.mxu0 0.0
        %1724 = vmatpush2.msra.mxu0 0.0
        %1725 = vmatprep.subr.mxu0 0.0
        %1726 = vmatpush2.msra.mxu0 0.0
        %1727 = vmatprep.mubr.f32.mxu0 0.0
        %v1728 = vand.u32 %v1630, 4294901760
        %v1729 = vsub.f32 %v1630, %v1728
        %v1730 = vand.u32 %v1729, 4294901760
        %v1731 = vsub.f32 %v1729, %v1730
        %v1732 = vand.u32 %v1731, 4294901760
        %1733 = vmatmul.mubr.f32.gmra.mxu0 %v1732
        %v1734 = vpop.f32.mrf.mxu0
        %v1735 = vadd.f32 0.0, %v1734
        %v1736 = vpop.f32.mrf.mxu0
        %1737 = vdwg.mxu0
        %1738 = vmatprep.subr.mxu0 0.0
        %v1739 = vand.u32 %v1646, 4294901760
        %v1740 = vsub.f32 %v1646, %v1739
        %v1741 = vand.u32 %v1740, 4294901760
        %v1742 = vsub.f32 %v1740, %v1741
        %v1743 = vand.u32 %v1742, 4294901760
        %1744 = vmatpush1.msra.mxu0 %v1743
        %1745 = vmatprep.subr.mxu0 0.0
        %v1746 = vand.u32 %v1645, 4294901760
        %v1747 = vsub.f32 %v1645, %v1746
        %v1748 = vand.u32 %v1747, 4294901760
        %v1749 = vsub.f32 %v1747, %v1748
        %v1750 = vand.u32 %v1749, 4294901760
        %1751 = vmatpush1.msra.mxu0 %v1750
        %1752 = vmatprep.subr.mxu0 0.0
        %v1753 = vand.u32 %v1644, 4294901760
        %v1754 = vsub.f32 %v1644, %v1753
        %v1755 = vand.u32 %v1754, 4294901760
        %v1756 = vsub.f32 %v1754, %v1755
        %v1757 = vand.u32 %v1756, 4294901760
        %1758 = vmatpush1.msra.mxu0 %v1757
        %1759 = vmatprep.subr.mxu0 0.0
        %v1760 = vand.u32 %v1643, 4294901760
        %v1761 = vsub.f32 %v1643, %v1760
        %v1762 = vand.u32 %v1761, 4294901760
        %v1763 = vsub.f32 %v1761, %v1762
        %v1764 = vand.u32 %v1763, 4294901760
        %1765 = vmatpush1.msra.mxu0 %v1764
        %1766 = vmatprep.subr.mxu0 0.0
        %v1767 = vand.u32 %v1642, 4294901760
        %v1768 = vsub.f32 %v1642, %v1767
        %v1769 = vand.u32 %v1768, 4294901760
        %v1770 = vsub.f32 %v1768, %v1769
        %v1771 = vand.u32 %v1770, 4294901760
        %1772 = vmatpush1.msra.mxu0 %v1771
        %1773 = vmatprep.subr.mxu0 0.0
        %v1774 = vand.u32 %v1641, 4294901760
        %v1775 = vsub.f32 %v1641, %v1774
        %v1776 = vand.u32 %v1775, 4294901760
        %v1777 = vsub.f32 %v1775, %v1776
        %v1778 = vand.u32 %v1777, 4294901760
        %1779 = vmatpush1.msra.mxu0 %v1778
        %1780 = vmatprep.subr.mxu0 0.0
        %v1781 = vand.u32 %v1640, 4294901760
        %v1782 = vsub.f32 %v1640, %v1781
        %v1783 = vand.u32 %v1782, 4294901760
        %v1784 = vsub.f32 %v1782, %v1783
        %v1785 = vand.u32 %v1784, 4294901760
        %1786 = vmatpush1.msra.mxu0 %v1785
        %1787 = vmatprep.subr.mxu0 0.0
        %v1788 = vand.u32 %v1639, 4294901760
        %v1789 = vsub.f32 %v1639, %v1788
        %v1790 = vand.u32 %v1789, 4294901760
        %v1791 = vsub.f32 %v1789, %v1790
        %v1792 = vand.u32 %v1791, 4294901760
        %1793 = vmatpush1.msra.mxu0 %v1792
        %1794 = vmatprep.subr.mxu0 0.0
        %v1795 = vand.u32 %v1638, 4294901760
        %v1796 = vsub.f32 %v1638, %v1795
        %v1797 = vand.u32 %v1796, 4294901760
        %v1798 = vsub.f32 %v1796, %v1797
        %v1799 = vand.u32 %v1798, 4294901760
        %1800 = vmatpush1.msra.mxu0 %v1799
        %1801 = vmatprep.subr.mxu0 0.0
        %v1802 = vand.u32 %v1637, 4294901760
        %v1803 = vsub.f32 %v1637, %v1802
        %v1804 = vand.u32 %v1803, 4294901760
        %v1805 = vsub.f32 %v1803, %v1804
        %v1806 = vand.u32 %v1805, 4294901760
        %1807 = vmatpush1.msra.mxu0 %v1806
        %1808 = vmatprep.subr.mxu0 0.0
        %v1809 = vand.u32 %v1636, 4294901760
        %v1810 = vsub.f32 %v1636, %v1809
        %v1811 = vand.u32 %v1810, 4294901760
        %v1812 = vsub.f32 %v1810, %v1811
        %v1813 = vand.u32 %v1812, 4294901760
        %1814 = vmatpush1.msra.mxu0 %v1813
        %1815 = vmatprep.subr.mxu0 0.0
        %v1816 = vand.u32 %v1635, 4294901760
        %v1817 = vsub.f32 %v1635, %v1816
        %v1818 = vand.u32 %v1817, 4294901760
        %v1819 = vsub.f32 %v1817, %v1818
        %v1820 = vand.u32 %v1819, 4294901760
        %1821 = vmatpush1.msra.mxu0 %v1820
        %1822 = vmatprep.subr.mxu0 0.0
        %v1823 = vand.u32 %v1634, 4294901760
        %v1824 = vsub.f32 %v1634, %v1823
        %v1825 = vand.u32 %v1824, 4294901760
        %v1826 = vsub.f32 %v1824, %v1825
        %v1827 = vand.u32 %v1826, 4294901760
        %1828 = vmatpush1.msra.mxu0 %v1827
        %1829 = vmatprep.subr.mxu0 0.0
        %v1830 = vand.u32 %v1633, 4294901760
        %v1831 = vsub.f32 %v1633, %v1830
        %v1832 = vand.u32 %v1831, 4294901760
        %v1833 = vsub.f32 %v1831, %v1832
        %v1834 = vand.u32 %v1833, 4294901760
        %1835 = vmatpush1.msra.mxu0 %v1834
        %1836 = vmatprep.subr.mxu0 0.0
        %v1837 = vand.u32 %v1632, 4294901760
        %v1838 = vsub.f32 %v1632, %v1837
        %v1839 = vand.u32 %v1838, 4294901760
        %v1840 = vsub.f32 %v1838, %v1839
        %v1841 = vand.u32 %v1840, 4294901760
        %1842 = vmatpush1.msra.mxu0 %v1841
        %1843 = vmatprep.subr.mxu0 0.0
        %v1844 = vand.u32 %v1631, 4294901760
        %v1845 = vsub.f32 %v1631, %v1844
        %v1846 = vand.u32 %v1845, 4294901760
        %v1847 = vsub.f32 %v1845, %v1846
        %v1848 = vand.u32 %v1847, 4294901760
        %1849 = vmatpush1.msra.mxu0 %v1848
        %1850 = vmatprep.subr.mxu0 0.0
        %1851 = vmatpush2.msra.mxu0 0.0
        %1852 = vmatprep.subr.mxu0 0.0
        %1853 = vmatpush2.msra.mxu0 0.0
        %1854 = vmatprep.subr.mxu0 0.0
        %1855 = vmatpush2.msra.mxu0 0.0
        %1856 = vmatprep.subr.mxu0 0.0
        %1857 = vmatpush2.msra.mxu0 0.0
        %1858 = vmatprep.subr.mxu0 0.0
        %1859 = vmatpush2.msra.mxu0 0.0
        %1860 = vmatprep.subr.mxu0 0.0
        %1861 = vmatpush2.msra.mxu0 0.0
        %1862 = vmatprep.subr.mxu0 0.0
        %1863 = vmatpush2.msra.mxu0 0.0
        %1864 = vmatprep.subr.mxu0 0.0
        %1865 = vmatpush2.msra.mxu0 0.0
        %1866 = vmatprep.subr.mxu0 0.0
        %1867 = vmatpush2.msra.mxu0 0.0
        %1868 = vmatprep.subr.mxu0 0.0
        %1869 = vmatpush2.msra.mxu0 0.0
        %1870 = vmatprep.subr.mxu0 0.0
        %1871 = vmatpush2.msra.mxu0 0.0
        %1872 = vmatprep.subr.mxu0 0.0
        %1873 = vmatpush2.msra.mxu0 0.0
        %1874 = vmatprep.subr.mxu0 0.0
        %1875 = vmatpush2.msra.mxu0 0.0
        %1876 = vmatprep.subr.mxu0 0.0
        %1877 = vmatpush2.msra.mxu0 0.0
        %1878 = vmatprep.subr.mxu0 0.0
        %1879 = vmatpush2.msra.mxu0 0.0
        %1880 = vmatprep.subr.mxu0 0.0
        %1881 = vmatpush2.msra.mxu0 0.0
        %1882 = vmatprep.mubr.f32.mxu0 0.0
        %v1883 = vand.u32 %v1630, 4294901760
        %1884 = vmatmul.mubr.f32.gmra.mxu0 %v1883
        %v1885 = vpop.f32.mrf.mxu0
        %v1886 = vadd.f32 %v1735, %v1885
        %v1887 = vpop.f32.mrf.mxu0
        %1888 = vdwg.mxu0
        %1889 = vmatprep.subr.mxu0 0.0
        %v1890 = vand.u32 %v1646, 4294901760
        %v1891 = vsub.f32 %v1646, %v1890
        %1892 = vmatpush1.msra.mxu0 %v1891
        %1893 = vmatprep.subr.mxu0 0.0
        %v1894 = vand.u32 %v1645, 4294901760
        %v1895 = vsub.f32 %v1645, %v1894
        %1896 = vmatpush1.msra.mxu0 %v1895
        %1897 = vmatprep.subr.mxu0 0.0
        %v1898 = vand.u32 %v1644, 4294901760
        %v1899 = vsub.f32 %v1644, %v1898
        %1900 = vmatpush1.msra.mxu0 %v1899
        %1901 = vmatprep.subr.mxu0 0.0
        %v1902 = vand.u32 %v1643, 4294901760
        %v1903 = vsub.f32 %v1643, %v1902
        %1904 = vmatpush1.msra.mxu0 %v1903
        %1905 = vmatprep.subr.mxu0 0.0
        %v1906 = vand.u32 %v1642, 4294901760
        %v1907 = vsub.f32 %v1642, %v1906
        %1908 = vmatpush1.msra.mxu0 %v1907
        %1909 = vmatprep.subr.mxu0 0.0
        %v1910 = vand.u32 %v1641, 4294901760
        %v1911 = vsub.f32 %v1641, %v1910
        %1912 = vmatpush1.msra.mxu0 %v1911
        %1913 = vmatprep.subr.mxu0 0.0
        %v1914 = vand.u32 %v1640, 4294901760
        %v1915 = vsub.f32 %v1640, %v1914
        %1916 = vmatpush1.msra.mxu0 %v1915
        %1917 = vmatprep.subr.mxu0 0.0
        %v1918 = vand.u32 %v1639, 4294901760
        %v1919 = vsub.f32 %v1639, %v1918
        %1920 = vmatpush1.msra.mxu0 %v1919
        %1921 = vmatprep.subr.mxu0 0.0
        %v1922 = vand.u32 %v1638, 4294901760
        %v1923 = vsub.f32 %v1638, %v1922
        %1924 = vmatpush1.msra.mxu0 %v1923
        %1925 = vmatprep.subr.mxu0 0.0
        %v1926 = vand.u32 %v1637, 4294901760
        %v1927 = vsub.f32 %v1637, %v1926
        %1928 = vmatpush1.msra.mxu0 %v1927
        %1929 = vmatprep.subr.mxu0 0.0
        %v1930 = vand.u32 %v1636, 4294901760
        %v1931 = vsub.f32 %v1636, %v1930
        %1932 = vmatpush1.msra.mxu0 %v1931
        %1933 = vmatprep.subr.mxu0 0.0
        %v1934 = vand.u32 %v1635, 4294901760
        %v1935 = vsub.f32 %v1635, %v1934
        %1936 = vmatpush1.msra.mxu0 %v1935
        %1937 = vmatprep.subr.mxu0 0.0
        %v1938 = vand.u32 %v1634, 4294901760
        %v1939 = vsub.f32 %v1634, %v1938
        %1940 = vmatpush1.msra.mxu0 %v1939
        %1941 = vmatprep.subr.mxu0 0.0
        %v1942 = vand.u32 %v1633, 4294901760
        %v1943 = vsub.f32 %v1633, %v1942
        %1944 = vmatpush1.msra.mxu0 %v1943
        %1945 = vmatprep.subr.mxu0 0.0
        %v1946 = vand.u32 %v1632, 4294901760
        %v1947 = vsub.f32 %v1632, %v1946
        %1948 = vmatpush1.msra.mxu0 %v1947
        %1949 = vmatprep.subr.mxu0 0.0
        %v1950 = vand.u32 %v1631, 4294901760
        %v1951 = vsub.f32 %v1631, %v1950
        %1952 = vmatpush1.msra.mxu0 %v1951
        %1953 = vmatprep.subr.mxu0 0.0
        %1954 = vmatpush2.msra.mxu0 0.0
        %1955 = vmatprep.subr.mxu0 0.0
        %1956 = vmatpush2.msra.mxu0 0.0
        %1957 = vmatprep.subr.mxu0 0.0
        %1958 = vmatpush2.msra.mxu0 0.0
        %1959 = vmatprep.subr.mxu0 0.0
        %1960 = vmatpush2.msra.mxu0 0.0
        %1961 = vmatprep.subr.mxu0 0.0
        %1962 = vmatpush2.msra.mxu0 0.0
        %1963 = vmatprep.subr.mxu0 0.0
        %1964 = vmatpush2.msra.mxu0 0.0
        %1965 = vmatprep.subr.mxu0 0.0
        %1966 = vmatpush2.msra.mxu0 0.0
        %1967 = vmatprep.subr.mxu0 0.0
        %1968 = vmatpush2.msra.mxu0 0.0
        %1969 = vmatprep.subr.mxu0 0.0
        %1970 = vmatpush2.msra.mxu0 0.0
        %1971 = vmatprep.subr.mxu0 0.0
        %1972 = vmatpush2.msra.mxu0 0.0
        %1973 = vmatprep.subr.mxu0 0.0
        %1974 = vmatpush2.msra.mxu0 0.0
        %1975 = vmatprep.subr.mxu0 0.0
        %1976 = vmatpush2.msra.mxu0 0.0
        %1977 = vmatprep.subr.mxu0 0.0
        %1978 = vmatpush2.msra.mxu0 0.0
        %1979 = vmatprep.subr.mxu0 0.0
        %1980 = vmatpush2.msra.mxu0 0.0
        %1981 = vmatprep.subr.mxu0 0.0
        %1982 = vmatpush2.msra.mxu0 0.0
        %1983 = vmatprep.subr.mxu0 0.0
        %1984 = vmatpush2.msra.mxu0 0.0
        %1985 = vmatprep.mubr.f32.mxu0 0.0
        %v1986 = vand.u32 %v1630, 4294901760
        %v1987 = vsub.f32 %v1630, %v1986
        %1988 = vmatmul.mubr.f32.gmra.mxu0 %v1987
        %v1989 = vpop.f32.mrf.mxu0
        %v1990 = vadd.f32 %v1886, %v1989
        %v1991 = vpop.f32.mrf.mxu0
        %1992 = vdwg.mxu0
        %1993 = vmatprep.subr.mxu0 0.0
        %v1994 = vand.u32 %v1646, 4294901760
        %1995 = vmatpush1.msra.mxu0 %v1994
        %1996 = vmatprep.subr.mxu0 0.0
        %v1997 = vand.u32 %v1645, 4294901760
        %1998 = vmatpush1.msra.mxu0 %v1997
        %1999 = vmatprep.subr.mxu0 0.0
        %v2000 = vand.u32 %v1644, 4294901760
        %2001 = vmatpush1.msra.mxu0 %v2000
        %2002 = vmatprep.subr.mxu0 0.0
        %v2003 = vand.u32 %v1643, 4294901760
        %2004 = vmatpush1.msra.mxu0 %v2003
        %2005 = vmatprep.subr.mxu0 0.0
        %v2006 = vand.u32 %v1642, 4294901760
        %2007 = vmatpush1.msra.mxu0 %v2006
        %2008 = vmatprep.subr.mxu0 0.0
        %v2009 = vand.u32 %v1641, 4294901760
        %2010 = vmatpush1.msra.mxu0 %v2009
        %2011 = vmatprep.subr.mxu0 0.0
        %v2012 = vand.u32 %v1640, 4294901760
        %2013 = vmatpush1.msra.mxu0 %v2012
        %2014 = vmatprep.subr.mxu0 0.0
        %v2015 = vand.u32 %v1639, 4294901760
        %2016 = vmatpush1.msra.mxu0 %v2015
        %2017 = vmatprep.subr.mxu0 0.0
        %v2018 = vand.u32 %v1638, 4294901760
        %2019 = vmatpush1.msra.mxu0 %v2018
        %2020 = vmatprep.subr.mxu0 0.0
        %v2021 = vand.u32 %v1637, 4294901760
        %2022 = vmatpush1.msra.mxu0 %v2021
        %2023 = vmatprep.subr.mxu0 0.0
        %v2024 = vand.u32 %v1636, 4294901760
        %2025 = vmatpush1.msra.mxu0 %v2024
        %2026 = vmatprep.subr.mxu0 0.0
        %v2027 = vand.u32 %v1635, 4294901760
        %2028 = vmatpush1.msra.mxu0 %v2027
        %2029 = vmatprep.subr.mxu0 0.0
        %v2030 = vand.u32 %v1634, 4294901760
        %2031 = vmatpush1.msra.mxu0 %v2030
        %2032 = vmatprep.subr.mxu0 0.0
        %v2033 = vand.u32 %v1633, 4294901760
        %2034 = vmatpush1.msra.mxu0 %v2033
        %2035 = vmatprep.subr.mxu0 0.0
        %v2036 = vand.u32 %v1632, 4294901760
        %2037 = vmatpush1.msra.mxu0 %v2036
        %2038 = vmatprep.subr.mxu0 0.0
        %v2039 = vand.u32 %v1631, 4294901760
        %2040 = vmatpush1.msra.mxu0 %v2039
        %2041 = vmatprep.subr.mxu0 0.0
        %2042 = vmatpush2.msra.mxu0 0.0
        %2043 = vmatprep.subr.mxu0 0.0
        %2044 = vmatpush2.msra.mxu0 0.0
        %2045 = vmatprep.subr.mxu0 0.0
        %2046 = vmatpush2.msra.mxu0 0.0
        %2047 = vmatprep.subr.mxu0 0.0
        %2048 = vmatpush2.msra.mxu0 0.0
        %2049 = vmatprep.subr.mxu0 0.0
        %2050 = vmatpush2.msra.mxu0 0.0
        %2051 = vmatprep.subr.mxu0 0.0
        %2052 = vmatpush2.msra.mxu0 0.0
        %2053 = vmatprep.subr.mxu0 0.0
        %2054 = vmatpush2.msra.mxu0 0.0
        %2055 = vmatprep.subr.mxu0 0.0
        %2056 = vmatpush2.msra.mxu0 0.0
        %2057 = vmatprep.subr.mxu0 0.0
        %2058 = vmatpush2.msra.mxu0 0.0
        %2059 = vmatprep.subr.mxu0 0.0
        %2060 = vmatpush2.msra.mxu0 0.0
        %2061 = vmatprep.subr.mxu0 0.0
        %2062 = vmatpush2.msra.mxu0 0.0
        %2063 = vmatprep.subr.mxu0 0.0
        %2064 = vmatpush2.msra.mxu0 0.0
        %2065 = vmatprep.subr.mxu0 0.0
        %2066 = vmatpush2.msra.mxu0 0.0
        %2067 = vmatprep.subr.mxu0 0.0
        %2068 = vmatpush2.msra.mxu0 0.0
        %2069 = vmatprep.subr.mxu0 0.0
        %2070 = vmatpush2.msra.mxu0 0.0
        %2071 = vmatprep.subr.mxu0 0.0
        %2072 = vmatpush2.msra.mxu0 0.0
        %2073 = vmatprep.mubr.f32.mxu0 0.0
        %v2074 = vand.u32 %v1630, 4294901760
        %v2075 = vsub.f32 %v1630, %v2074
        %v2076 = vand.u32 %v2075, 4294901760
        %2077 = vmatmul.mubr.f32.gmra.mxu0 %v2076
        %v2078 = vpop.f32.mrf.mxu0
        %v2079 = vadd.f32 %v1990, %v2078
        %v2080 = vpop.f32.mrf.mxu0
        %2081 = vdwg.mxu0
        %2082 = vmatprep.subr.mxu0 0.0
        %v2083 = vand.u32 %v1646, 4294901760
        %v2084 = vsub.f32 %v1646, %v2083
        %v2085 = vand.u32 %v2084, 4294901760
        %2086 = vmatpush1.msra.mxu0 %v2085
        %2087 = vmatprep.subr.mxu0 0.0
        %v2088 = vand.u32 %v1645, 4294901760
        %v2089 = vsub.f32 %v1645, %v2088
        %v2090 = vand.u32 %v2089, 4294901760
        %2091 = vmatpush1.msra.mxu0 %v2090
        %2092 = vmatprep.subr.mxu0 0.0
        %v2093 = vand.u32 %v1644, 4294901760
        %v2094 = vsub.f32 %v1644, %v2093
        %v2095 = vand.u32 %v2094, 4294901760
        %2096 = vmatpush1.msra.mxu0 %v2095
        %2097 = vmatprep.subr.mxu0 0.0
        %v2098 = vand.u32 %v1643, 4294901760
        %v2099 = vsub.f32 %v1643, %v2098
        %v2100 = vand.u32 %v2099, 4294901760
        %2101 = vmatpush1.msra.mxu0 %v2100
        %2102 = vmatprep.subr.mxu0 0.0
        %v2103 = vand.u32 %v1642, 4294901760
        %v2104 = vsub.f32 %v1642, %v2103
        %v2105 = vand.u32 %v2104, 4294901760
        %2106 = vmatpush1.msra.mxu0 %v2105
        %2107 = vmatprep.subr.mxu0 0.0
        %v2108 = vand.u32 %v1641, 4294901760
        %v2109 = vsub.f32 %v1641, %v2108
        %v2110 = vand.u32 %v2109, 4294901760
        %2111 = vmatpush1.msra.mxu0 %v2110
        %2112 = vmatprep.subr.mxu0 0.0
        %v2113 = vand.u32 %v1640, 4294901760
        %v2114 = vsub.f32 %v1640, %v2113
        %v2115 = vand.u32 %v2114, 4294901760
        %2116 = vmatpush1.msra.mxu0 %v2115
        %2117 = vmatprep.subr.mxu0 0.0
        %v2118 = vand.u32 %v1639, 4294901760
        %v2119 = vsub.f32 %v1639, %v2118
        %v2120 = vand.u32 %v2119, 4294901760
        %2121 = vmatpush1.msra.mxu0 %v2120
        %2122 = vmatprep.subr.mxu0 0.0
        %v2123 = vand.u32 %v1638, 4294901760
        %v2124 = vsub.f32 %v1638, %v2123
        %v2125 = vand.u32 %v2124, 4294901760
        %2126 = vmatpush1.msra.mxu0 %v2125
        %2127 = vmatprep.subr.mxu0 0.0
        %v2128 = vand.u32 %v1637, 4294901760
        %v2129 = vsub.f32 %v1637, %v2128
        %v2130 = vand.u32 %v2129, 4294901760
        %2131 = vmatpush1.msra.mxu0 %v2130
        %2132 = vmatprep.subr.mxu0 0.0
        %v2133 = vand.u32 %v1636, 4294901760
        %v2134 = vsub.f32 %v1636, %v2133
        %v2135 = vand.u32 %v2134, 4294901760
        %2136 = vmatpush1.msra.mxu0 %v2135
        %2137 = vmatprep.subr.mxu0 0.0
        %v2138 = vand.u32 %v1635, 4294901760
        %v2139 = vsub.f32 %v1635, %v2138
        %v2140 = vand.u32 %v2139, 4294901760
        %2141 = vmatpush1.msra.mxu0 %v2140
        %2142 = vmatprep.subr.mxu0 0.0
        %v2143 = vand.u32 %v1634, 4294901760
        %v2144 = vsub.f32 %v1634, %v2143
        %v2145 = vand.u32 %v2144, 4294901760
        %2146 = vmatpush1.msra.mxu0 %v2145
        %2147 = vmatprep.subr.mxu0 0.0
        %v2148 = vand.u32 %v1633, 4294901760
        %v2149 = vsub.f32 %v1633, %v2148
        %v2150 = vand.u32 %v2149, 4294901760
        %2151 = vmatpush1.msra.mxu0 %v2150
        %2152 = vmatprep.subr.mxu0 0.0
        %v2153 = vand.u32 %v1632, 4294901760
        %v2154 = vsub.f32 %v1632, %v2153
        %v2155 = vand.u32 %v2154, 4294901760
        %2156 = vmatpush1.msra.mxu0 %v2155
        %2157 = vmatprep.subr.mxu0 0.0
        %v2158 = vand.u32 %v1631, 4294901760
        %v2159 = vsub.f32 %v1631, %v2158
        %v2160 = vand.u32 %v2159, 4294901760
        %2161 = vmatpush1.msra.mxu0 %v2160
        %2162 = vmatprep.subr.mxu0 0.0
        %2163 = vmatpush2.msra.mxu0 0.0
        %2164 = vmatprep.subr.mxu0 0.0
        %2165 = vmatpush2.msra.mxu0 0.0
        %2166 = vmatprep.subr.mxu0 0.0
        %2167 = vmatpush2.msra.mxu0 0.0
        %2168 = vmatprep.subr.mxu0 0.0
        %2169 = vmatpush2.msra.mxu0 0.0
        %2170 = vmatprep.subr.mxu0 0.0
        %2171 = vmatpush2.msra.mxu0 0.0
        %2172 = vmatprep.subr.mxu0 0.0
        %2173 = vmatpush2.msra.mxu0 0.0
        %2174 = vmatprep.subr.mxu0 0.0
        %2175 = vmatpush2.msra.mxu0 0.0
        %2176 = vmatprep.subr.mxu0 0.0
        %2177 = vmatpush2.msra.mxu0 0.0
        %2178 = vmatprep.subr.mxu0 0.0
        %2179 = vmatpush2.msra.mxu0 0.0
        %2180 = vmatprep.subr.mxu0 0.0
        %2181 = vmatpush2.msra.mxu0 0.0
        %2182 = vmatprep.subr.mxu0 0.0
        %2183 = vmatpush2.msra.mxu0 0.0
        %2184 = vmatprep.subr.mxu0 0.0
        %2185 = vmatpush2.msra.mxu0 0.0
        %2186 = vmatprep.subr.mxu0 0.0
        %2187 = vmatpush2.msra.mxu0 0.0
        %2188 = vmatprep.subr.mxu0 0.0
        %2189 = vmatpush2.msra.mxu0 0.0
        %2190 = vmatprep.subr.mxu0 0.0
        %2191 = vmatpush2.msra.mxu0 0.0
        %2192 = vmatprep.subr.mxu0 0.0
        %2193 = vmatpush2.msra.mxu0 0.0
        %2194 = vmatprep.mubr.f32.mxu0 0.0
        %v2195 = vand.u32 %v1630, 4294901760
        %2196 = vmatmul.mubr.f32.gmra.mxu0 %v2195
        %v2197 = vpop.f32.mrf.mxu0
        %v2198 = vadd.f32 %v2079, %v2197
        %v2199 = vpop.f32.mrf.mxu0
        %2200 = vdwg.mxu0
        %2201 = vmatprep.subr.mxu0 0.0
        %v2202 = vand.u32 %v1646, 4294901760
        %2203 = vmatpush1.msra.mxu0 %v2202
        %2204 = vmatprep.subr.mxu0 0.0
        %v2205 = vand.u32 %v1645, 4294901760
        %2206 = vmatpush1.msra.mxu0 %v2205
        %2207 = vmatprep.subr.mxu0 0.0
        %v2208 = vand.u32 %v1644, 4294901760
        %2209 = vmatpush1.msra.mxu0 %v2208
        %2210 = vmatprep.subr.mxu0 0.0
        %v2211 = vand.u32 %v1643, 4294901760
        %2212 = vmatpush1.msra.mxu0 %v2211
        %2213 = vmatprep.subr.mxu0 0.0
        %v2214 = vand.u32 %v1642, 4294901760
        %2215 = vmatpush1.msra.mxu0 %v2214
        %2216 = vmatprep.subr.mxu0 0.0
        %v2217 = vand.u32 %v1641, 4294901760
        %2218 = vmatpush1.msra.mxu0 %v2217
        %2219 = vmatprep.subr.mxu0 0.0
        %v2220 = vand.u32 %v1640, 4294901760
        %2221 = vmatpush1.msra.mxu0 %v2220
        %2222 = vmatprep.subr.mxu0 0.0
        %v2223 = vand.u32 %v1639, 4294901760
        %2224 = vmatpush1.msra.mxu0 %v2223
        %2225 = vmatprep.subr.mxu0 0.0
        %v2226 = vand.u32 %v1638, 4294901760
        %2227 = vmatpush1.msra.mxu0 %v2226
        %2228 = vmatprep.subr.mxu0 0.0
        %v2229 = vand.u32 %v1637, 4294901760
        %2230 = vmatpush1.msra.mxu0 %v2229
        %2231 = vmatprep.subr.mxu0 0.0
        %v2232 = vand.u32 %v1636, 4294901760
        %2233 = vmatpush1.msra.mxu0 %v2232
        %2234 = vmatprep.subr.mxu0 0.0
        %v2235 = vand.u32 %v1635, 4294901760
        %2236 = vmatpush1.msra.mxu0 %v2235
        %2237 = vmatprep.subr.mxu0 0.0
        %v2238 = vand.u32 %v1634, 4294901760
        %2239 = vmatpush1.msra.mxu0 %v2238
        %2240 = vmatprep.subr.mxu0 0.0
        %v2241 = vand.u32 %v1633, 4294901760
        %2242 = vmatpush1.msra.mxu0 %v2241
        %2243 = vmatprep.subr.mxu0 0.0
        %v2244 = vand.u32 %v1632, 4294901760
        %2245 = vmatpush1.msra.mxu0 %v2244
        %2246 = vmatprep.subr.mxu0 0.0
        %v2247 = vand.u32 %v1631, 4294901760
        %2248 = vmatpush1.msra.mxu0 %v2247
        %2249 = vmatprep.subr.mxu0 0.0
        %2250 = vmatpush2.msra.mxu0 0.0
        %2251 = vmatprep.subr.mxu0 0.0
        %2252 = vmatpush2.msra.mxu0 0.0
        %2253 = vmatprep.subr.mxu0 0.0
        %2254 = vmatpush2.msra.mxu0 0.0
        %2255 = vmatprep.subr.mxu0 0.0
        %2256 = vmatpush2.msra.mxu0 0.0
        %2257 = vmatprep.subr.mxu0 0.0
        %2258 = vmatpush2.msra.mxu0 0.0
        %2259 = vmatprep.subr.mxu0 0.0
        %2260 = vmatpush2.msra.mxu0 0.0
        %2261 = vmatprep.subr.mxu0 0.0
        %2262 = vmatpush2.msra.mxu0 0.0
        %2263 = vmatprep.subr.mxu0 0.0
        %2264 = vmatpush2.msra.mxu0 0.0
        %2265 = vmatprep.subr.mxu0 0.0
        %2266 = vmatpush2.msra.mxu0 0.0
        %2267 = vmatprep.subr.mxu0 0.0
        %2268 = vmatpush2.msra.mxu0 0.0
        %2269 = vmatprep.subr.mxu0 0.0
        %2270 = vmatpush2.msra.mxu0 0.0
        %2271 = vmatprep.subr.mxu0 0.0
        %2272 = vmatpush2.msra.mxu0 0.0
        %2273 = vmatprep.subr.mxu0 0.0
        %2274 = vmatpush2.msra.mxu0 0.0
        %2275 = vmatprep.subr.mxu0 0.0
        %2276 = vmatpush2.msra.mxu0 0.0
        %2277 = vmatprep.subr.mxu0 0.0
        %2278 = vmatpush2.msra.mxu0 0.0
        %2279 = vmatprep.subr.mxu0 0.0
        %2280 = vmatpush2.msra.mxu0 0.0
        %2281 = vmatprep.mubr.f32.mxu0 0.0
        %v2282 = vand.u32 %v1630, 4294901760
        %2283 = vmatmul.mubr.f32.gmra.mxu0 %v2282
        %v2284 = vpop.f32.mrf.mxu0
        %v2285 = vadd.f32 %v2198, %v2284
        %v2286 = vpop.f32.mrf.mxu0
        %2287 = vdwg.mxu0
        %2288 = vmatprep.subr.mxu0 0.0
        %v2289 = vand.u32 %v1624, 4294901760
        %2290 = vmatpush1.msra.mxu0 %v2289
        %2291 = vmatprep.subr.mxu0 0.0
        %v2292 = vand.u32 %v1623, 4294901760
        %2293 = vmatpush1.msra.mxu0 %v2292
        %2294 = vmatprep.subr.mxu0 0.0
        %v2295 = vand.u32 %v1622, 4294901760
        %2296 = vmatpush1.msra.mxu0 %v2295
        %2297 = vmatprep.subr.mxu0 0.0
        %v2298 = vand.u32 %v1621, 4294901760
        %2299 = vmatpush1.msra.mxu0 %v2298
        %2300 = vmatprep.subr.mxu0 0.0
        %v2301 = vand.u32 %v1620, 4294901760
        %2302 = vmatpush1.msra.mxu0 %v2301
        %2303 = vmatprep.subr.mxu0 0.0
        %v2304 = vand.u32 %v1619, 4294901760
        %2305 = vmatpush1.msra.mxu0 %v2304
        %2306 = vmatprep.subr.mxu0 0.0
        %v2307 = vand.u32 %v1618, 4294901760
        %2308 = vmatpush1.msra.mxu0 %v2307
        %2309 = vmatprep.subr.mxu0 0.0
        %v2310 = vand.u32 %v1617, 4294901760
        %2311 = vmatpush1.msra.mxu0 %v2310
        %2312 = vmatprep.subr.mxu0 0.0
        %v2313 = vand.u32 %v1616, 4294901760
        %2314 = vmatpush1.msra.mxu0 %v2313
        %2315 = vmatprep.subr.mxu0 0.0
        %v2316 = vand.u32 %v1615, 4294901760
        %2317 = vmatpush1.msra.mxu0 %v2316
        %2318 = vmatprep.subr.mxu0 0.0
        %v2319 = vand.u32 %v1614, 4294901760
        %2320 = vmatpush1.msra.mxu0 %v2319
        %2321 = vmatprep.subr.mxu0 0.0
        %v2322 = vand.u32 %v1613, 4294901760
        %2323 = vmatpush1.msra.mxu0 %v2322
        %2324 = vmatprep.subr.mxu0 0.0
        %v2325 = vand.u32 %v1612, 4294901760
        %2326 = vmatpush1.msra.mxu0 %v2325
        %2327 = vmatprep.subr.mxu0 0.0
        %v2328 = vand.u32 %v1611, 4294901760
        %2329 = vmatpush1.msra.mxu0 %v2328
        %2330 = vmatprep.subr.mxu0 0.0
        %v2331 = vand.u32 %v1610, 4294901760
        %2332 = vmatpush1.msra.mxu0 %v2331
        %2333 = vmatprep.subr.mxu0 0.0
        %v2334 = vand.u32 %v1609, 4294901760
        %2335 = vmatpush1.msra.mxu0 %v2334
        %2336 = vmatprep.subr.mxu0 0.0
        %2337 = vmatpush2.msra.mxu0 0.0
        %2338 = vmatprep.subr.mxu0 0.0
        %2339 = vmatpush2.msra.mxu0 0.0
        %2340 = vmatprep.subr.mxu0 0.0
        %2341 = vmatpush2.msra.mxu0 0.0
        %2342 = vmatprep.subr.mxu0 0.0
        %2343 = vmatpush2.msra.mxu0 0.0
        %2344 = vmatprep.subr.mxu0 0.0
        %2345 = vmatpush2.msra.mxu0 0.0
        %2346 = vmatprep.subr.mxu0 0.0
        %2347 = vmatpush2.msra.mxu0 0.0
        %2348 = vmatprep.subr.mxu0 0.0
        %2349 = vmatpush2.msra.mxu0 0.0
        %2350 = vmatprep.subr.mxu0 0.0
        %2351 = vmatpush2.msra.mxu0 0.0
        %2352 = vmatprep.subr.mxu0 0.0
        %2353 = vmatpush2.msra.mxu0 0.0
        %2354 = vmatprep.subr.mxu0 0.0
        %2355 = vmatpush2.msra.mxu0 0.0
        %2356 = vmatprep.subr.mxu0 0.0
        %2357 = vmatpush2.msra.mxu0 0.0
        %2358 = vmatprep.subr.mxu0 0.0
        %2359 = vmatpush2.msra.mxu0 0.0
        %2360 = vmatprep.subr.mxu0 0.0
        %2361 = vmatpush2.msra.mxu0 0.0
        %2362 = vmatprep.subr.mxu0 0.0
        %2363 = vmatpush2.msra.mxu0 0.0
        %2364 = vmatprep.subr.mxu0 0.0
        %2365 = vmatpush2.msra.mxu0 0.0
        %2366 = vmatprep.subr.mxu0 0.0
        %2367 = vmatpush2.msra.mxu0 0.0
        %2368 = vmatprep.mubr.f32.mxu0 0.0
        %v2369 = vand.u32 %v1608, 4294901760
        %v2370 = vsub.f32 %v1608, %v2369
        %v2371 = vand.u32 %v2370, 4294901760
        %v2372 = vsub.f32 %v2370, %v2371
        %v2373 = vand.u32 %v2372, 4294901760
        %2374 = vmatmul.mubr.f32.gmra.mxu0 %v2373
        %v2375 = vpop.f32.mrf.mxu0
        %v2376 = vadd.f32 %v2285, %v2375
        %v2377 = vpop.f32.mrf.mxu0
        %2378 = vdwg.mxu0
        %2379 = vmatprep.subr.mxu0 0.0
        %v2380 = vand.u32 %v1624, 4294901760
        %v2381 = vsub.f32 %v1624, %v2380
        %v2382 = vand.u32 %v2381, 4294901760
        %v2383 = vsub.f32 %v2381, %v2382
        %v2384 = vand.u32 %v2383, 4294901760
        %2385 = vmatpush1.msra.mxu0 %v2384
        %2386 = vmatprep.subr.mxu0 0.0
        %v2387 = vand.u32 %v1623, 4294901760
        %v2388 = vsub.f32 %v1623, %v2387
        %v2389 = vand.u32 %v2388, 4294901760
        %v2390 = vsub.f32 %v2388, %v2389
        %v2391 = vand.u32 %v2390, 4294901760
        %2392 = vmatpush1.msra.mxu0 %v2391
        %2393 = vmatprep.subr.mxu0 0.0
        %v2394 = vand.u32 %v1622, 4294901760
        %v2395 = vsub.f32 %v1622, %v2394
        %v2396 = vand.u32 %v2395, 4294901760
        %v2397 = vsub.f32 %v2395, %v2396
        %v2398 = vand.u32 %v2397, 4294901760
        %2399 = vmatpush1.msra.mxu0 %v2398
        %2400 = vmatprep.subr.mxu0 0.0
        %v2401 = vand.u32 %v1621, 4294901760
        %v2402 = vsub.f32 %v1621, %v2401
        %v2403 = vand.u32 %v2402, 4294901760
        %v2404 = vsub.f32 %v2402, %v2403
        %v2405 = vand.u32 %v2404, 4294901760
        %2406 = vmatpush1.msra.mxu0 %v2405
        %2407 = vmatprep.subr.mxu0 0.0
        %v2408 = vand.u32 %v1620, 4294901760
        %v2409 = vsub.f32 %v1620, %v2408
        %v2410 = vand.u32 %v2409, 4294901760
        %v2411 = vsub.f32 %v2409, %v2410
        %v2412 = vand.u32 %v2411, 4294901760
        %2413 = vmatpush1.msra.mxu0 %v2412
        %2414 = vmatprep.subr.mxu0 0.0
        %v2415 = vand.u32 %v1619, 4294901760
        %v2416 = vsub.f32 %v1619, %v2415
        %v2417 = vand.u32 %v2416, 4294901760
        %v2418 = vsub.f32 %v2416, %v2417
        %v2419 = vand.u32 %v2418, 4294901760
        %2420 = vmatpush1.msra.mxu0 %v2419
        %2421 = vmatprep.subr.mxu0 0.0
        %v2422 = vand.u32 %v1618, 4294901760
        %v2423 = vsub.f32 %v1618, %v2422
        %v2424 = vand.u32 %v2423, 4294901760
        %v2425 = vsub.f32 %v2423, %v2424
        %v2426 = vand.u32 %v2425, 4294901760
        %2427 = vmatpush1.msra.mxu0 %v2426
        %2428 = vmatprep.subr.mxu0 0.0
        %v2429 = vand.u32 %v1617, 4294901760
        %v2430 = vsub.f32 %v1617, %v2429
        %v2431 = vand.u32 %v2430, 4294901760
        %v2432 = vsub.f32 %v2430, %v2431
        %v2433 = vand.u32 %v2432, 4294901760
        %2434 = vmatpush1.msra.mxu0 %v2433
        %2435 = vmatprep.subr.mxu0 0.0
        %v2436 = vand.u32 %v1616, 4294901760
        %v2437 = vsub.f32 %v1616, %v2436
        %v2438 = vand.u32 %v2437, 4294901760
        %v2439 = vsub.f32 %v2437, %v2438
        %v2440 = vand.u32 %v2439, 4294901760
        %2441 = vmatpush1.msra.mxu0 %v2440
        %2442 = vmatprep.subr.mxu0 0.0
        %v2443 = vand.u32 %v1615, 4294901760
        %v2444 = vsub.f32 %v1615, %v2443
        %v2445 = vand.u32 %v2444, 4294901760
        %v2446 = vsub.f32 %v2444, %v2445
        %v2447 = vand.u32 %v2446, 4294901760
        %2448 = vmatpush1.msra.mxu0 %v2447
        %2449 = vmatprep.subr.mxu0 0.0
        %v2450 = vand.u32 %v1614, 4294901760
        %v2451 = vsub.f32 %v1614, %v2450
        %v2452 = vand.u32 %v2451, 4294901760
        %v2453 = vsub.f32 %v2451, %v2452
        %v2454 = vand.u32 %v2453, 4294901760
        %2455 = vmatpush1.msra.mxu0 %v2454
        %2456 = vmatprep.subr.mxu0 0.0
        %v2457 = vand.u32 %v1613, 4294901760
        %v2458 = vsub.f32 %v1613, %v2457
        %v2459 = vand.u32 %v2458, 4294901760
        %v2460 = vsub.f32 %v2458, %v2459
        %v2461 = vand.u32 %v2460, 4294901760
        %2462 = vmatpush1.msra.mxu0 %v2461
        %2463 = vmatprep.subr.mxu0 0.0
        %v2464 = vand.u32 %v1612, 4294901760
        %v2465 = vsub.f32 %v1612, %v2464
        %v2466 = vand.u32 %v2465, 4294901760
        %v2467 = vsub.f32 %v2465, %v2466
        %v2468 = vand.u32 %v2467, 4294901760
        %2469 = vmatpush1.msra.mxu0 %v2468
        %2470 = vmatprep.subr.mxu0 0.0
        %v2471 = vand.u32 %v1611, 4294901760
        %v2472 = vsub.f32 %v1611, %v2471
        %v2473 = vand.u32 %v2472, 4294901760
        %v2474 = vsub.f32 %v2472, %v2473
        %v2475 = vand.u32 %v2474, 4294901760
        %2476 = vmatpush1.msra.mxu0 %v2475
        %2477 = vmatprep.subr.mxu0 0.0
        %v2478 = vand.u32 %v1610, 4294901760
        %v2479 = vsub.f32 %v1610, %v2478
        %v2480 = vand.u32 %v2479, 4294901760
        %v2481 = vsub.f32 %v2479, %v2480
        %v2482 = vand.u32 %v2481, 4294901760
        %2483 = vmatpush1.msra.mxu0 %v2482
        %2484 = vmatprep.subr.mxu0 0.0
        %v2485 = vand.u32 %v1609, 4294901760
        %v2486 = vsub.f32 %v1609, %v2485
        %v2487 = vand.u32 %v2486, 4294901760
        %v2488 = vsub.f32 %v2486, %v2487
        %v2489 = vand.u32 %v2488, 4294901760
        %2490 = vmatpush1.msra.mxu0 %v2489
        %2491 = vmatprep.subr.mxu0 0.0
        %2492 = vmatpush2.msra.mxu0 0.0
        %2493 = vmatprep.subr.mxu0 0.0
        %2494 = vmatpush2.msra.mxu0 0.0
        %2495 = vmatprep.subr.mxu0 0.0
        %2496 = vmatpush2.msra.mxu0 0.0
        %2497 = vmatprep.subr.mxu0 0.0
        %2498 = vmatpush2.msra.mxu0 0.0
        %2499 = vmatprep.subr.mxu0 0.0
        %2500 = vmatpush2.msra.mxu0 0.0
        %2501 = vmatprep.subr.mxu0 0.0
        %2502 = vmatpush2.msra.mxu0 0.0
        %2503 = vmatprep.subr.mxu0 0.0
        %2504 = vmatpush2.msra.mxu0 0.0
        %2505 = vmatprep.subr.mxu0 0.0
        %2506 = vmatpush2.msra.mxu0 0.0
        %2507 = vmatprep.subr.mxu0 0.0
        %2508 = vmatpush2.msra.mxu0 0.0
        %2509 = vmatprep.subr.mxu0 0.0
        %2510 = vmatpush2.msra.mxu0 0.0
        %2511 = vmatprep.subr.mxu0 0.0
        %2512 = vmatpush2.msra.mxu0 0.0
        %2513 = vmatprep.subr.mxu0 0.0
        %2514 = vmatpush2.msra.mxu0 0.0
        %2515 = vmatprep.subr.mxu0 0.0
        %2516 = vmatpush2.msra.mxu0 0.0
        %2517 = vmatprep.subr.mxu0 0.0
        %2518 = vmatpush2.msra.mxu0 0.0
        %2519 = vmatprep.subr.mxu0 0.0
        %2520 = vmatpush2.msra.mxu0 0.0
        %2521 = vmatprep.subr.mxu0 0.0
        %2522 = vmatpush2.msra.mxu0 0.0
        %2523 = vmatprep.mubr.f32.mxu0 0.0
        %v2524 = vand.u32 %v1608, 4294901760
        %2525 = vmatmul.mubr.f32.gmra.mxu0 %v2524
        %v2526 = vpop.f32.mrf.mxu0
        %v2527 = vadd.f32 %v2376, %v2526
        %v2528 = vpop.f32.mrf.mxu0
        %2529 = vdwg.mxu0
        %2530 = vmatprep.subr.mxu0 0.0
        %v2531 = vand.u32 %v1624, 4294901760
        %v2532 = vsub.f32 %v1624, %v2531
        %2533 = vmatpush1.msra.mxu0 %v2532
        %2534 = vmatprep.subr.mxu0 0.0
        %v2535 = vand.u32 %v1623, 4294901760
        %v2536 = vsub.f32 %v1623, %v2535
        %2537 = vmatpush1.msra.mxu0 %v2536
        %2538 = vmatprep.subr.mxu0 0.0
        %v2539 = vand.u32 %v1622, 4294901760
        %v2540 = vsub.f32 %v1622, %v2539
        %2541 = vmatpush1.msra.mxu0 %v2540
        %2542 = vmatprep.subr.mxu0 0.0
        %v2543 = vand.u32 %v1621, 4294901760
        %v2544 = vsub.f32 %v1621, %v2543
        %2545 = vmatpush1.msra.mxu0 %v2544
        %2546 = vmatprep.subr.mxu0 0.0
        %v2547 = vand.u32 %v1620, 4294901760
        %v2548 = vsub.f32 %v1620, %v2547
        %2549 = vmatpush1.msra.mxu0 %v2548
        %2550 = vmatprep.subr.mxu0 0.0
        %v2551 = vand.u32 %v1619, 4294901760
        %v2552 = vsub.f32 %v1619, %v2551
        %2553 = vmatpush1.msra.mxu0 %v2552
        %2554 = vmatprep.subr.mxu0 0.0
        %v2555 = vand.u32 %v1618, 4294901760
        %v2556 = vsub.f32 %v1618, %v2555
        %2557 = vmatpush1.msra.mxu0 %v2556
        %2558 = vmatprep.subr.mxu0 0.0
        %v2559 = vand.u32 %v1617, 4294901760
        %v2560 = vsub.f32 %v1617, %v2559
        %2561 = vmatpush1.msra.mxu0 %v2560
        %2562 = vmatprep.subr.mxu0 0.0
        %v2563 = vand.u32 %v1616, 4294901760
        %v2564 = vsub.f32 %v1616, %v2563
        %2565 = vmatpush1.msra.mxu0 %v2564
        %2566 = vmatprep.subr.mxu0 0.0
        %v2567 = vand.u32 %v1615, 4294901760
        %v2568 = vsub.f32 %v1615, %v2567
        %2569 = vmatpush1.msra.mxu0 %v2568
        %2570 = vmatprep.subr.mxu0 0.0
        %v2571 = vand.u32 %v1614, 4294901760
        %v2572 = vsub.f32 %v1614, %v2571
        %2573 = vmatpush1.msra.mxu0 %v2572
        %2574 = vmatprep.subr.mxu0 0.0
        %v2575 = vand.u32 %v1613, 4294901760
        %v2576 = vsub.f32 %v1613, %v2575
        %2577 = vmatpush1.msra.mxu0 %v2576
        %2578 = vmatprep.subr.mxu0 0.0
        %v2579 = vand.u32 %v1612, 4294901760
        %v2580 = vsub.f32 %v1612, %v2579
        %2581 = vmatpush1.msra.mxu0 %v2580
        %2582 = vmatprep.subr.mxu0 0.0
        %v2583 = vand.u32 %v1611, 4294901760
        %v2584 = vsub.f32 %v1611, %v2583
        %2585 = vmatpush1.msra.mxu0 %v2584
        %2586 = vmatprep.subr.mxu0 0.0
        %v2587 = vand.u32 %v1610, 4294901760
        %v2588 = vsub.f32 %v1610, %v2587
        %2589 = vmatpush1.msra.mxu0 %v2588
        %2590 = vmatprep.subr.mxu0 0.0
        %v2591 = vand.u32 %v1609, 4294901760
        %v2592 = vsub.f32 %v1609, %v2591
        %2593 = vmatpush1.msra.mxu0 %v2592
        %2594 = vmatprep.subr.mxu0 0.0
        %2595 = vmatpush2.msra.mxu0 0.0
        %2596 = vmatprep.subr.mxu0 0.0
        %2597 = vmatpush2.msra.mxu0 0.0
        %2598 = vmatprep.subr.mxu0 0.0
        %2599 = vmatpush2.msra.mxu0 0.0
        %2600 = vmatprep.subr.mxu0 0.0
        %2601 = vmatpush2.msra.mxu0 0.0
        %2602 = vmatprep.subr.mxu0 0.0
        %2603 = vmatpush2.msra.mxu0 0.0
        %2604 = vmatprep.subr.mxu0 0.0
        %2605 = vmatpush2.msra.mxu0 0.0
        %2606 = vmatprep.subr.mxu0 0.0
        %2607 = vmatpush2.msra.mxu0 0.0
        %2608 = vmatprep.subr.mxu0 0.0
        %2609 = vmatpush2.msra.mxu0 0.0
        %2610 = vmatprep.subr.mxu0 0.0
        %2611 = vmatpush2.msra.mxu0 0.0
        %2612 = vmatprep.subr.mxu0 0.0
        %2613 = vmatpush2.msra.mxu0 0.0
        %2614 = vmatprep.subr.mxu0 0.0
        %2615 = vmatpush2.msra.mxu0 0.0
        %2616 = vmatprep.subr.mxu0 0.0
        %2617 = vmatpush2.msra.mxu0 0.0
        %2618 = vmatprep.subr.mxu0 0.0
        %2619 = vmatpush2.msra.mxu0 0.0
        %2620 = vmatprep.subr.mxu0 0.0
        %2621 = vmatpush2.msra.mxu0 0.0
        %2622 = vmatprep.subr.mxu0 0.0
        %2623 = vmatpush2.msra.mxu0 0.0
        %2624 = vmatprep.subr.mxu0 0.0
        %2625 = vmatpush2.msra.mxu0 0.0
        %2626 = vmatprep.mubr.f32.mxu0 0.0
        %v2627 = vand.u32 %v1608, 4294901760
        %v2628 = vsub.f32 %v1608, %v2627
        %2629 = vmatmul.mubr.f32.gmra.mxu0 %v2628
        %v2630 = vpop.f32.mrf.mxu0
        %v2631 = vadd.f32 %v2527, %v2630
        %v2632 = vpop.f32.mrf.mxu0
        %2633 = vdwg.mxu0
        %2634 = vmatprep.subr.mxu0 0.0
        %v2635 = vand.u32 %v1624, 4294901760
        %2636 = vmatpush1.msra.mxu0 %v2635
        %2637 = vmatprep.subr.mxu0 0.0
        %v2638 = vand.u32 %v1623, 4294901760
        %2639 = vmatpush1.msra.mxu0 %v2638
        %2640 = vmatprep.subr.mxu0 0.0
        %v2641 = vand.u32 %v1622, 4294901760
        %2642 = vmatpush1.msra.mxu0 %v2641
        %2643 = vmatprep.subr.mxu0 0.0
        %v2644 = vand.u32 %v1621, 4294901760
        %2645 = vmatpush1.msra.mxu0 %v2644
        %2646 = vmatprep.subr.mxu0 0.0
        %v2647 = vand.u32 %v1620, 4294901760
        %2648 = vmatpush1.msra.mxu0 %v2647
        %2649 = vmatprep.subr.mxu0 0.0
        %v2650 = vand.u32 %v1619, 4294901760
        %2651 = vmatpush1.msra.mxu0 %v2650
        %2652 = vmatprep.subr.mxu0 0.0
        %v2653 = vand.u32 %v1618, 4294901760
        %2654 = vmatpush1.msra.mxu0 %v2653
        %2655 = vmatprep.subr.mxu0 0.0
        %v2656 = vand.u32 %v1617, 4294901760
        %2657 = vmatpush1.msra.mxu0 %v2656
        %2658 = vmatprep.subr.mxu0 0.0
        %v2659 = vand.u32 %v1616, 4294901760
        %2660 = vmatpush1.msra.mxu0 %v2659
        %2661 = vmatprep.subr.mxu0 0.0
        %v2662 = vand.u32 %v1615, 4294901760
        %2663 = vmatpush1.msra.mxu0 %v2662
        %2664 = vmatprep.subr.mxu0 0.0
        %v2665 = vand.u32 %v1614, 4294901760
        %2666 = vmatpush1.msra.mxu0 %v2665
        %2667 = vmatprep.subr.mxu0 0.0
        %v2668 = vand.u32 %v1613, 4294901760
        %2669 = vmatpush1.msra.mxu0 %v2668
        %2670 = vmatprep.subr.mxu0 0.0
        %v2671 = vand.u32 %v1612, 4294901760
        %2672 = vmatpush1.msra.mxu0 %v2671
        %2673 = vmatprep.subr.mxu0 0.0
        %v2674 = vand.u32 %v1611, 4294901760
        %2675 = vmatpush1.msra.mxu0 %v2674
        %2676 = vmatprep.subr.mxu0 0.0
        %v2677 = vand.u32 %v1610, 4294901760
        %2678 = vmatpush1.msra.mxu0 %v2677
        %2679 = vmatprep.subr.mxu0 0.0
        %v2680 = vand.u32 %v1609, 4294901760
        %2681 = vmatpush1.msra.mxu0 %v2680
        %2682 = vmatprep.subr.mxu0 0.0
        %2683 = vmatpush2.msra.mxu0 0.0
        %2684 = vmatprep.subr.mxu0 0.0
        %2685 = vmatpush2.msra.mxu0 0.0
        %2686 = vmatprep.subr.mxu0 0.0
        %2687 = vmatpush2.msra.mxu0 0.0
        %2688 = vmatprep.subr.mxu0 0.0
        %2689 = vmatpush2.msra.mxu0 0.0
        %2690 = vmatprep.subr.mxu0 0.0
        %2691 = vmatpush2.msra.mxu0 0.0
        %2692 = vmatprep.subr.mxu0 0.0
        %2693 = vmatpush2.msra.mxu0 0.0
        %2694 = vmatprep.subr.mxu0 0.0
        %2695 = vmatpush2.msra.mxu0 0.0
        %2696 = vmatprep.subr.mxu0 0.0
        %2697 = vmatpush2.msra.mxu0 0.0
        %2698 = vmatprep.subr.mxu0 0.0
        %2699 = vmatpush2.msra.mxu0 0.0
        %2700 = vmatprep.subr.mxu0 0.0
        %2701 = vmatpush2.msra.mxu0 0.0
        %2702 = vmatprep.subr.mxu0 0.0
        %2703 = vmatpush2.msra.mxu0 0.0
        %2704 = vmatprep.subr.mxu0 0.0
        %2705 = vmatpush2.msra.mxu0 0.0
        %2706 = vmatprep.subr.mxu0 0.0
        %2707 = vmatpush2.msra.mxu0 0.0
        %2708 = vmatprep.subr.mxu0 0.0
        %2709 = vmatpush2.msra.mxu0 0.0
        %2710 = vmatprep.subr.mxu0 0.0
        %2711 = vmatpush2.msra.mxu0 0.0
        %2712 = vmatprep.subr.mxu0 0.0
        %2713 = vmatpush2.msra.mxu0 0.0
        %2714 = vmatprep.mubr.f32.mxu0 0.0
        %v2715 = vand.u32 %v1608, 4294901760
        %v2716 = vsub.f32 %v1608, %v2715
        %v2717 = vand.u32 %v2716, 4294901760
        %2718 = vmatmul.mubr.f32.gmra.mxu0 %v2717
        %v2719 = vpop.f32.mrf.mxu0
        %v2720 = vadd.f32 %v2631, %v2719
        %v2721 = vpop.f32.mrf.mxu0
        %2722 = vdwg.mxu0
        %2723 = vmatprep.subr.mxu0 0.0
        %v2724 = vand.u32 %v1624, 4294901760
        %v2725 = vsub.f32 %v1624, %v2724
        %v2726 = vand.u32 %v2725, 4294901760
        %2727 = vmatpush1.msra.mxu0 %v2726
        %2728 = vmatprep.subr.mxu0 0.0
        %v2729 = vand.u32 %v1623, 4294901760
        %v2730 = vsub.f32 %v1623, %v2729
        %v2731 = vand.u32 %v2730, 4294901760
        %2732 = vmatpush1.msra.mxu0 %v2731
        %2733 = vmatprep.subr.mxu0 0.0
        %v2734 = vand.u32 %v1622, 4294901760
        %v2735 = vsub.f32 %v1622, %v2734
        %v2736 = vand.u32 %v2735, 4294901760
        %2737 = vmatpush1.msra.mxu0 %v2736
        %2738 = vmatprep.subr.mxu0 0.0
        %v2739 = vand.u32 %v1621, 4294901760
        %v2740 = vsub.f32 %v1621, %v2739
        %v2741 = vand.u32 %v2740, 4294901760
        %2742 = vmatpush1.msra.mxu0 %v2741
        %2743 = vmatprep.subr.mxu0 0.0
        %v2744 = vand.u32 %v1620, 4294901760
        %v2745 = vsub.f32 %v1620, %v2744
        %v2746 = vand.u32 %v2745, 4294901760
        %2747 = vmatpush1.msra.mxu0 %v2746
        %2748 = vmatprep.subr.mxu0 0.0
        %v2749 = vand.u32 %v1619, 4294901760
        %v2750 = vsub.f32 %v1619, %v2749
        %v2751 = vand.u32 %v2750, 4294901760
        %2752 = vmatpush1.msra.mxu0 %v2751
        %2753 = vmatprep.subr.mxu0 0.0
        %v2754 = vand.u32 %v1618, 4294901760
        %v2755 = vsub.f32 %v1618, %v2754
        %v2756 = vand.u32 %v2755, 4294901760
        %2757 = vmatpush1.msra.mxu0 %v2756
        %2758 = vmatprep.subr.mxu0 0.0
        %v2759 = vand.u32 %v1617, 4294901760
        %v2760 = vsub.f32 %v1617, %v2759
        %v2761 = vand.u32 %v2760, 4294901760
        %2762 = vmatpush1.msra.mxu0 %v2761
        %2763 = vmatprep.subr.mxu0 0.0
        %v2764 = vand.u32 %v1616, 4294901760
        %v2765 = vsub.f32 %v1616, %v2764
        %v2766 = vand.u32 %v2765, 4294901760
        %2767 = vmatpush1.msra.mxu0 %v2766
        %2768 = vmatprep.subr.mxu0 0.0
        %v2769 = vand.u32 %v1615, 4294901760
        %v2770 = vsub.f32 %v1615, %v2769
        %v2771 = vand.u32 %v2770, 4294901760
        %2772 = vmatpush1.msra.mxu0 %v2771
        %2773 = vmatprep.subr.mxu0 0.0
        %v2774 = vand.u32 %v1614, 4294901760
        %v2775 = vsub.f32 %v1614, %v2774
        %v2776 = vand.u32 %v2775, 4294901760
        %2777 = vmatpush1.msra.mxu0 %v2776
        %2778 = vmatprep.subr.mxu0 0.0
        %v2779 = vand.u32 %v1613, 4294901760
        %v2780 = vsub.f32 %v1613, %v2779
        %v2781 = vand.u32 %v2780, 4294901760
        %2782 = vmatpush1.msra.mxu0 %v2781
        %2783 = vmatprep.subr.mxu0 0.0
        %v2784 = vand.u32 %v1612, 4294901760
        %v2785 = vsub.f32 %v1612, %v2784
        %v2786 = vand.u32 %v2785, 4294901760
        %2787 = vmatpush1.msra.mxu0 %v2786
        %2788 = vmatprep.subr.mxu0 0.0
        %v2789 = vand.u32 %v1611, 4294901760
        %v2790 = vsub.f32 %v1611, %v2789
        %v2791 = vand.u32 %v2790, 4294901760
        %2792 = vmatpush1.msra.mxu0 %v2791
        %2793 = vmatprep.subr.mxu0 0.0
        %v2794 = vand.u32 %v1610, 4294901760
        %v2795 = vsub.f32 %v1610, %v2794
        %v2796 = vand.u32 %v2795, 4294901760
        %2797 = vmatpush1.msra.mxu0 %v2796
        %2798 = vmatprep.subr.mxu0 0.0
        %v2799 = vand.u32 %v1609, 4294901760
        %v2800 = vsub.f32 %v1609, %v2799
        %v2801 = vand.u32 %v2800, 4294901760
        %2802 = vmatpush1.msra.mxu0 %v2801
        %2803 = vmatprep.subr.mxu0 0.0
        %2804 = vmatpush2.msra.mxu0 0.0
        %2805 = vmatprep.subr.mxu0 0.0
        %2806 = vmatpush2.msra.mxu0 0.0
        %2807 = vmatprep.subr.mxu0 0.0
        %2808 = vmatpush2.msra.mxu0 0.0
        %2809 = vmatprep.subr.mxu0 0.0
        %2810 = vmatpush2.msra.mxu0 0.0
        %2811 = vmatprep.subr.mxu0 0.0
        %2812 = vmatpush2.msra.mxu0 0.0
        %2813 = vmatprep.subr.mxu0 0.0
        %2814 = vmatpush2.msra.mxu0 0.0
        %2815 = vmatprep.subr.mxu0 0.0
        %2816 = vmatpush2.msra.mxu0 0.0
        %2817 = vmatprep.subr.mxu0 0.0
        %2818 = vmatpush2.msra.mxu0 0.0
        %2819 = vmatprep.subr.mxu0 0.0
        %2820 = vmatpush2.msra.mxu0 0.0
        %2821 = vmatprep.subr.mxu0 0.0
        %2822 = vmatpush2.msra.mxu0 0.0
        %2823 = vmatprep.subr.mxu0 0.0
        %2824 = vmatpush2.msra.mxu0 0.0
        %2825 = vmatprep.subr.mxu0 0.0
        %2826 = vmatpush2.msra.mxu0 0.0
        %2827 = vmatprep.subr.mxu0 0.0
        %2828 = vmatpush2.msra.mxu0 0.0
        %2829 = vmatprep.subr.mxu0 0.0
        %2830 = vmatpush2.msra.mxu0 0.0
        %2831 = vmatprep.subr.mxu0 0.0
        %2832 = vmatpush2.msra.mxu0 0.0
        %2833 = vmatprep.subr.mxu0 0.0
        %2834 = vmatpush2.msra.mxu0 0.0
        %2835 = vmatprep.mubr.f32.mxu0 0.0
        %v2836 = vand.u32 %v1608, 4294901760
        %2837 = vmatmul.mubr.f32.gmra.mxu0 %v2836
        %v2838 = vpop.f32.mrf.mxu0
        %v2839 = vadd.f32 %v2720, %v2838
        %v2840 = vpop.f32.mrf.mxu0
        %2841 = vdwg.mxu0
        %2842 = vmatprep.subr.mxu0 0.0
        %v2843 = vand.u32 %v1624, 4294901760
        %2844 = vmatpush1.msra.mxu0 %v2843
        %2845 = vmatprep.subr.mxu0 0.0
        %v2846 = vand.u32 %v1623, 4294901760
        %2847 = vmatpush1.msra.mxu0 %v2846
        %2848 = vmatprep.subr.mxu0 0.0
        %v2849 = vand.u32 %v1622, 4294901760
        %2850 = vmatpush1.msra.mxu0 %v2849
        %2851 = vmatprep.subr.mxu0 0.0
        %v2852 = vand.u32 %v1621, 4294901760
        %2853 = vmatpush1.msra.mxu0 %v2852
        %2854 = vmatprep.subr.mxu0 0.0
        %v2855 = vand.u32 %v1620, 4294901760
        %2856 = vmatpush1.msra.mxu0 %v2855
        %2857 = vmatprep.subr.mxu0 0.0
        %v2858 = vand.u32 %v1619, 4294901760
        %2859 = vmatpush1.msra.mxu0 %v2858
        %2860 = vmatprep.subr.mxu0 0.0
        %v2861 = vand.u32 %v1618, 4294901760
        %2862 = vmatpush1.msra.mxu0 %v2861
        %2863 = vmatprep.subr.mxu0 0.0
        %v2864 = vand.u32 %v1617, 4294901760
        %2865 = vmatpush1.msra.mxu0 %v2864
        %2866 = vmatprep.subr.mxu0 0.0
        %v2867 = vand.u32 %v1616, 4294901760
        %2868 = vmatpush1.msra.mxu0 %v2867
        %2869 = vmatprep.subr.mxu0 0.0
        %v2870 = vand.u32 %v1615, 4294901760
        %2871 = vmatpush1.msra.mxu0 %v2870
        %2872 = vmatprep.subr.mxu0 0.0
        %v2873 = vand.u32 %v1614, 4294901760
        %2874 = vmatpush1.msra.mxu0 %v2873
        %2875 = vmatprep.subr.mxu0 0.0
        %v2876 = vand.u32 %v1613, 4294901760
        %2877 = vmatpush1.msra.mxu0 %v2876
        %2878 = vmatprep.subr.mxu0 0.0
        %v2879 = vand.u32 %v1612, 4294901760
        %2880 = vmatpush1.msra.mxu0 %v2879
        %2881 = vmatprep.subr.mxu0 0.0
        %v2882 = vand.u32 %v1611, 4294901760
        %2883 = vmatpush1.msra.mxu0 %v2882
        %2884 = vmatprep.subr.mxu0 0.0
        %v2885 = vand.u32 %v1610, 4294901760
        %2886 = vmatpush1.msra.mxu0 %v2885
        %2887 = vmatprep.subr.mxu0 0.0
        %v2888 = vand.u32 %v1609, 4294901760
        %2889 = vmatpush1.msra.mxu0 %v2888
        %2890 = vmatprep.subr.mxu0 0.0
        %2891 = vmatpush2.msra.mxu0 0.0
        %2892 = vmatprep.subr.mxu0 0.0
        %2893 = vmatpush2.msra.mxu0 0.0
        %2894 = vmatprep.subr.mxu0 0.0
        %2895 = vmatpush2.msra.mxu0 0.0
        %2896 = vmatprep.subr.mxu0 0.0
        %2897 = vmatpush2.msra.mxu0 0.0
        %2898 = vmatprep.subr.mxu0 0.0
        %2899 = vmatpush2.msra.mxu0 0.0
        %2900 = vmatprep.subr.mxu0 0.0
        %2901 = vmatpush2.msra.mxu0 0.0
        %2902 = vmatprep.subr.mxu0 0.0
        %2903 = vmatpush2.msra.mxu0 0.0
        %2904 = vmatprep.subr.mxu0 0.0
        %2905 = vmatpush2.msra.mxu0 0.0
        %2906 = vmatprep.subr.mxu0 0.0
        %2907 = vmatpush2.msra.mxu0 0.0
        %2908 = vmatprep.subr.mxu0 0.0
        %2909 = vmatpush2.msra.mxu0 0.0
        %2910 = vmatprep.subr.mxu0 0.0
        %2911 = vmatpush2.msra.mxu0 0.0
        %2912 = vmatprep.subr.mxu0 0.0
        %2913 = vmatpush2.msra.mxu0 0.0
        %2914 = vmatprep.subr.mxu0 0.0
        %2915 = vmatpush2.msra.mxu0 0.0
        %2916 = vmatprep.subr.mxu0 0.0
        %2917 = vmatpush2.msra.mxu0 0.0
        %2918 = vmatprep.subr.mxu0 0.0
        %2919 = vmatpush2.msra.mxu0 0.0
        %2920 = vmatprep.subr.mxu0 0.0
        %2921 = vmatpush2.msra.mxu0 0.0
        %2922 = vmatprep.mubr.f32.mxu0 0.0
        %v2923 = vand.u32 %v1608, 4294901760
        %2924 = vmatmul.mubr.f32.gmra.mxu0 %v2923
        %v2925 = vpop.f32.mrf.mxu0
        %v2926 = vadd.f32 %v2839, %v2925
        %v2927 = vpop.f32.mrf.mxu0
        %2928 = vdwg.mxu0
        %2929 = vset.pattern.permute.xlu0 4
        %2930 = vperm.xlu0 %2929, %v274
        %v2931 = vpop.permute.xlu0 %2930
        %vm2932 = vcmp.eq.s32.totalorder %v2931, %v276
        %v2933 = vsel %vm2932, 1, 0
        %v2934 = vcvt.s32.f32 %v2933
        %v2935 = vld [vmem:[%s5] sm:$0xff]
        %v2936 = vld [vmem:[%s5 + $0x8] sm:$0xff]
        %v2937 = vld [vmem:[%s5 + $0x10] sm:$0xff]
        %v2938 = vld [vmem:[%s5 + $0x18] sm:$0xff]
        %v2939 = vld [vmem:[%s5 + $0x20] sm:$0xff]
        %v2940 = vld [vmem:[%s5 + $0x28] sm:$0xff]
        %v2941 = vld [vmem:[%s5 + $0x30] sm:$0xff]
        %v2942 = vld [vmem:[%s5 + $0x38] sm:$0xff]
        %v2943 = vld [vmem:[%s5 + $0x40] sm:$0xff]
        %v2944 = vld [vmem:[%s5 + $0x48] sm:$0xff]
        %v2945 = vld [vmem:[%s5 + $0x50] sm:$0xff]
        %v2946 = vld [vmem:[%s5 + $0x58] sm:$0xff]
        %v2947 = vld [vmem:[%s5 + $0x60] sm:$0xff]
        %v2948 = vld [vmem:[%s5 + $0x68] sm:$0xff]
        %v2949 = vld [vmem:[%s5 + $0x70] sm:$0xff]
        %v2950 = vld [vmem:[%s5 + $0x78] sm:$0xff]
        %2951 = vset.pattern.permute.xlu0 5
        %2952 = vperm.xlu0 %2951, %v274
        %v2953 = vpop.permute.xlu0 %2952
        %vm2954 = vcmp.eq.s32.totalorder %v2953, %v276
        %v2955 = vsel %vm2954, 1, 0
        %v2956 = vcvt.s32.f32 %v2955
        %v2957 = vld [vmem:[%s6] sm:$0xff]
        %v2958 = vld [vmem:[%s6 + $0x8] sm:$0xff]
        %v2959 = vld [vmem:[%s6 + $0x10] sm:$0xff]
        %v2960 = vld [vmem:[%s6 + $0x18] sm:$0xff]
        %v2961 = vld [vmem:[%s6 + $0x20] sm:$0xff]
        %v2962 = vld [vmem:[%s6 + $0x28] sm:$0xff]
        %v2963 = vld [vmem:[%s6 + $0x30] sm:$0xff]
        %v2964 = vld [vmem:[%s6 + $0x38] sm:$0xff]
        %v2965 = vld [vmem:[%s6 + $0x40] sm:$0xff]
        %v2966 = vld [vmem:[%s6 + $0x48] sm:$0xff]
        %v2967 = vld [vmem:[%s6 + $0x50] sm:$0xff]
        %v2968 = vld [vmem:[%s6 + $0x58] sm:$0xff]
        %v2969 = vld [vmem:[%s6 + $0x60] sm:$0xff]
        %v2970 = vld [vmem:[%s6 + $0x68] sm:$0xff]
        %v2971 = vld [vmem:[%s6 + $0x70] sm:$0xff]
        %v2972 = vld [vmem:[%s6 + $0x78] sm:$0xff]
        %2973 = vmatprep.subr.mxu0 0.0
        %v2974 = vand.u32 %v2972, 4294901760
        %2975 = vmatpush1.msra.mxu0 %v2974
        %2976 = vmatprep.subr.mxu0 0.0
        %v2977 = vand.u32 %v2971, 4294901760
        %2978 = vmatpush1.msra.mxu0 %v2977
        %2979 = vmatprep.subr.mxu0 0.0
        %v2980 = vand.u32 %v2970, 4294901760
        %2981 = vmatpush1.msra.mxu0 %v2980
        %2982 = vmatprep.subr.mxu0 0.0
        %v2983 = vand.u32 %v2969, 4294901760
        %2984 = vmatpush1.msra.mxu0 %v2983
        %2985 = vmatprep.subr.mxu0 0.0
        %v2986 = vand.u32 %v2968, 4294901760
        %2987 = vmatpush1.msra.mxu0 %v2986
        %2988 = vmatprep.subr.mxu0 0.0
        %v2989 = vand.u32 %v2967, 4294901760
        %2990 = vmatpush1.msra.mxu0 %v2989
        %2991 = vmatprep.subr.mxu0 0.0
        %v2992 = vand.u32 %v2966, 4294901760
        %2993 = vmatpush1.msra.mxu0 %v2992
        %2994 = vmatprep.subr.mxu0 0.0
        %v2995 = vand.u32 %v2965, 4294901760
        %2996 = vmatpush1.msra.mxu0 %v2995
        %2997 = vmatprep.subr.mxu0 0.0
        %v2998 = vand.u32 %v2964, 4294901760
        %2999 = vmatpush1.msra.mxu0 %v2998
        %3000 = vmatprep.subr.mxu0 0.0
        %v3001 = vand.u32 %v2963, 4294901760
        %3002 = vmatpush1.msra.mxu0 %v3001
        %3003 = vmatprep.subr.mxu0 0.0
        %v3004 = vand.u32 %v2962, 4294901760
        %3005 = vmatpush1.msra.mxu0 %v3004
        %3006 = vmatprep.subr.mxu0 0.0
        %v3007 = vand.u32 %v2961, 4294901760
        %3008 = vmatpush1.msra.mxu0 %v3007
        %3009 = vmatprep.subr.mxu0 0.0
        %v3010 = vand.u32 %v2960, 4294901760
        %3011 = vmatpush1.msra.mxu0 %v3010
        %3012 = vmatprep.subr.mxu0 0.0
        %v3013 = vand.u32 %v2959, 4294901760
        %3014 = vmatpush1.msra.mxu0 %v3013
        %3015 = vmatprep.subr.mxu0 0.0
        %v3016 = vand.u32 %v2958, 4294901760
        %3017 = vmatpush1.msra.mxu0 %v3016
        %3018 = vmatprep.subr.mxu0 0.0
        %v3019 = vand.u32 %v2957, 4294901760
        %3020 = vmatpush1.msra.mxu0 %v3019
        %3021 = vmatprep.subr.mxu0 0.0
        %3022 = vmatpush2.msra.mxu0 0.0
        %3023 = vmatprep.subr.mxu0 0.0
        %3024 = vmatpush2.msra.mxu0 0.0
        %3025 = vmatprep.subr.mxu0 0.0
        %3026 = vmatpush2.msra.mxu0 0.0
        %3027 = vmatprep.subr.mxu0 0.0
        %3028 = vmatpush2.msra.mxu0 0.0
        %3029 = vmatprep.subr.mxu0 0.0
        %3030 = vmatpush2.msra.mxu0 0.0
        %3031 = vmatprep.subr.mxu0 0.0
        %3032 = vmatpush2.msra.mxu0 0.0
        %3033 = vmatprep.subr.mxu0 0.0
        %3034 = vmatpush2.msra.mxu0 0.0
        %3035 = vmatprep.subr.mxu0 0.0
        %3036 = vmatpush2.msra.mxu0 0.0
        %3037 = vmatprep.subr.mxu0 0.0
        %3038 = vmatpush2.msra.mxu0 0.0
        %3039 = vmatprep.subr.mxu0 0.0
        %3040 = vmatpush2.msra.mxu0 0.0
        %3041 = vmatprep.subr.mxu0 0.0
        %3042 = vmatpush2.msra.mxu0 0.0
        %3043 = vmatprep.subr.mxu0 0.0
        %3044 = vmatpush2.msra.mxu0 0.0
        %3045 = vmatprep.subr.mxu0 0.0
        %3046 = vmatpush2.msra.mxu0 0.0
        %3047 = vmatprep.subr.mxu0 0.0
        %3048 = vmatpush2.msra.mxu0 0.0
        %3049 = vmatprep.subr.mxu0 0.0
        %3050 = vmatpush2.msra.mxu0 0.0
        %3051 = vmatprep.subr.mxu0 0.0
        %3052 = vmatpush2.msra.mxu0 0.0
        %3053 = vmatprep.mubr.f32.mxu0 0.0
        %v3054 = vand.u32 %v2956, 4294901760
        %v3055 = vsub.f32 %v2956, %v3054
        %v3056 = vand.u32 %v3055, 4294901760
        %v3057 = vsub.f32 %v3055, %v3056
        %v3058 = vand.u32 %v3057, 4294901760
        %3059 = vmatmul.mubr.f32.gmra.mxu0 %v3058
        %v3060 = vpop.f32.mrf.mxu0
        %v3061 = vadd.f32 0.0, %v3060
        %v3062 = vpop.f32.mrf.mxu0
        %3063 = vdwg.mxu0
        %3064 = vmatprep.subr.mxu0 0.0
        %v3065 = vand.u32 %v2972, 4294901760
        %v3066 = vsub.f32 %v2972, %v3065
        %v3067 = vand.u32 %v3066, 4294901760
        %v3068 = vsub.f32 %v3066, %v3067
        %v3069 = vand.u32 %v3068, 4294901760
        %3070 = vmatpush1.msra.mxu0 %v3069
        %3071 = vmatprep.subr.mxu0 0.0
        %v3072 = vand.u32 %v2971, 4294901760
        %v3073 = vsub.f32 %v2971, %v3072
        %v3074 = vand.u32 %v3073, 4294901760
        %v3075 = vsub.f32 %v3073, %v3074
        %v3076 = vand.u32 %v3075, 4294901760
        %3077 = vmatpush1.msra.mxu0 %v3076
        %3078 = vmatprep.subr.mxu0 0.0
        %v3079 = vand.u32 %v2970, 4294901760
        %v3080 = vsub.f32 %v2970, %v3079
        %v3081 = vand.u32 %v3080, 4294901760
        %v3082 = vsub.f32 %v3080, %v3081
        %v3083 = vand.u32 %v3082, 4294901760
        %3084 = vmatpush1.msra.mxu0 %v3083
        %3085 = vmatprep.subr.mxu0 0.0
        %v3086 = vand.u32 %v2969, 4294901760
        %v3087 = vsub.f32 %v2969, %v3086
        %v3088 = vand.u32 %v3087, 4294901760
        %v3089 = vsub.f32 %v3087, %v3088
        %v3090 = vand.u32 %v3089, 4294901760
        %3091 = vmatpush1.msra.mxu0 %v3090
        %3092 = vmatprep.subr.mxu0 0.0
        %v3093 = vand.u32 %v2968, 4294901760
        %v3094 = vsub.f32 %v2968, %v3093
        %v3095 = vand.u32 %v3094, 4294901760
        %v3096 = vsub.f32 %v3094, %v3095
        %v3097 = vand.u32 %v3096, 4294901760
        %3098 = vmatpush1.msra.mxu0 %v3097
        %3099 = vmatprep.subr.mxu0 0.0
        %v3100 = vand.u32 %v2967, 4294901760
        %v3101 = vsub.f32 %v2967, %v3100
        %v3102 = vand.u32 %v3101, 4294901760
        %v3103 = vsub.f32 %v3101, %v3102
        %v3104 = vand.u32 %v3103, 4294901760
        %3105 = vmatpush1.msra.mxu0 %v3104
        %3106 = vmatprep.subr.mxu0 0.0
        %v3107 = vand.u32 %v2966, 4294901760
        %v3108 = vsub.f32 %v2966, %v3107
        %v3109 = vand.u32 %v3108, 4294901760
        %v3110 = vsub.f32 %v3108, %v3109
        %v3111 = vand.u32 %v3110, 4294901760
        %3112 = vmatpush1.msra.mxu0 %v3111
        %3113 = vmatprep.subr.mxu0 0.0
        %v3114 = vand.u32 %v2965, 4294901760
        %v3115 = vsub.f32 %v2965, %v3114
        %v3116 = vand.u32 %v3115, 4294901760
        %v3117 = vsub.f32 %v3115, %v3116
        %v3118 = vand.u32 %v3117, 4294901760
        %3119 = vmatpush1.msra.mxu0 %v3118
        %3120 = vmatprep.subr.mxu0 0.0
        %v3121 = vand.u32 %v2964, 4294901760
        %v3122 = vsub.f32 %v2964, %v3121
        %v3123 = vand.u32 %v3122, 4294901760
        %v3124 = vsub.f32 %v3122, %v3123
        %v3125 = vand.u32 %v3124, 4294901760
        %3126 = vmatpush1.msra.mxu0 %v3125
        %3127 = vmatprep.subr.mxu0 0.0
        %v3128 = vand.u32 %v2963, 4294901760
        %v3129 = vsub.f32 %v2963, %v3128
        %v3130 = vand.u32 %v3129, 4294901760
        %v3131 = vsub.f32 %v3129, %v3130
        %v3132 = vand.u32 %v3131, 4294901760
        %3133 = vmatpush1.msra.mxu0 %v3132
        %3134 = vmatprep.subr.mxu0 0.0
        %v3135 = vand.u32 %v2962, 4294901760
        %v3136 = vsub.f32 %v2962, %v3135
        %v3137 = vand.u32 %v3136, 4294901760
        %v3138 = vsub.f32 %v3136, %v3137
        %v3139 = vand.u32 %v3138, 4294901760
        %3140 = vmatpush1.msra.mxu0 %v3139
        %3141 = vmatprep.subr.mxu0 0.0
        %v3142 = vand.u32 %v2961, 4294901760
        %v3143 = vsub.f32 %v2961, %v3142
        %v3144 = vand.u32 %v3143, 4294901760
        %v3145 = vsub.f32 %v3143, %v3144
        %v3146 = vand.u32 %v3145, 4294901760
        %3147 = vmatpush1.msra.mxu0 %v3146
        %3148 = vmatprep.subr.mxu0 0.0
        %v3149 = vand.u32 %v2960, 4294901760
        %v3150 = vsub.f32 %v2960, %v3149
        %v3151 = vand.u32 %v3150, 4294901760
        %v3152 = vsub.f32 %v3150, %v3151
        %v3153 = vand.u32 %v3152, 4294901760
        %3154 = vmatpush1.msra.mxu0 %v3153
        %3155 = vmatprep.subr.mxu0 0.0
        %v3156 = vand.u32 %v2959, 4294901760
        %v3157 = vsub.f32 %v2959, %v3156
        %v3158 = vand.u32 %v3157, 4294901760
        %v3159 = vsub.f32 %v3157, %v3158
        %v3160 = vand.u32 %v3159, 4294901760
        %3161 = vmatpush1.msra.mxu0 %v3160
        %3162 = vmatprep.subr.mxu0 0.0
        %v3163 = vand.u32 %v2958, 4294901760
        %v3164 = vsub.f32 %v2958, %v3163
        %v3165 = vand.u32 %v3164, 4294901760
        %v3166 = vsub.f32 %v3164, %v3165
        %v3167 = vand.u32 %v3166, 4294901760
        %3168 = vmatpush1.msra.mxu0 %v3167
        %3169 = vmatprep.subr.mxu0 0.0
        %v3170 = vand.u32 %v2957, 4294901760
        %v3171 = vsub.f32 %v2957, %v3170
        %v3172 = vand.u32 %v3171, 4294901760
        %v3173 = vsub.f32 %v3171, %v3172
        %v3174 = vand.u32 %v3173, 4294901760
        %3175 = vmatpush1.msra.mxu0 %v3174
        %3176 = vmatprep.subr.mxu0 0.0
        %3177 = vmatpush2.msra.mxu0 0.0
        %3178 = vmatprep.subr.mxu0 0.0
        %3179 = vmatpush2.msra.mxu0 0.0
        %3180 = vmatprep.subr.mxu0 0.0
        %3181 = vmatpush2.msra.mxu0 0.0
        %3182 = vmatprep.subr.mxu0 0.0
        %3183 = vmatpush2.msra.mxu0 0.0
        %3184 = vmatprep.subr.mxu0 0.0
        %3185 = vmatpush2.msra.mxu0 0.0
        %3186 = vmatprep.subr.mxu0 0.0
        %3187 = vmatpush2.msra.mxu0 0.0
        %3188 = vmatprep.subr.mxu0 0.0
        %3189 = vmatpush2.msra.mxu0 0.0
        %3190 = vmatprep.subr.mxu0 0.0
        %3191 = vmatpush2.msra.mxu0 0.0
        %3192 = vmatprep.subr.mxu0 0.0
        %3193 = vmatpush2.msra.mxu0 0.0
        %3194 = vmatprep.subr.mxu0 0.0
        %3195 = vmatpush2.msra.mxu0 0.0
        %3196 = vmatprep.subr.mxu0 0.0
        %3197 = vmatpush2.msra.mxu0 0.0
        %3198 = vmatprep.subr.mxu0 0.0
        %3199 = vmatpush2.msra.mxu0 0.0
        %3200 = vmatprep.subr.mxu0 0.0
        %3201 = vmatpush2.msra.mxu0 0.0
        %3202 = vmatprep.subr.mxu0 0.0
        %3203 = vmatpush2.msra.mxu0 0.0
        %3204 = vmatprep.subr.mxu0 0.0
        %3205 = vmatpush2.msra.mxu0 0.0
        %3206 = vmatprep.subr.mxu0 0.0
        %3207 = vmatpush2.msra.mxu0 0.0
        %3208 = vmatprep.mubr.f32.mxu0 0.0
        %v3209 = vand.u32 %v2956, 4294901760
        %3210 = vmatmul.mubr.f32.gmra.mxu0 %v3209
        %v3211 = vpop.f32.mrf.mxu0
        %v3212 = vadd.f32 %v3061, %v3211
        %v3213 = vpop.f32.mrf.mxu0
        %3214 = vdwg.mxu0
        %3215 = vmatprep.subr.mxu0 0.0
        %v3216 = vand.u32 %v2972, 4294901760
        %v3217 = vsub.f32 %v2972, %v3216
        %3218 = vmatpush1.msra.mxu0 %v3217
        %3219 = vmatprep.subr.mxu0 0.0
        %v3220 = vand.u32 %v2971, 4294901760
        %v3221 = vsub.f32 %v2971, %v3220
        %3222 = vmatpush1.msra.mxu0 %v3221
        %3223 = vmatprep.subr.mxu0 0.0
        %v3224 = vand.u32 %v2970, 4294901760
        %v3225 = vsub.f32 %v2970, %v3224
        %3226 = vmatpush1.msra.mxu0 %v3225
        %3227 = vmatprep.subr.mxu0 0.0
        %v3228 = vand.u32 %v2969, 4294901760
        %v3229 = vsub.f32 %v2969, %v3228
        %3230 = vmatpush1.msra.mxu0 %v3229
        %3231 = vmatprep.subr.mxu0 0.0
        %v3232 = vand.u32 %v2968, 4294901760
        %v3233 = vsub.f32 %v2968, %v3232
        %3234 = vmatpush1.msra.mxu0 %v3233
        %3235 = vmatprep.subr.mxu0 0.0
        %v3236 = vand.u32 %v2967, 4294901760
        %v3237 = vsub.f32 %v2967, %v3236
        %3238 = vmatpush1.msra.mxu0 %v3237
        %3239 = vmatprep.subr.mxu0 0.0
        %v3240 = vand.u32 %v2966, 4294901760
        %v3241 = vsub.f32 %v2966, %v3240
        %3242 = vmatpush1.msra.mxu0 %v3241
        %3243 = vmatprep.subr.mxu0 0.0
        %v3244 = vand.u32 %v2965, 4294901760
        %v3245 = vsub.f32 %v2965, %v3244
        %3246 = vmatpush1.msra.mxu0 %v3245
        %3247 = vmatprep.subr.mxu0 0.0
        %v3248 = vand.u32 %v2964, 4294901760
        %v3249 = vsub.f32 %v2964, %v3248
        %3250 = vmatpush1.msra.mxu0 %v3249
        %3251 = vmatprep.subr.mxu0 0.0
        %v3252 = vand.u32 %v2963, 4294901760
        %v3253 = vsub.f32 %v2963, %v3252
        %3254 = vmatpush1.msra.mxu0 %v3253
        %3255 = vmatprep.subr.mxu0 0.0
        %v3256 = vand.u32 %v2962, 4294901760
        %v3257 = vsub.f32 %v2962, %v3256
        %3258 = vmatpush1.msra.mxu0 %v3257
        %3259 = vmatprep.subr.mxu0 0.0
        %v3260 = vand.u32 %v2961, 4294901760
        %v3261 = vsub.f32 %v2961, %v3260
        %3262 = vmatpush1.msra.mxu0 %v3261
        %3263 = vmatprep.subr.mxu0 0.0
        %v3264 = vand.u32 %v2960, 4294901760
        %v3265 = vsub.f32 %v2960, %v3264
        %3266 = vmatpush1.msra.mxu0 %v3265
        %3267 = vmatprep.subr.mxu0 0.0
        %v3268 = vand.u32 %v2959, 4294901760
        %v3269 = vsub.f32 %v2959, %v3268
        %3270 = vmatpush1.msra.mxu0 %v3269
        %3271 = vmatprep.subr.mxu0 0.0
        %v3272 = vand.u32 %v2958, 4294901760
        %v3273 = vsub.f32 %v2958, %v3272
        %3274 = vmatpush1.msra.mxu0 %v3273
        %3275 = vmatprep.subr.mxu0 0.0
        %v3276 = vand.u32 %v2957, 4294901760
        %v3277 = vsub.f32 %v2957, %v3276
        %3278 = vmatpush1.msra.mxu0 %v3277
        %3279 = vmatprep.subr.mxu0 0.0
        %3280 = vmatpush2.msra.mxu0 0.0
        %3281 = vmatprep.subr.mxu0 0.0
        %3282 = vmatpush2.msra.mxu0 0.0
        %3283 = vmatprep.subr.mxu0 0.0
        %3284 = vmatpush2.msra.mxu0 0.0
        %3285 = vmatprep.subr.mxu0 0.0
        %3286 = vmatpush2.msra.mxu0 0.0
        %3287 = vmatprep.subr.mxu0 0.0
        %3288 = vmatpush2.msra.mxu0 0.0
        %3289 = vmatprep.subr.mxu0 0.0
        %3290 = vmatpush2.msra.mxu0 0.0
        %3291 = vmatprep.subr.mxu0 0.0
        %3292 = vmatpush2.msra.mxu0 0.0
        %3293 = vmatprep.subr.mxu0 0.0
        %3294 = vmatpush2.msra.mxu0 0.0
        %3295 = vmatprep.subr.mxu0 0.0
        %3296 = vmatpush2.msra.mxu0 0.0
        %3297 = vmatprep.subr.mxu0 0.0
        %3298 = vmatpush2.msra.mxu0 0.0
        %3299 = vmatprep.subr.mxu0 0.0
        %3300 = vmatpush2.msra.mxu0 0.0
        %3301 = vmatprep.subr.mxu0 0.0
        %3302 = vmatpush2.msra.mxu0 0.0
        %3303 = vmatprep.subr.mxu0 0.0
        %3304 = vmatpush2.msra.mxu0 0.0
        %3305 = vmatprep.subr.mxu0 0.0
        %3306 = vmatpush2.msra.mxu0 0.0
        %3307 = vmatprep.subr.mxu0 0.0
        %3308 = vmatpush2.msra.mxu0 0.0
        %3309 = vmatprep.subr.mxu0 0.0
        %3310 = vmatpush2.msra.mxu0 0.0
        %3311 = vmatprep.mubr.f32.mxu0 0.0
        %v3312 = vand.u32 %v2956, 4294901760
        %v3313 = vsub.f32 %v2956, %v3312
        %3314 = vmatmul.mubr.f32.gmra.mxu0 %v3313
        %v3315 = vpop.f32.mrf.mxu0
        %v3316 = vadd.f32 %v3212, %v3315
        %v3317 = vpop.f32.mrf.mxu0
        %3318 = vdwg.mxu0
        %3319 = vmatprep.subr.mxu0 0.0
        %v3320 = vand.u32 %v2972, 4294901760
        %3321 = vmatpush1.msra.mxu0 %v3320
        %3322 = vmatprep.subr.mxu0 0.0
        %v3323 = vand.u32 %v2971, 4294901760
        %3324 = vmatpush1.msra.mxu0 %v3323
        %3325 = vmatprep.subr.mxu0 0.0
        %v3326 = vand.u32 %v2970, 4294901760
        %3327 = vmatpush1.msra.mxu0 %v3326
        %3328 = vmatprep.subr.mxu0 0.0
        %v3329 = vand.u32 %v2969, 4294901760
        %3330 = vmatpush1.msra.mxu0 %v3329
        %3331 = vmatprep.subr.mxu0 0.0
        %v3332 = vand.u32 %v2968, 4294901760
        %3333 = vmatpush1.msra.mxu0 %v3332
        %3334 = vmatprep.subr.mxu0 0.0
        %v3335 = vand.u32 %v2967, 4294901760
        %3336 = vmatpush1.msra.mxu0 %v3335
        %3337 = vmatprep.subr.mxu0 0.0
        %v3338 = vand.u32 %v2966, 4294901760
        %3339 = vmatpush1.msra.mxu0 %v3338
        %3340 = vmatprep.subr.mxu0 0.0
        %v3341 = vand.u32 %v2965, 4294901760
        %3342 = vmatpush1.msra.mxu0 %v3341
        %3343 = vmatprep.subr.mxu0 0.0
        %v3344 = vand.u32 %v2964, 4294901760
        %3345 = vmatpush1.msra.mxu0 %v3344
        %3346 = vmatprep.subr.mxu0 0.0
        %v3347 = vand.u32 %v2963, 4294901760
        %3348 = vmatpush1.msra.mxu0 %v3347
        %3349 = vmatprep.subr.mxu0 0.0
        %v3350 = vand.u32 %v2962, 4294901760
        %3351 = vmatpush1.msra.mxu0 %v3350
        %3352 = vmatprep.subr.mxu0 0.0
        %v3353 = vand.u32 %v2961, 4294901760
        %3354 = vmatpush1.msra.mxu0 %v3353
        %3355 = vmatprep.subr.mxu0 0.0
        %v3356 = vand.u32 %v2960, 4294901760
        %3357 = vmatpush1.msra.mxu0 %v3356
        %3358 = vmatprep.subr.mxu0 0.0
        %v3359 = vand.u32 %v2959, 4294901760
        %3360 = vmatpush1.msra.mxu0 %v3359
        %3361 = vmatprep.subr.mxu0 0.0
        %v3362 = vand.u32 %v2958, 4294901760
        %3363 = vmatpush1.msra.mxu0 %v3362
        %3364 = vmatprep.subr.mxu0 0.0
        %v3365 = vand.u32 %v2957, 4294901760
        %3366 = vmatpush1.msra.mxu0 %v3365
        %3367 = vmatprep.subr.mxu0 0.0
        %3368 = vmatpush2.msra.mxu0 0.0
        %3369 = vmatprep.subr.mxu0 0.0
        %3370 = vmatpush2.msra.mxu0 0.0
        %3371 = vmatprep.subr.mxu0 0.0
        %3372 = vmatpush2.msra.mxu0 0.0
        %3373 = vmatprep.subr.mxu0 0.0
        %3374 = vmatpush2.msra.mxu0 0.0
        %3375 = vmatprep.subr.mxu0 0.0
        %3376 = vmatpush2.msra.mxu0 0.0
        %3377 = vmatprep.subr.mxu0 0.0
        %3378 = vmatpush2.msra.mxu0 0.0
        %3379 = vmatprep.subr.mxu0 0.0
        %3380 = vmatpush2.msra.mxu0 0.0
        %3381 = vmatprep.subr.mxu0 0.0
        %3382 = vmatpush2.msra.mxu0 0.0
        %3383 = vmatprep.subr.mxu0 0.0
        %3384 = vmatpush2.msra.mxu0 0.0
        %3385 = vmatprep.subr.mxu0 0.0
        %3386 = vmatpush2.msra.mxu0 0.0
        %3387 = vmatprep.subr.mxu0 0.0
        %3388 = vmatpush2.msra.mxu0 0.0
        %3389 = vmatprep.subr.mxu0 0.0
        %3390 = vmatpush2.msra.mxu0 0.0
        %3391 = vmatprep.subr.mxu0 0.0
        %3392 = vmatpush2.msra.mxu0 0.0
        %3393 = vmatprep.subr.mxu0 0.0
        %3394 = vmatpush2.msra.mxu0 0.0
        %3395 = vmatprep.subr.mxu0 0.0
        %3396 = vmatpush2.msra.mxu0 0.0
        %3397 = vmatprep.subr.mxu0 0.0
        %3398 = vmatpush2.msra.mxu0 0.0
        %3399 = vmatprep.mubr.f32.mxu0 0.0
        %v3400 = vand.u32 %v2956, 4294901760
        %v3401 = vsub.f32 %v2956, %v3400
        %v3402 = vand.u32 %v3401, 4294901760
        %3403 = vmatmul.mubr.f32.gmra.mxu0 %v3402
        %v3404 = vpop.f32.mrf.mxu0
        %v3405 = vadd.f32 %v3316, %v3404
        %v3406 = vpop.f32.mrf.mxu0
        %3407 = vdwg.mxu0
        %3408 = vmatprep.subr.mxu0 0.0
        %v3409 = vand.u32 %v2972, 4294901760
        %v3410 = vsub.f32 %v2972, %v3409
        %v3411 = vand.u32 %v3410, 4294901760
        %3412 = vmatpush1.msra.mxu0 %v3411
        %3413 = vmatprep.subr.mxu0 0.0
        %v3414 = vand.u32 %v2971, 4294901760
        %v3415 = vsub.f32 %v2971, %v3414
        %v3416 = vand.u32 %v3415, 4294901760
        %3417 = vmatpush1.msra.mxu0 %v3416
        %3418 = vmatprep.subr.mxu0 0.0
        %v3419 = vand.u32 %v2970, 4294901760
        %v3420 = vsub.f32 %v2970, %v3419
        %v3421 = vand.u32 %v3420, 4294901760
        %3422 = vmatpush1.msra.mxu0 %v3421
        %3423 = vmatprep.subr.mxu0 0.0
        %v3424 = vand.u32 %v2969, 4294901760
        %v3425 = vsub.f32 %v2969, %v3424
        %v3426 = vand.u32 %v3425, 4294901760
        %3427 = vmatpush1.msra.mxu0 %v3426
        %3428 = vmatprep.subr.mxu0 0.0
        %v3429 = vand.u32 %v2968, 4294901760
        %v3430 = vsub.f32 %v2968, %v3429
        %v3431 = vand.u32 %v3430, 4294901760
        %3432 = vmatpush1.msra.mxu0 %v3431
        %3433 = vmatprep.subr.mxu0 0.0
        %v3434 = vand.u32 %v2967, 4294901760
        %v3435 = vsub.f32 %v2967, %v3434
        %v3436 = vand.u32 %v3435, 4294901760
        %3437 = vmatpush1.msra.mxu0 %v3436
        %3438 = vmatprep.subr.mxu0 0.0
        %v3439 = vand.u32 %v2966, 4294901760
        %v3440 = vsub.f32 %v2966, %v3439
        %v3441 = vand.u32 %v3440, 4294901760
        %3442 = vmatpush1.msra.mxu0 %v3441
        %3443 = vmatprep.subr.mxu0 0.0
        %v3444 = vand.u32 %v2965, 4294901760
        %v3445 = vsub.f32 %v2965, %v3444
        %v3446 = vand.u32 %v3445, 4294901760
        %3447 = vmatpush1.msra.mxu0 %v3446
        %3448 = vmatprep.subr.mxu0 0.0
        %v3449 = vand.u32 %v2964, 4294901760
        %v3450 = vsub.f32 %v2964, %v3449
        %v3451 = vand.u32 %v3450, 4294901760
        %3452 = vmatpush1.msra.mxu0 %v3451
        %3453 = vmatprep.subr.mxu0 0.0
        %v3454 = vand.u32 %v2963, 4294901760
        %v3455 = vsub.f32 %v2963, %v3454
        %v3456 = vand.u32 %v3455, 4294901760
        %3457 = vmatpush1.msra.mxu0 %v3456
        %3458 = vmatprep.subr.mxu0 0.0
        %v3459 = vand.u32 %v2962, 4294901760
        %v3460 = vsub.f32 %v2962, %v3459
        %v3461 = vand.u32 %v3460, 4294901760
        %3462 = vmatpush1.msra.mxu0 %v3461
        %3463 = vmatprep.subr.mxu0 0.0
        %v3464 = vand.u32 %v2961, 4294901760
        %v3465 = vsub.f32 %v2961, %v3464
        %v3466 = vand.u32 %v3465, 4294901760
        %3467 = vmatpush1.msra.mxu0 %v3466
        %3468 = vmatprep.subr.mxu0 0.0
        %v3469 = vand.u32 %v2960, 4294901760
        %v3470 = vsub.f32 %v2960, %v3469
        %v3471 = vand.u32 %v3470, 4294901760
        %3472 = vmatpush1.msra.mxu0 %v3471
        %3473 = vmatprep.subr.mxu0 0.0
        %v3474 = vand.u32 %v2959, 4294901760
        %v3475 = vsub.f32 %v2959, %v3474
        %v3476 = vand.u32 %v3475, 4294901760
        %3477 = vmatpush1.msra.mxu0 %v3476
        %3478 = vmatprep.subr.mxu0 0.0
        %v3479 = vand.u32 %v2958, 4294901760
        %v3480 = vsub.f32 %v2958, %v3479
        %v3481 = vand.u32 %v3480, 4294901760
        %3482 = vmatpush1.msra.mxu0 %v3481
        %3483 = vmatprep.subr.mxu0 0.0
        %v3484 = vand.u32 %v2957, 4294901760
        %v3485 = vsub.f32 %v2957, %v3484
        %v3486 = vand.u32 %v3485, 4294901760
        %3487 = vmatpush1.msra.mxu0 %v3486
        %3488 = vmatprep.subr.mxu0 0.0
        %3489 = vmatpush2.msra.mxu0 0.0
        %3490 = vmatprep.subr.mxu0 0.0
        %3491 = vmatpush2.msra.mxu0 0.0
        %3492 = vmatprep.subr.mxu0 0.0
        %3493 = vmatpush2.msra.mxu0 0.0
        %3494 = vmatprep.subr.mxu0 0.0
        %3495 = vmatpush2.msra.mxu0 0.0
        %3496 = vmatprep.subr.mxu0 0.0
        %3497 = vmatpush2.msra.mxu0 0.0
        %3498 = vmatprep.subr.mxu0 0.0
        %3499 = vmatpush2.msra.mxu0 0.0
        %3500 = vmatprep.subr.mxu0 0.0
        %3501 = vmatpush2.msra.mxu0 0.0
        %3502 = vmatprep.subr.mxu0 0.0
        %3503 = vmatpush2.msra.mxu0 0.0
        %3504 = vmatprep.subr.mxu0 0.0
        %3505 = vmatpush2.msra.mxu0 0.0
        %3506 = vmatprep.subr.mxu0 0.0
        %3507 = vmatpush2.msra.mxu0 0.0
        %3508 = vmatprep.subr.mxu0 0.0
        %3509 = vmatpush2.msra.mxu0 0.0
        %3510 = vmatprep.subr.mxu0 0.0
        %3511 = vmatpush2.msra.mxu0 0.0
        %3512 = vmatprep.subr.mxu0 0.0
        %3513 = vmatpush2.msra.mxu0 0.0
        %3514 = vmatprep.subr.mxu0 0.0
        %3515 = vmatpush2.msra.mxu0 0.0
        %3516 = vmatprep.subr.mxu0 0.0
        %3517 = vmatpush2.msra.mxu0 0.0
        %3518 = vmatprep.subr.mxu0 0.0
        %3519 = vmatpush2.msra.mxu0 0.0
        %3520 = vmatprep.mubr.f32.mxu0 0.0
        %v3521 = vand.u32 %v2956, 4294901760
        %3522 = vmatmul.mubr.f32.gmra.mxu0 %v3521
        %v3523 = vpop.f32.mrf.mxu0
        %v3524 = vadd.f32 %v3405, %v3523
        %v3525 = vpop.f32.mrf.mxu0
        %3526 = vdwg.mxu0
        %3527 = vmatprep.subr.mxu0 0.0
        %v3528 = vand.u32 %v2972, 4294901760
        %3529 = vmatpush1.msra.mxu0 %v3528
        %3530 = vmatprep.subr.mxu0 0.0
        %v3531 = vand.u32 %v2971, 4294901760
        %3532 = vmatpush1.msra.mxu0 %v3531
        %3533 = vmatprep.subr.mxu0 0.0
        %v3534 = vand.u32 %v2970, 4294901760
        %3535 = vmatpush1.msra.mxu0 %v3534
        %3536 = vmatprep.subr.mxu0 0.0
        %v3537 = vand.u32 %v2969, 4294901760
        %3538 = vmatpush1.msra.mxu0 %v3537
        %3539 = vmatprep.subr.mxu0 0.0
        %v3540 = vand.u32 %v2968, 4294901760
        %3541 = vmatpush1.msra.mxu0 %v3540
        %3542 = vmatprep.subr.mxu0 0.0
        %v3543 = vand.u32 %v2967, 4294901760
        %3544 = vmatpush1.msra.mxu0 %v3543
        %3545 = vmatprep.subr.mxu0 0.0
        %v3546 = vand.u32 %v2966, 4294901760
        %3547 = vmatpush1.msra.mxu0 %v3546
        %3548 = vmatprep.subr.mxu0 0.0
        %v3549 = vand.u32 %v2965, 4294901760
        %3550 = vmatpush1.msra.mxu0 %v3549
        %3551 = vmatprep.subr.mxu0 0.0
        %v3552 = vand.u32 %v2964, 4294901760
        %3553 = vmatpush1.msra.mxu0 %v3552
        %3554 = vmatprep.subr.mxu0 0.0
        %v3555 = vand.u32 %v2963, 4294901760
        %3556 = vmatpush1.msra.mxu0 %v3555
        %3557 = vmatprep.subr.mxu0 0.0
        %v3558 = vand.u32 %v2962, 4294901760
        %3559 = vmatpush1.msra.mxu0 %v3558
        %3560 = vmatprep.subr.mxu0 0.0
        %v3561 = vand.u32 %v2961, 4294901760
        %3562 = vmatpush1.msra.mxu0 %v3561
        %3563 = vmatprep.subr.mxu0 0.0
        %v3564 = vand.u32 %v2960, 4294901760
        %3565 = vmatpush1.msra.mxu0 %v3564
        %3566 = vmatprep.subr.mxu0 0.0
        %v3567 = vand.u32 %v2959, 4294901760
        %3568 = vmatpush1.msra.mxu0 %v3567
        %3569 = vmatprep.subr.mxu0 0.0
        %v3570 = vand.u32 %v2958, 4294901760
        %3571 = vmatpush1.msra.mxu0 %v3570
        %3572 = vmatprep.subr.mxu0 0.0
        %v3573 = vand.u32 %v2957, 4294901760
        %3574 = vmatpush1.msra.mxu0 %v3573
        %3575 = vmatprep.subr.mxu0 0.0
        %3576 = vmatpush2.msra.mxu0 0.0
        %3577 = vmatprep.subr.mxu0 0.0
        %3578 = vmatpush2.msra.mxu0 0.0
        %3579 = vmatprep.subr.mxu0 0.0
        %3580 = vmatpush2.msra.mxu0 0.0
        %3581 = vmatprep.subr.mxu0 0.0
        %3582 = vmatpush2.msra.mxu0 0.0
        %3583 = vmatprep.subr.mxu0 0.0
        %3584 = vmatpush2.msra.mxu0 0.0
        %3585 = vmatprep.subr.mxu0 0.0
        %3586 = vmatpush2.msra.mxu0 0.0
        %3587 = vmatprep.subr.mxu0 0.0
        %3588 = vmatpush2.msra.mxu0 0.0
        %3589 = vmatprep.subr.mxu0 0.0
        %3590 = vmatpush2.msra.mxu0 0.0
        %3591 = vmatprep.subr.mxu0 0.0
        %3592 = vmatpush2.msra.mxu0 0.0
        %3593 = vmatprep.subr.mxu0 0.0
        %3594 = vmatpush2.msra.mxu0 0.0
        %3595 = vmatprep.subr.mxu0 0.0
        %3596 = vmatpush2.msra.mxu0 0.0
        %3597 = vmatprep.subr.mxu0 0.0
        %3598 = vmatpush2.msra.mxu0 0.0
        %3599 = vmatprep.subr.mxu0 0.0
        %3600 = vmatpush2.msra.mxu0 0.0
        %3601 = vmatprep.subr.mxu0 0.0
        %3602 = vmatpush2.msra.mxu0 0.0
        %3603 = vmatprep.subr.mxu0 0.0
        %3604 = vmatpush2.msra.mxu0 0.0
        %3605 = vmatprep.subr.mxu0 0.0
        %3606 = vmatpush2.msra.mxu0 0.0
        %3607 = vmatprep.mubr.f32.mxu0 0.0
        %v3608 = vand.u32 %v2956, 4294901760
        %3609 = vmatmul.mubr.f32.gmra.mxu0 %v3608
        %v3610 = vpop.f32.mrf.mxu0
        %v3611 = vadd.f32 %v3524, %v3610
        %v3612 = vpop.f32.mrf.mxu0
        %3613 = vdwg.mxu0
        %3614 = vmatprep.subr.mxu0 0.0
        %v3615 = vand.u32 %v2950, 4294901760
        %3616 = vmatpush1.msra.mxu0 %v3615
        %3617 = vmatprep.subr.mxu0 0.0
        %v3618 = vand.u32 %v2949, 4294901760
        %3619 = vmatpush1.msra.mxu0 %v3618
        %3620 = vmatprep.subr.mxu0 0.0
        %v3621 = vand.u32 %v2948, 4294901760
        %3622 = vmatpush1.msra.mxu0 %v3621
        %3623 = vmatprep.subr.mxu0 0.0
        %v3624 = vand.u32 %v2947, 4294901760
        %3625 = vmatpush1.msra.mxu0 %v3624
        %3626 = vmatprep.subr.mxu0 0.0
        %v3627 = vand.u32 %v2946, 4294901760
        %3628 = vmatpush1.msra.mxu0 %v3627
        %3629 = vmatprep.subr.mxu0 0.0
        %v3630 = vand.u32 %v2945, 4294901760
        %3631 = vmatpush1.msra.mxu0 %v3630
        %3632 = vmatprep.subr.mxu0 0.0
        %v3633 = vand.u32 %v2944, 4294901760
        %3634 = vmatpush1.msra.mxu0 %v3633
        %3635 = vmatprep.subr.mxu0 0.0
        %v3636 = vand.u32 %v2943, 4294901760
        %3637 = vmatpush1.msra.mxu0 %v3636
        %3638 = vmatprep.subr.mxu0 0.0
        %v3639 = vand.u32 %v2942, 4294901760
        %3640 = vmatpush1.msra.mxu0 %v3639
        %3641 = vmatprep.subr.mxu0 0.0
        %v3642 = vand.u32 %v2941, 4294901760
        %3643 = vmatpush1.msra.mxu0 %v3642
        %3644 = vmatprep.subr.mxu0 0.0
        %v3645 = vand.u32 %v2940, 4294901760
        %3646 = vmatpush1.msra.mxu0 %v3645
        %3647 = vmatprep.subr.mxu0 0.0
        %v3648 = vand.u32 %v2939, 4294901760
        %3649 = vmatpush1.msra.mxu0 %v3648
        %3650 = vmatprep.subr.mxu0 0.0
        %v3651 = vand.u32 %v2938, 4294901760
        %3652 = vmatpush1.msra.mxu0 %v3651
        %3653 = vmatprep.subr.mxu0 0.0
        %v3654 = vand.u32 %v2937, 4294901760
        %3655 = vmatpush1.msra.mxu0 %v3654
        %3656 = vmatprep.subr.mxu0 0.0
        %v3657 = vand.u32 %v2936, 4294901760
        %3658 = vmatpush1.msra.mxu0 %v3657
        %3659 = vmatprep.subr.mxu0 0.0
        %v3660 = vand.u32 %v2935, 4294901760
        %3661 = vmatpush1.msra.mxu0 %v3660
        %3662 = vmatprep.subr.mxu0 0.0
        %3663 = vmatpush2.msra.mxu0 0.0
        %3664 = vmatprep.subr.mxu0 0.0
        %3665 = vmatpush2.msra.mxu0 0.0
        %3666 = vmatprep.subr.mxu0 0.0
        %3667 = vmatpush2.msra.mxu0 0.0
        %3668 = vmatprep.subr.mxu0 0.0
        %3669 = vmatpush2.msra.mxu0 0.0
        %3670 = vmatprep.subr.mxu0 0.0
        %3671 = vmatpush2.msra.mxu0 0.0
        %3672 = vmatprep.subr.mxu0 0.0
        %3673 = vmatpush2.msra.mxu0 0.0
        %3674 = vmatprep.subr.mxu0 0.0
        %3675 = vmatpush2.msra.mxu0 0.0
        %3676 = vmatprep.subr.mxu0 0.0
        %3677 = vmatpush2.msra.mxu0 0.0
        %3678 = vmatprep.subr.mxu0 0.0
        %3679 = vmatpush2.msra.mxu0 0.0
        %3680 = vmatprep.subr.mxu0 0.0
        %3681 = vmatpush2.msra.mxu0 0.0
        %3682 = vmatprep.subr.mxu0 0.0
        %3683 = vmatpush2.msra.mxu0 0.0
        %3684 = vmatprep.subr.mxu0 0.0
        %3685 = vmatpush2.msra.mxu0 0.0
        %3686 = vmatprep.subr.mxu0 0.0
        %3687 = vmatpush2.msra.mxu0 0.0
        %3688 = vmatprep.subr.mxu0 0.0
        %3689 = vmatpush2.msra.mxu0 0.0
        %3690 = vmatprep.subr.mxu0 0.0
        %3691 = vmatpush2.msra.mxu0 0.0
        %3692 = vmatprep.subr.mxu0 0.0
        %3693 = vmatpush2.msra.mxu0 0.0
        %3694 = vmatprep.mubr.f32.mxu0 0.0
        %v3695 = vand.u32 %v2934, 4294901760
        %v3696 = vsub.f32 %v2934, %v3695
        %v3697 = vand.u32 %v3696, 4294901760
        %v3698 = vsub.f32 %v3696, %v3697
        %v3699 = vand.u32 %v3698, 4294901760
        %3700 = vmatmul.mubr.f32.gmra.mxu0 %v3699
        %v3701 = vpop.f32.mrf.mxu0
        %v3702 = vadd.f32 %v3611, %v3701
        %v3703 = vpop.f32.mrf.mxu0
        %3704 = vdwg.mxu0
        %3705 = vmatprep.subr.mxu0 0.0
        %v3706 = vand.u32 %v2950, 4294901760
        %v3707 = vsub.f32 %v2950, %v3706
        %v3708 = vand.u32 %v3707, 4294901760
        %v3709 = vsub.f32 %v3707, %v3708
        %v3710 = vand.u32 %v3709, 4294901760
        %3711 = vmatpush1.msra.mxu0 %v3710
        %3712 = vmatprep.subr.mxu0 0.0
        %v3713 = vand.u32 %v2949, 4294901760
        %v3714 = vsub.f32 %v2949, %v3713
        %v3715 = vand.u32 %v3714, 4294901760
        %v3716 = vsub.f32 %v3714, %v3715
        %v3717 = vand.u32 %v3716, 4294901760
        %3718 = vmatpush1.msra.mxu0 %v3717
        %3719 = vmatprep.subr.mxu0 0.0
        %v3720 = vand.u32 %v2948, 4294901760
        %v3721 = vsub.f32 %v2948, %v3720
        %v3722 = vand.u32 %v3721, 4294901760
        %v3723 = vsub.f32 %v3721, %v3722
        %v3724 = vand.u32 %v3723, 4294901760
        %3725 = vmatpush1.msra.mxu0 %v3724
        %3726 = vmatprep.subr.mxu0 0.0
        %v3727 = vand.u32 %v2947, 4294901760
        %v3728 = vsub.f32 %v2947, %v3727
        %v3729 = vand.u32 %v3728, 4294901760
        %v3730 = vsub.f32 %v3728, %v3729
        %v3731 = vand.u32 %v3730, 4294901760
        %3732 = vmatpush1.msra.mxu0 %v3731
        %3733 = vmatprep.subr.mxu0 0.0
        %v3734 = vand.u32 %v2946, 4294901760
        %v3735 = vsub.f32 %v2946, %v3734
        %v3736 = vand.u32 %v3735, 4294901760
        %v3737 = vsub.f32 %v3735, %v3736
        %v3738 = vand.u32 %v3737, 4294901760
        %3739 = vmatpush1.msra.mxu0 %v3738
        %3740 = vmatprep.subr.mxu0 0.0
        %v3741 = vand.u32 %v2945, 4294901760
        %v3742 = vsub.f32 %v2945, %v3741
        %v3743 = vand.u32 %v3742, 4294901760
        %v3744 = vsub.f32 %v3742, %v3743
        %v3745 = vand.u32 %v3744, 4294901760
        %3746 = vmatpush1.msra.mxu0 %v3745
        %3747 = vmatprep.subr.mxu0 0.0
        %v3748 = vand.u32 %v2944, 4294901760
        %v3749 = vsub.f32 %v2944, %v3748
        %v3750 = vand.u32 %v3749, 4294901760
        %v3751 = vsub.f32 %v3749, %v3750
        %v3752 = vand.u32 %v3751, 4294901760
        %3753 = vmatpush1.msra.mxu0 %v3752
        %3754 = vmatprep.subr.mxu0 0.0
        %v3755 = vand.u32 %v2943, 4294901760
        %v3756 = vsub.f32 %v2943, %v3755
        %v3757 = vand.u32 %v3756, 4294901760
        %v3758 = vsub.f32 %v3756, %v3757
        %v3759 = vand.u32 %v3758, 4294901760
        %3760 = vmatpush1.msra.mxu0 %v3759
        %3761 = vmatprep.subr.mxu0 0.0
        %v3762 = vand.u32 %v2942, 4294901760
        %v3763 = vsub.f32 %v2942, %v3762
        %v3764 = vand.u32 %v3763, 4294901760
        %v3765 = vsub.f32 %v3763, %v3764
        %v3766 = vand.u32 %v3765, 4294901760
        %3767 = vmatpush1.msra.mxu0 %v3766
        %3768 = vmatprep.subr.mxu0 0.0
        %v3769 = vand.u32 %v2941, 4294901760
        %v3770 = vsub.f32 %v2941, %v3769
        %v3771 = vand.u32 %v3770, 4294901760
        %v3772 = vsub.f32 %v3770, %v3771
        %v3773 = vand.u32 %v3772, 4294901760
        %3774 = vmatpush1.msra.mxu0 %v3773
        %3775 = vmatprep.subr.mxu0 0.0
        %v3776 = vand.u32 %v2940, 4294901760
        %v3777 = vsub.f32 %v2940, %v3776
        %v3778 = vand.u32 %v3777, 4294901760
        %v3779 = vsub.f32 %v3777, %v3778
        %v3780 = vand.u32 %v3779, 4294901760
        %3781 = vmatpush1.msra.mxu0 %v3780
        %3782 = vmatprep.subr.mxu0 0.0
        %v3783 = vand.u32 %v2939, 4294901760
        %v3784 = vsub.f32 %v2939, %v3783
        %v3785 = vand.u32 %v3784, 4294901760
        %v3786 = vsub.f32 %v3784, %v3785
        %v3787 = vand.u32 %v3786, 4294901760
        %3788 = vmatpush1.msra.mxu0 %v3787
        %3789 = vmatprep.subr.mxu0 0.0
        %v3790 = vand.u32 %v2938, 4294901760
        %v3791 = vsub.f32 %v2938, %v3790
        %v3792 = vand.u32 %v3791, 4294901760
        %v3793 = vsub.f32 %v3791, %v3792
        %v3794 = vand.u32 %v3793, 4294901760
        %3795 = vmatpush1.msra.mxu0 %v3794
        %3796 = vmatprep.subr.mxu0 0.0
        %v3797 = vand.u32 %v2937, 4294901760
        %v3798 = vsub.f32 %v2937, %v3797
        %v3799 = vand.u32 %v3798, 4294901760
        %v3800 = vsub.f32 %v3798, %v3799
        %v3801 = vand.u32 %v3800, 4294901760
        %3802 = vmatpush1.msra.mxu0 %v3801
        %3803 = vmatprep.subr.mxu0 0.0
        %v3804 = vand.u32 %v2936, 4294901760
        %v3805 = vsub.f32 %v2936, %v3804
        %v3806 = vand.u32 %v3805, 4294901760
        %v3807 = vsub.f32 %v3805, %v3806
        %v3808 = vand.u32 %v3807, 4294901760
        %3809 = vmatpush1.msra.mxu0 %v3808
        %3810 = vmatprep.subr.mxu0 0.0
        %v3811 = vand.u32 %v2935, 4294901760
        %v3812 = vsub.f32 %v2935, %v3811
        %v3813 = vand.u32 %v3812, 4294901760
        %v3814 = vsub.f32 %v3812, %v3813
        %v3815 = vand.u32 %v3814, 4294901760
        %3816 = vmatpush1.msra.mxu0 %v3815
        %3817 = vmatprep.subr.mxu0 0.0
        %3818 = vmatpush2.msra.mxu0 0.0
        %3819 = vmatprep.subr.mxu0 0.0
        %3820 = vmatpush2.msra.mxu0 0.0
        %3821 = vmatprep.subr.mxu0 0.0
        %3822 = vmatpush2.msra.mxu0 0.0
        %3823 = vmatprep.subr.mxu0 0.0
        %3824 = vmatpush2.msra.mxu0 0.0
        %3825 = vmatprep.subr.mxu0 0.0
        %3826 = vmatpush2.msra.mxu0 0.0
        %3827 = vmatprep.subr.mxu0 0.0
        %3828 = vmatpush2.msra.mxu0 0.0
        %3829 = vmatprep.subr.mxu0 0.0
        %3830 = vmatpush2.msra.mxu0 0.0
        %3831 = vmatprep.subr.mxu0 0.0
        %3832 = vmatpush2.msra.mxu0 0.0
        %3833 = vmatprep.subr.mxu0 0.0
        %3834 = vmatpush2.msra.mxu0 0.0
        %3835 = vmatprep.subr.mxu0 0.0
        %3836 = vmatpush2.msra.mxu0 0.0
        %3837 = vmatprep.subr.mxu0 0.0
        %3838 = vmatpush2.msra.mxu0 0.0
        %3839 = vmatprep.subr.mxu0 0.0
        %3840 = vmatpush2.msra.mxu0 0.0
        %3841 = vmatprep.subr.mxu0 0.0
        %3842 = vmatpush2.msra.mxu0 0.0
        %3843 = vmatprep.subr.mxu0 0.0
        %3844 = vmatpush2.msra.mxu0 0.0
        %3845 = vmatprep.subr.mxu0 0.0
        %3846 = vmatpush2.msra.mxu0 0.0
        %3847 = vmatprep.subr.mxu0 0.0
        %3848 = vmatpush2.msra.mxu0 0.0
        %3849 = vmatprep.mubr.f32.mxu0 0.0
        %v3850 = vand.u32 %v2934, 4294901760
        %3851 = vmatmul.mubr.f32.gmra.mxu0 %v3850
        %v3852 = vpop.f32.mrf.mxu0
        %v3853 = vadd.f32 %v3702, %v3852
        %v3854 = vpop.f32.mrf.mxu0
        %3855 = vdwg.mxu0
        %3856 = vmatprep.subr.mxu0 0.0
        %v3857 = vand.u32 %v2950, 4294901760
        %v3858 = vsub.f32 %v2950, %v3857
        %3859 = vmatpush1.msra.mxu0 %v3858
        %3860 = vmatprep.subr.mxu0 0.0
        %v3861 = vand.u32 %v2949, 4294901760
        %v3862 = vsub.f32 %v2949, %v3861
        %3863 = vmatpush1.msra.mxu0 %v3862
        %3864 = vmatprep.subr.mxu0 0.0
        %v3865 = vand.u32 %v2948, 4294901760
        %v3866 = vsub.f32 %v2948, %v3865
        %3867 = vmatpush1.msra.mxu0 %v3866
        %3868 = vmatprep.subr.mxu0 0.0
        %v3869 = vand.u32 %v2947, 4294901760
        %v3870 = vsub.f32 %v2947, %v3869
        %3871 = vmatpush1.msra.mxu0 %v3870
        %3872 = vmatprep.subr.mxu0 0.0
        %v3873 = vand.u32 %v2946, 4294901760
        %v3874 = vsub.f32 %v2946, %v3873
        %3875 = vmatpush1.msra.mxu0 %v3874
        %3876 = vmatprep.subr.mxu0 0.0
        %v3877 = vand.u32 %v2945, 4294901760
        %v3878 = vsub.f32 %v2945, %v3877
        %3879 = vmatpush1.msra.mxu0 %v3878
        %3880 = vmatprep.subr.mxu0 0.0
        %v3881 = vand.u32 %v2944, 4294901760
        %v3882 = vsub.f32 %v2944, %v3881
        %3883 = vmatpush1.msra.mxu0 %v3882
        %3884 = vmatprep.subr.mxu0 0.0
        %v3885 = vand.u32 %v2943, 4294901760
        %v3886 = vsub.f32 %v2943, %v3885
        %3887 = vmatpush1.msra.mxu0 %v3886
        %3888 = vmatprep.subr.mxu0 0.0
        %v3889 = vand.u32 %v2942, 4294901760
        %v3890 = vsub.f32 %v2942, %v3889
        %3891 = vmatpush1.msra.mxu0 %v3890
        %3892 = vmatprep.subr.mxu0 0.0
        %v3893 = vand.u32 %v2941, 4294901760
        %v3894 = vsub.f32 %v2941, %v3893
        %3895 = vmatpush1.msra.mxu0 %v3894
        %3896 = vmatprep.subr.mxu0 0.0
        %v3897 = vand.u32 %v2940, 4294901760
        %v3898 = vsub.f32 %v2940, %v3897
        %3899 = vmatpush1.msra.mxu0 %v3898
        %3900 = vmatprep.subr.mxu0 0.0
        %v3901 = vand.u32 %v2939, 4294901760
        %v3902 = vsub.f32 %v2939, %v3901
        %3903 = vmatpush1.msra.mxu0 %v3902
        %3904 = vmatprep.subr.mxu0 0.0
        %v3905 = vand.u32 %v2938, 4294901760
        %v3906 = vsub.f32 %v2938, %v3905
        %3907 = vmatpush1.msra.mxu0 %v3906
        %3908 = vmatprep.subr.mxu0 0.0
        %v3909 = vand.u32 %v2937, 4294901760
        %v3910 = vsub.f32 %v2937, %v3909
        %3911 = vmatpush1.msra.mxu0 %v3910
        %3912 = vmatprep.subr.mxu0 0.0
        %v3913 = vand.u32 %v2936, 4294901760
        %v3914 = vsub.f32 %v2936, %v3913
        %3915 = vmatpush1.msra.mxu0 %v3914
        %3916 = vmatprep.subr.mxu0 0.0
        %v3917 = vand.u32 %v2935, 4294901760
        %v3918 = vsub.f32 %v2935, %v3917
        %3919 = vmatpush1.msra.mxu0 %v3918
        %3920 = vmatprep.subr.mxu0 0.0
        %3921 = vmatpush2.msra.mxu0 0.0
        %3922 = vmatprep.subr.mxu0 0.0
        %3923 = vmatpush2.msra.mxu0 0.0
        %3924 = vmatprep.subr.mxu0 0.0
        %3925 = vmatpush2.msra.mxu0 0.0
        %3926 = vmatprep.subr.mxu0 0.0
        %3927 = vmatpush2.msra.mxu0 0.0
        %3928 = vmatprep.subr.mxu0 0.0
        %3929 = vmatpush2.msra.mxu0 0.0
        %3930 = vmatprep.subr.mxu0 0.0
        %3931 = vmatpush2.msra.mxu0 0.0
        %3932 = vmatprep.subr.mxu0 0.0
        %3933 = vmatpush2.msra.mxu0 0.0
        %3934 = vmatprep.subr.mxu0 0.0
        %3935 = vmatpush2.msra.mxu0 0.0
        %3936 = vmatprep.subr.mxu0 0.0
        %3937 = vmatpush2.msra.mxu0 0.0
        %3938 = vmatprep.subr.mxu0 0.0
        %3939 = vmatpush2.msra.mxu0 0.0
        %3940 = vmatprep.subr.mxu0 0.0
        %3941 = vmatpush2.msra.mxu0 0.0
        %3942 = vmatprep.subr.mxu0 0.0
        %3943 = vmatpush2.msra.mxu0 0.0
        %3944 = vmatprep.subr.mxu0 0.0
        %3945 = vmatpush2.msra.mxu0 0.0
        %3946 = vmatprep.subr.mxu0 0.0
        %3947 = vmatpush2.msra.mxu0 0.0
        %3948 = vmatprep.subr.mxu0 0.0
        %3949 = vmatpush2.msra.mxu0 0.0
        %3950 = vmatprep.subr.mxu0 0.0
        %3951 = vmatpush2.msra.mxu0 0.0
        %3952 = vmatprep.mubr.f32.mxu0 0.0
        %v3953 = vand.u32 %v2934, 4294901760
        %v3954 = vsub.f32 %v2934, %v3953
        %3955 = vmatmul.mubr.f32.gmra.mxu0 %v3954
        %v3956 = vpop.f32.mrf.mxu0
        %v3957 = vadd.f32 %v3853, %v3956
        %v3958 = vpop.f32.mrf.mxu0
        %3959 = vdwg.mxu0
        %3960 = vmatprep.subr.mxu0 0.0
        %v3961 = vand.u32 %v2950, 4294901760
        %3962 = vmatpush1.msra.mxu0 %v3961
        %3963 = vmatprep.subr.mxu0 0.0
        %v3964 = vand.u32 %v2949, 4294901760
        %3965 = vmatpush1.msra.mxu0 %v3964
        %3966 = vmatprep.subr.mxu0 0.0
        %v3967 = vand.u32 %v2948, 4294901760
        %3968 = vmatpush1.msra.mxu0 %v3967
        %3969 = vmatprep.subr.mxu0 0.0
        %v3970 = vand.u32 %v2947, 4294901760
        %3971 = vmatpush1.msra.mxu0 %v3970
        %3972 = vmatprep.subr.mxu0 0.0
        %v3973 = vand.u32 %v2946, 4294901760
        %3974 = vmatpush1.msra.mxu0 %v3973
        %3975 = vmatprep.subr.mxu0 0.0
        %v3976 = vand.u32 %v2945, 4294901760
        %3977 = vmatpush1.msra.mxu0 %v3976
        %3978 = vmatprep.subr.mxu0 0.0
        %v3979 = vand.u32 %v2944, 4294901760
        %3980 = vmatpush1.msra.mxu0 %v3979
        %3981 = vmatprep.subr.mxu0 0.0
        %v3982 = vand.u32 %v2943, 4294901760
        %3983 = vmatpush1.msra.mxu0 %v3982
        %3984 = vmatprep.subr.mxu0 0.0
        %v3985 = vand.u32 %v2942, 4294901760
        %3986 = vmatpush1.msra.mxu0 %v3985
        %3987 = vmatprep.subr.mxu0 0.0
        %v3988 = vand.u32 %v2941, 4294901760
        %3989 = vmatpush1.msra.mxu0 %v3988
        %3990 = vmatprep.subr.mxu0 0.0
        %v3991 = vand.u32 %v2940, 4294901760
        %3992 = vmatpush1.msra.mxu0 %v3991
        %3993 = vmatprep.subr.mxu0 0.0
        %v3994 = vand.u32 %v2939, 4294901760
        %3995 = vmatpush1.msra.mxu0 %v3994
        %3996 = vmatprep.subr.mxu0 0.0
        %v3997 = vand.u32 %v2938, 4294901760
        %3998 = vmatpush1.msra.mxu0 %v3997
        %3999 = vmatprep.subr.mxu0 0.0
        %v4000 = vand.u32 %v2937, 4294901760
        %4001 = vmatpush1.msra.mxu0 %v4000
        %4002 = vmatprep.subr.mxu0 0.0
        %v4003 = vand.u32 %v2936, 4294901760
        %4004 = vmatpush1.msra.mxu0 %v4003
        %4005 = vmatprep.subr.mxu0 0.0
        %v4006 = vand.u32 %v2935, 4294901760
        %4007 = vmatpush1.msra.mxu0 %v4006
        %4008 = vmatprep.subr.mxu0 0.0
        %4009 = vmatpush2.msra.mxu0 0.0
        %4010 = vmatprep.subr.mxu0 0.0
        %4011 = vmatpush2.msra.mxu0 0.0
        %4012 = vmatprep.subr.mxu0 0.0
        %4013 = vmatpush2.msra.mxu0 0.0
        %4014 = vmatprep.subr.mxu0 0.0
        %4015 = vmatpush2.msra.mxu0 0.0
        %4016 = vmatprep.subr.mxu0 0.0
        %4017 = vmatpush2.msra.mxu0 0.0
        %4018 = vmatprep.subr.mxu0 0.0
        %4019 = vmatpush2.msra.mxu0 0.0
        %4020 = vmatprep.subr.mxu0 0.0
        %4021 = vmatpush2.msra.mxu0 0.0
        %4022 = vmatprep.subr.mxu0 0.0
        %4023 = vmatpush2.msra.mxu0 0.0
        %4024 = vmatprep.subr.mxu0 0.0
        %4025 = vmatpush2.msra.mxu0 0.0
        %4026 = vmatprep.subr.mxu0 0.0
        %4027 = vmatpush2.msra.mxu0 0.0
        %4028 = vmatprep.subr.mxu0 0.0
        %4029 = vmatpush2.msra.mxu0 0.0
        %4030 = vmatprep.subr.mxu0 0.0
        %4031 = vmatpush2.msra.mxu0 0.0
        %4032 = vmatprep.subr.mxu0 0.0
        %4033 = vmatpush2.msra.mxu0 0.0
        %4034 = vmatprep.subr.mxu0 0.0
        %4035 = vmatpush2.msra.mxu0 0.0
        %4036 = vmatprep.subr.mxu0 0.0
        %4037 = vmatpush2.msra.mxu0 0.0
        %4038 = vmatprep.subr.mxu0 0.0
        %4039 = vmatpush2.msra.mxu0 0.0
        %4040 = vmatprep.mubr.f32.mxu0 0.0
        %v4041 = vand.u32 %v2934, 4294901760
        %v4042 = vsub.f32 %v2934, %v4041
        %v4043 = vand.u32 %v4042, 4294901760
        %4044 = vmatmul.mubr.f32.gmra.mxu0 %v4043
        %v4045 = vpop.f32.mrf.mxu0
        %v4046 = vadd.f32 %v3957, %v4045
        %v4047 = vpop.f32.mrf.mxu0
        %4048 = vdwg.mxu0
        %4049 = vmatprep.subr.mxu0 0.0
        %v4050 = vand.u32 %v2950, 4294901760
        %v4051 = vsub.f32 %v2950, %v4050
        %v4052 = vand.u32 %v4051, 4294901760
        %4053 = vmatpush1.msra.mxu0 %v4052
        %4054 = vmatprep.subr.mxu0 0.0
        %v4055 = vand.u32 %v2949, 4294901760
        %v4056 = vsub.f32 %v2949, %v4055
        %v4057 = vand.u32 %v4056, 4294901760
        %4058 = vmatpush1.msra.mxu0 %v4057
        %4059 = vmatprep.subr.mxu0 0.0
        %v4060 = vand.u32 %v2948, 4294901760
        %v4061 = vsub.f32 %v2948, %v4060
        %v4062 = vand.u32 %v4061, 4294901760
        %4063 = vmatpush1.msra.mxu0 %v4062
        %4064 = vmatprep.subr.mxu0 0.0
        %v4065 = vand.u32 %v2947, 4294901760
        %v4066 = vsub.f32 %v2947, %v4065
        %v4067 = vand.u32 %v4066, 4294901760
        %4068 = vmatpush1.msra.mxu0 %v4067
        %4069 = vmatprep.subr.mxu0 0.0
        %v4070 = vand.u32 %v2946, 4294901760
        %v4071 = vsub.f32 %v2946, %v4070
        %v4072 = vand.u32 %v4071, 4294901760
        %4073 = vmatpush1.msra.mxu0 %v4072
        %4074 = vmatprep.subr.mxu0 0.0
        %v4075 = vand.u32 %v2945, 4294901760
        %v4076 = vsub.f32 %v2945, %v4075
        %v4077 = vand.u32 %v4076, 4294901760
        %4078 = vmatpush1.msra.mxu0 %v4077
        %4079 = vmatprep.subr.mxu0 0.0
        %v4080 = vand.u32 %v2944, 4294901760
        %v4081 = vsub.f32 %v2944, %v4080
        %v4082 = vand.u32 %v4081, 4294901760
        %4083 = vmatpush1.msra.mxu0 %v4082
        %4084 = vmatprep.subr.mxu0 0.0
        %v4085 = vand.u32 %v2943, 4294901760
        %v4086 = vsub.f32 %v2943, %v4085
        %v4087 = vand.u32 %v4086, 4294901760
        %4088 = vmatpush1.msra.mxu0 %v4087
        %4089 = vmatprep.subr.mxu0 0.0
        %v4090 = vand.u32 %v2942, 4294901760
        %v4091 = vsub.f32 %v2942, %v4090
        %v4092 = vand.u32 %v4091, 4294901760
        %4093 = vmatpush1.msra.mxu0 %v4092
        %4094 = vmatprep.subr.mxu0 0.0
        %v4095 = vand.u32 %v2941, 4294901760
        %v4096 = vsub.f32 %v2941, %v4095
        %v4097 = vand.u32 %v4096, 4294901760
        %4098 = vmatpush1.msra.mxu0 %v4097
        %4099 = vmatprep.subr.mxu0 0.0
        %v4100 = vand.u32 %v2940, 4294901760
        %v4101 = vsub.f32 %v2940, %v4100
        %v4102 = vand.u32 %v4101, 4294901760
        %4103 = vmatpush1.msra.mxu0 %v4102
        %4104 = vmatprep.subr.mxu0 0.0
        %v4105 = vand.u32 %v2939, 4294901760
        %v4106 = vsub.f32 %v2939, %v4105
        %v4107 = vand.u32 %v4106, 4294901760
        %4108 = vmatpush1.msra.mxu0 %v4107
        %4109 = vmatprep.subr.mxu0 0.0
        %v4110 = vand.u32 %v2938, 4294901760
        %v4111 = vsub.f32 %v2938, %v4110
        %v4112 = vand.u32 %v4111, 4294901760
        %4113 = vmatpush1.msra.mxu0 %v4112
        %4114 = vmatprep.subr.mxu0 0.0
        %v4115 = vand.u32 %v2937, 4294901760
        %v4116 = vsub.f32 %v2937, %v4115
        %v4117 = vand.u32 %v4116, 4294901760
        %4118 = vmatpush1.msra.mxu0 %v4117
        %4119 = vmatprep.subr.mxu0 0.0
        %v4120 = vand.u32 %v2936, 4294901760
        %v4121 = vsub.f32 %v2936, %v4120
        %v4122 = vand.u32 %v4121, 4294901760
        %4123 = vmatpush1.msra.mxu0 %v4122
        %4124 = vmatprep.subr.mxu0 0.0
        %v4125 = vand.u32 %v2935, 4294901760
        %v4126 = vsub.f32 %v2935, %v4125
        %v4127 = vand.u32 %v4126, 4294901760
        %4128 = vmatpush1.msra.mxu0 %v4127
        %4129 = vmatprep.subr.mxu0 0.0
        %4130 = vmatpush2.msra.mxu0 0.0
        %4131 = vmatprep.subr.mxu0 0.0
        %4132 = vmatpush2.msra.mxu0 0.0
        %4133 = vmatprep.subr.mxu0 0.0
        %4134 = vmatpush2.msra.mxu0 0.0
        %4135 = vmatprep.subr.mxu0 0.0
        %4136 = vmatpush2.msra.mxu0 0.0
        %4137 = vmatprep.subr.mxu0 0.0
        %4138 = vmatpush2.msra.mxu0 0.0
        %4139 = vmatprep.subr.mxu0 0.0
        %4140 = vmatpush2.msra.mxu0 0.0
        %4141 = vmatprep.subr.mxu0 0.0
        %4142 = vmatpush2.msra.mxu0 0.0
        %4143 = vmatprep.subr.mxu0 0.0
        %4144 = vmatpush2.msra.mxu0 0.0
        %4145 = vmatprep.subr.mxu0 0.0
        %4146 = vmatpush2.msra.mxu0 0.0
        %4147 = vmatprep.subr.mxu0 0.0
        %4148 = vmatpush2.msra.mxu0 0.0
        %4149 = vmatprep.subr.mxu0 0.0
        %4150 = vmatpush2.msra.mxu0 0.0
        %4151 = vmatprep.subr.mxu0 0.0
        %4152 = vmatpush2.msra.mxu0 0.0
        %4153 = vmatprep.subr.mxu0 0.0
        %4154 = vmatpush2.msra.mxu0 0.0
        %4155 = vmatprep.subr.mxu0 0.0
        %4156 = vmatpush2.msra.mxu0 0.0
        %4157 = vmatprep.subr.mxu0 0.0
        %4158 = vmatpush2.msra.mxu0 0.0
        %4159 = vmatprep.subr.mxu0 0.0
        %4160 = vmatpush2.msra.mxu0 0.0
        %4161 = vmatprep.mubr.f32.mxu0 0.0
        %v4162 = vand.u32 %v2934, 4294901760
        %4163 = vmatmul.mubr.f32.gmra.mxu0 %v4162
        %v4164 = vpop.f32.mrf.mxu0
        %v4165 = vadd.f32 %v4046, %v4164
        %v4166 = vpop.f32.mrf.mxu0
        %4167 = vdwg.mxu0
        %4168 = vmatprep.subr.mxu0 0.0
        %v4169 = vand.u32 %v2950, 4294901760
        %4170 = vmatpush1.msra.mxu0 %v4169
        %4171 = vmatprep.subr.mxu0 0.0
        %v4172 = vand.u32 %v2949, 4294901760
        %4173 = vmatpush1.msra.mxu0 %v4172
        %4174 = vmatprep.subr.mxu0 0.0
        %v4175 = vand.u32 %v2948, 4294901760
        %4176 = vmatpush1.msra.mxu0 %v4175
        %4177 = vmatprep.subr.mxu0 0.0
        %v4178 = vand.u32 %v2947, 4294901760
        %4179 = vmatpush1.msra.mxu0 %v4178
        %4180 = vmatprep.subr.mxu0 0.0
        %v4181 = vand.u32 %v2946, 4294901760
        %4182 = vmatpush1.msra.mxu0 %v4181
        %4183 = vmatprep.subr.mxu0 0.0
        %v4184 = vand.u32 %v2945, 4294901760
        %4185 = vmatpush1.msra.mxu0 %v4184
        %4186 = vmatprep.subr.mxu0 0.0
        %v4187 = vand.u32 %v2944, 4294901760
        %4188 = vmatpush1.msra.mxu0 %v4187
        %4189 = vmatprep.subr.mxu0 0.0
        %v4190 = vand.u32 %v2943, 4294901760
        %4191 = vmatpush1.msra.mxu0 %v4190
        %4192 = vmatprep.subr.mxu0 0.0
        %v4193 = vand.u32 %v2942, 4294901760
        %4194 = vmatpush1.msra.mxu0 %v4193
        %4195 = vmatprep.subr.mxu0 0.0
        %v4196 = vand.u32 %v2941, 4294901760
        %4197 = vmatpush1.msra.mxu0 %v4196
        %4198 = vmatprep.subr.mxu0 0.0
        %v4199 = vand.u32 %v2940, 4294901760
        %4200 = vmatpush1.msra.mxu0 %v4199
        %4201 = vmatprep.subr.mxu0 0.0
        %v4202 = vand.u32 %v2939, 4294901760
        %4203 = vmatpush1.msra.mxu0 %v4202
        %4204 = vmatprep.subr.mxu0 0.0
        %v4205 = vand.u32 %v2938, 4294901760
        %4206 = vmatpush1.msra.mxu0 %v4205
        %4207 = vmatprep.subr.mxu0 0.0
        %v4208 = vand.u32 %v2937, 4294901760
        %4209 = vmatpush1.msra.mxu0 %v4208
        %4210 = vmatprep.subr.mxu0 0.0
        %v4211 = vand.u32 %v2936, 4294901760
        %4212 = vmatpush1.msra.mxu0 %v4211
        %4213 = vmatprep.subr.mxu0 0.0
        %v4214 = vand.u32 %v2935, 4294901760
        %4215 = vmatpush1.msra.mxu0 %v4214
        %4216 = vmatprep.subr.mxu0 0.0
        %4217 = vmatpush2.msra.mxu0 0.0
        %4218 = vmatprep.subr.mxu0 0.0
        %4219 = vmatpush2.msra.mxu0 0.0
        %4220 = vmatprep.subr.mxu0 0.0
        %4221 = vmatpush2.msra.mxu0 0.0
        %4222 = vmatprep.subr.mxu0 0.0
        %4223 = vmatpush2.msra.mxu0 0.0
        %4224 = vmatprep.subr.mxu0 0.0
        %4225 = vmatpush2.msra.mxu0 0.0
        %4226 = vmatprep.subr.mxu0 0.0
        %4227 = vmatpush2.msra.mxu0 0.0
        %4228 = vmatprep.subr.mxu0 0.0
        %4229 = vmatpush2.msra.mxu0 0.0
        %4230 = vmatprep.subr.mxu0 0.0
        %4231 = vmatpush2.msra.mxu0 0.0
        %4232 = vmatprep.subr.mxu0 0.0
        %4233 = vmatpush2.msra.mxu0 0.0
        %4234 = vmatprep.subr.mxu0 0.0
        %4235 = vmatpush2.msra.mxu0 0.0
        %4236 = vmatprep.subr.mxu0 0.0
        %4237 = vmatpush2.msra.mxu0 0.0
        %4238 = vmatprep.subr.mxu0 0.0
        %4239 = vmatpush2.msra.mxu0 0.0
        %4240 = vmatprep.subr.mxu0 0.0
        %4241 = vmatpush2.msra.mxu0 0.0
        %4242 = vmatprep.subr.mxu0 0.0
        %4243 = vmatpush2.msra.mxu0 0.0
        %4244 = vmatprep.subr.mxu0 0.0
        %4245 = vmatpush2.msra.mxu0 0.0
        %4246 = vmatprep.subr.mxu0 0.0
        %4247 = vmatpush2.msra.mxu0 0.0
        %4248 = vmatprep.mubr.f32.mxu0 0.0
        %v4249 = vand.u32 %v2934, 4294901760
        %4250 = vmatmul.mubr.f32.gmra.mxu0 %v4249
        %v4251 = vpop.f32.mrf.mxu0
        %v4252 = vadd.f32 %v4165, %v4251
        %v4253 = vpop.f32.mrf.mxu0
        %4254 = vdwg.mxu0
        %4256 = vrot.lane.b32.xlu0 %v2926, 16
        %v4257 = vpop.permute.xlu0 %4256
        %vm4259 = vcmask 130048
        %v4260 = vsel %vm4259, %v1600, %v4257
        %v4261 = vadd.f32 %v4260, %v4252
        %vm4262 = vcmask 261120
        %4263 = vst.msk [vmem:[%s269] sm:$0xff] %vm4262, %v4261
        %s4264 = sand.u32 %s181, 1
        %s4265 = scalar_lea.sflag [#allocation3], %s4264
        %s4266 = sand.u32 %s181, 1
        %s4267 = smul.addr %s4266, 8
        %s4268 = scalar_lea.vmem [#allocation2], %s4267
        // Predicated region
        $region49: #{tpu_custom_call.1} parent=47 // pred_check
          %p4269 = pneg %p191
        $region50: #{tpu_custom_call.1} parent=47 // pred_check_branch
          %4271 = sbr.rel (%p4269) target = $region52
        $region51: #{tpu_custom_call.1} parent=47 // pred_region
          %s4273 = ssub.s32 128, 128
          %4274 = vsyncadd %s4265, %s4273
          %s4275 = smul.addr %s21, 128
          %s4276 = scalar_lea.hbm %s7, %s4275
          %s4278 = sshll.u32 %s4268, 4
          %s4279 = int_to_ptr.vmem [resolvable:$true] %s4278
          %4281 = dma.vmem_to_hbm [thread:$0]  %s4279, 128, %s4276, %s4265
        $region52: #{tpu_custom_call.1} parent=47 // pred_fallthru
          _
      $region48: #{tpu_custom_call.1} parent=5 // pred_fallthru
        _
      %p4282 = scmp.le.s32.totalorder 2, %s16
      // Predicated region
      $region53: #{tpu_custom_call.1} parent=5 // pred_check
        %p4283 = pneg %p4282
      $region54: #{tpu_custom_call.1} parent=5 // pred_check_branch
        %4285 = sbr.rel (%p4283) target = $region56
      $region55: #{tpu_custom_call.1} parent=5 // pred_region
        %s4286 = ssub.s32 %s16, 2
        // Predicated region
        $region57: #{tpu_custom_call.1} parent=55 // pred_check
          %p4287 = pneg %p197
        $region58: #{tpu_custom_call.1} parent=55 // pred_check_branch
          %4289 = sbr.rel (%p4287) target = $region60
        $region59: #{tpu_custom_call.1} parent=55 // pred_region
          %s4290 = sand.u32 %s182, 1
          %s4291 = scalar_lea.sflag [#allocation3], %s4290
          %s4292 = sand.u32 %s182, 1
          %s4293 = smul.addr %s4292, 8
          %s4294 = scalar_lea.vmem [#allocation2], %s4293
          %4295 = dma.done %s4291, 128
        $region60: #{tpu_custom_call.1} parent=55 // pred_fallthru
          _
      $region56: #{tpu_custom_call.1} parent=5 // pred_fallthru
        _
    $region6: #{tpu_custom_call.1} parent=1 // loop_footer
      %s20 = sadd.s32 1, %s16
    $region7: #{tpu_custom_call.1} parent=1 // loop_footer_branch
      %15 = sbr.rel target = $region3
    $region8: #{tpu_custom_call.1} parent=1 // loop_exit
      _
    %4296 = vsyncpa [#allocation3], 1
    %s4297 = scalar_lea.sflag [#allocation3], 1
    %4298 = vsyncpa %s4297, 1

</llo_original>
